<compile_context>
chip_gen: v6e
topology: v6e:2x2x1
jax: 0.10.0
libtpu: 0.0.40
codegen_flags: <defaults>
</compile_context>

<pallas_src>
import jax
import jax.numpy as jnp
from jax.experimental import pallas as pl
from jax.experimental.pallas import tpu as pltpu

NUM_CLASSES = 10
FEAT = 512             # each backbone's feature width
EMBED = 1024
HIDDEN2 = 512
PAD_OUT = 128          # fc3 output padded to a full vreg lane width
BN_EPS = 1e-5
MAX_TB = 256           # batch tile (rows) - v7x-safe, amortizes grid overhead


def _round_up(n, m):
    return ((n + m - 1) // m) * m


# ----------------------------------------------------------------------------
# Pallas kernel: the whole head is 3 MXU matmuls + bias adds + 2 ReLUs.
#   h      = relu(x1 @ w1a + x2 @ w1b + b1)      (fc1 with bn1 folded, split-K)
#   h2     = relu(h @ wa + ba)                   (attention + fc2 + bn2 folded)
#   logits = h2 @ w3 + b3                        (fc3, padded to 128 lanes)
# ----------------------------------------------------------------------------
def combined_head_kernel(
    x1_ref, x2_ref,        # [TB, 512] bf16 each  (the two backbone outputs)
    w1a_ref, w1b_ref,      # fc1 split in half:   [512, 1024] bf16 each
    b1_ref,                # folded bn1 bias:     [1, 1024]   f32
    wa_ref, ba_ref,        # attn(out@v)+fc2+bn2: [1024, 512] bf16, [1, 512] f32
    w3_ref, b3_ref,        # fc3 padded:          [512, 128]  bf16, [1, 128] f32
    out_ref,               # [TB, 128] f32 (first NUM_CLASSES lanes = logits)
):
    # fc1 (+ folded bn1) with split-K over the two backbone halves, then ReLU.
    h = (jnp.dot(x1_ref[...], w1a_ref[...], preferred_element_type=jnp.float32)
         + jnp.dot(x2_ref[...], w1b_ref[...], preferred_element_type=jnp.float32)
         + b1_ref[...])
    h = jnp.maximum(h, 0.0).astype(jnp.bfloat16)

    # attention(seq_len==1) -> dropout1(identity) -> fc2 -> bn2, all folded
    # into a single [1024, 512] matmul, then ReLU (dropout2: identity).
    h2 = jnp.dot(h, wa_ref[...], preferred_element_type=jnp.float32) + ba_ref[...]
    h2 = jnp.maximum(h2, 0.0).astype(jnp.bfloat16)

    # fc3 (padded to 128 lanes for an unmasked, lane-dense store)
    logits = jnp.dot(h2, w3_ref[...], preferred_element_type=jnp.float32) + b3_ref[...]
    out_ref[...] = logits.astype(out_ref.dtype)


def combined_head(out1, out2, head):
    """out1/out2: [B, 512] backbone features; head: pre-fused kernel weights."""
    B = out1.shape[0]
    TB = min(MAX_TB, _round_up(B, 8))       # sublane-dense tile, v7x-safe cap
    B_pad = _round_up(B, TB)
    if B_pad != B:
        pad = ((0, B_pad - B), (0, 0))
        out1 = jnp.pad(out1, pad)
        out2 = jnp.pad(out2, pad)

    x1 = out1.astype(jnp.bfloat16)
    x2 = out2.astype(jnp.bfloat16)
    grid = (B_pad // TB,)

    # x/out tiles walk the batch; weights/biases use a constant index_map so
    # they are DMA'd once and stay VMEM-resident across grid steps.
    x_spec = pl.BlockSpec((TB, FEAT), lambda i: (i, 0))
    const = lambda shape: pl.BlockSpec(shape, lambda i: (0, 0))

    out_padded = pl.pallas_call(
        combined_head_kernel,
        out_shape=jax.ShapeDtypeStruct((B_pad, PAD_OUT), jnp.float32),
        grid_spec=pltpu.PrefetchScalarGridSpec(
            num_scalar_prefetch=0,
            grid=grid,
            in_specs=[
                x_spec, x_spec,
                const((FEAT, EMBED)), const((FEAT, EMBED)), const((1, EMBED)),
                const((EMBED, HIDDEN2)), const((1, HIDDEN2)),
                const((HIDDEN2, PAD_OUT)), const((1, PAD_OUT)),
            ],
            out_specs=pl.BlockSpec((TB, PAD_OUT), lambda i: (i, 0)),
        ),
        compiler_params=pltpu.CompilerParams(
            dimension_semantics=("parallel",),        # shards batch tiles on v7x
            vmem_limit_bytes=32 * 1024 * 1024,
        ),
    )(
        x1, x2,
        head["w1a"], head["w1b"], head["b1"],
        head["wa"], head["ba"],
        head["w3"], head["b3"],
    )
    return out_padded[:B, :NUM_CLASSES]


# ----------------------------------------------------------------------------
# Host-side (one-time) weight preparation: fold BN into Linear, collapse the
# seq_len==1 attention into fc2, split fc1, pad fc3, cast big matrices to bf16.
# All folds are done in f32; each weight is rounded to bf16 exactly once.
# ----------------------------------------------------------------------------
def _fold_bn_into_linear(w, b, gamma, beta, mean, var, eps=BN_EPS):
    # y = BN(x @ w + b)  ==  x @ (w * s) + ((b - mean) * s + beta),
    # with s = gamma / sqrt(var + eps) applied per output column.
    s = gamma * jax.lax.rsqrt(var + eps)          # [1, out]
    return w * s, (b - mean) * s + beta


def prepare_head_weights(params):
    # bn1 -> fc1, bn2 -> fc2
    w1, b1 = _fold_bn_into_linear(
        params["w1"], params["b1"],
        params["g1"], params["be1"], params["m1"], params["v1"])
    w2, b2 = _fold_bn_into_linear(
        params["w2"], params["b2"],
        params["g2"], params["be2"], params["m2"], params["v2"])

    # seq_len==1 attention: softmax over a single key is exactly 1, so
    # attn_out = (h @ wv + bv) @ wo + bo.  No nonlinearity before fc2 (dropout1
    # is identity in eval), so fold the whole thing into fc2 in f32:
    wvo = params["wv"] @ params["wo"]                 # [1024, 1024] f32
    bvo = params["bv"] @ params["wo"] + params["bo"]  # [1, 1024]    f32
    wa = wvo @ w2                                     # [1024, 512]  f32
    ba = bvo @ w2 + b2                                # [1, 512]     f32

    # fc1 split into the two 512-row halves that multiply out1 / out2.
    w1a, w1b = w1[:FEAT], w1[FEAT:]

    # Pad fc3 to 128 output lanes (extra columns are zero -> logits unchanged).
    w3 = jnp.zeros((HIDDEN2, PAD_OUT), jnp.float32).at[:, :NUM_CLASSES].set(params["w3"])
    b3 = jnp.zeros((1, PAD_OUT), jnp.float32).at[:, :NUM_CLASSES].set(params["b3"])

    bf16 = lambda a: a.astype(jnp.bfloat16)
    f32 = lambda a: a.astype(jnp.float32)
    return {
        "w1a": bf16(w1a), "w1b": bf16(w1b), "b1": f32(b1),
        "wa": bf16(wa), "ba": f32(ba),
        "w3": bf16(w3), "b3": f32(b3),
    }


# ----------------------------------------------------------------------------
# Stand-in backbones + parameter construction
# ----------------------------------------------------------------------------
def backbone_features(x_nchw, w, b):
    # Stand-in feature extractor (glue, plain JAX): global average pool over
    # H, W then a Linear C -> 512.
    pooled = jnp.mean(x_nchw, axis=(2, 3))        # [B, C]
    return pooled @ w + b                          # [B, 512]


def make_params(key, in_channels):
    ks = jax.random.split(key, 14)
    n = lambda k, shape, s=0.02: (s * jax.random.normal(k, shape)).astype(jnp.float32)
    z = lambda shape: jnp.zeros(shape, jnp.float32)
    o = lambda shape: jnp.ones(shape, jnp.float32)
    # NOTE: weights are stored [in, out] (transposed relative to PyTorch's
    # [out, in]); the q/k halves of MHA's in_proj are omitted because they
    # provably do not affect the output when the sequence length is 1.
    return {
        # stand-in backbones
        "eff_w": n(ks[0], (in_channels, FEAT)), "eff_b": n(ks[1], (FEAT,)),
        "mob_w": n(ks[2], (in_channels, FEAT)), "mob_b": n(ks[3], (FEAT,)),
        # fc1
        "w1": n(ks[4], (EMBED, EMBED)), "b1": n(ks[5], (1, EMBED)),
        # bn1 (PyTorch init: gamma=1, beta=0, running_mean=0, running_var=1)
        "g1": o((1, EMBED)), "be1": z((1, EMBED)),
        "m1": z((1, EMBED)), "v1": o((1, EMBED)),
        # attention value / output projections (q/k unused for seq_len == 1)
        "wv": n(ks[6], (EMBED, EMBED)), "bv": n(ks[7], (1, EMBED)),
        "wo": n(ks[8], (EMBED, EMBED)), "bo": n(ks[9], (1, EMBED)),
        # fc2
        "w2": n(ks[10], (EMBED, HIDDEN2)), "b2": z((1, HIDDEN2)),
        # bn2
        "g2": o((1, HIDDEN2)), "be2": z((1, HIDDEN2)),
        "m2": z((1, HIDDEN2)), "v2": o((1, HIDDEN2)),
        # fc3
        "w3": n(ks[11], (HIDDEN2, NUM_CLASSES)), "b3": z((1, NUM_CLASSES)),
    }


def combined_model_forward(x_nchw, params, head):
    out1 = backbone_features(x_nchw, params["eff_w"], params["eff_b"])  # [B,512]
    out2 = backbone_features(x_nchw, params["mob_w"], params["mob_b"])  # [B,512]
    # No concatenate: the kernel consumes the two halves directly (split-K fc1).
    return combined_head(out1, out2, head)


if __name__ == "__main__":
    key = jax.random.PRNGKey(0)
    k_x, k_p = jax.random.split(key)
    B, C, H, W = 2, 4, 16, 16
    x = jax.random.normal(k_x, (B, C, H, W), dtype=jnp.float32)  # layout: NCHW
    params = make_params(k_p, C)
    head = prepare_head_weights(params)   # one-time BN/attention/fc2 folding + bf16 cast

    out = combined_model_forward(x, params, head)
    out = jax.block_until_ready(out)
    assert out.shape == (B, NUM_CLASSES)
    assert bool(jnp.all(jnp.isfinite(out)))
    print("KERNEL_OK")
</pallas_src>

<mosaic_0001>
module attributes {stable_mosaic.version = 11 : i64} {
  func.func @combined_head_kernel(%arg0: i32, %arg1: memref<8x512xbf16, #tpu.memory_space<vmem>>, %arg2: memref<8x512xbf16, #tpu.memory_space<vmem>>, %arg3: memref<512x1024xbf16, #tpu.memory_space<vmem>>, %arg4: memref<512x1024xbf16, #tpu.memory_space<vmem>>, %arg5: memref<1x1024xf32, #tpu.memory_space<vmem>>, %arg6: memref<1024x512xbf16, #tpu.memory_space<vmem>>, %arg7: memref<1x512xf32, #tpu.memory_space<vmem>>, %arg8: memref<512x128xbf16, #tpu.memory_space<vmem>>, %arg9: memref<1x128xf32, #tpu.memory_space<vmem>>, %arg10: memref<8x128xf32, #tpu.memory_space<vmem>>) attributes {dimension_semantics = [#tpu.dimension_semantics<parallel>], iteration_bounds = array<i64: 1>, scalar_prefetch = 0 : i64, scratch_operands = 0 : i64, tpu.core_type = #tpu.core_type<tc>, window_params = [{transform_indices = @transform_0, window_bounds = array<i64: 8, 512>}, {transform_indices = @transform_1, window_bounds = array<i64: 8, 512>}, {pipeline_mode = #tpu.pipeline_mode<synchronous>, transform_indices = @transform_2, window_bounds = array<i64: 512, 1024>}, {pipeline_mode = #tpu.pipeline_mode<synchronous>, transform_indices = @transform_3, window_bounds = array<i64: 512, 1024>}, {pipeline_mode = #tpu.pipeline_mode<synchronous>, transform_indices = @transform_4, window_bounds = array<i64: 1, 1024>}, {pipeline_mode = #tpu.pipeline_mode<synchronous>, transform_indices = @transform_5, window_bounds = array<i64: 1024, 512>}, {pipeline_mode = #tpu.pipeline_mode<synchronous>, transform_indices = @transform_6, window_bounds = array<i64: 1, 512>}, {pipeline_mode = #tpu.pipeline_mode<synchronous>, transform_indices = @transform_7, window_bounds = array<i64: 512, 128>}, {pipeline_mode = #tpu.pipeline_mode<synchronous>, transform_indices = @transform_8, window_bounds = array<i64: 1, 128>}, {transform_indices = @transform_9, window_bounds = array<i64: 8, 128>}]} {
    %c0 = arith.constant 0 : index
    %c0_0 = arith.constant 0 : index
    %0 = vector.load %arg1[%c0, %c0_0] : memref<8x512xbf16, #tpu.memory_space<vmem>>, vector<8x512xbf16>
    %c0_1 = arith.constant 0 : index
    %c0_2 = arith.constant 0 : index
    %1 = vector.load %arg3[%c0_1, %c0_2] : memref<512x1024xbf16, #tpu.memory_space<vmem>>, vector<512x1024xbf16>
    %cst = arith.constant dense<0.000000e+00> : vector<8x1024xf32>
    %2 = tpu.matmul %0, %1, %cst {dimension_numbers = #tpu.dot_dimension_numbers<[1], [0], [0], [1], [0, 0, 1, 1], [], []>} : vector<8x512xbf16>, vector<512x1024xbf16>, vector<8x1024xf32> -> vector<8x1024xf32>
    %c0_3 = arith.constant 0 : index
    %c0_4 = arith.constant 0 : index
    %3 = vector.load %arg2[%c0_3, %c0_4] : memref<8x512xbf16, #tpu.memory_space<vmem>>, vector<8x512xbf16>
    %c0_5 = arith.constant 0 : index
    %c0_6 = arith.constant 0 : index
    %4 = vector.load %arg4[%c0_5, %c0_6] : memref<512x1024xbf16, #tpu.memory_space<vmem>>, vector<512x1024xbf16>
    %cst_7 = arith.constant dense<0.000000e+00> : vector<8x1024xf32>
    %5 = tpu.matmul %3, %4, %cst_7 {dimension_numbers = #tpu.dot_dimension_numbers<[1], [0], [0], [1], [0, 0, 1, 1], [], []>} : vector<8x512xbf16>, vector<512x1024xbf16>, vector<8x1024xf32> -> vector<8x1024xf32>
    %6 = arith.addf %2, %5 : vector<8x1024xf32>
    %c0_8 = arith.constant 0 : index
    %c0_9 = arith.constant 0 : index
    %7 = vector.load %arg5[%c0_8, %c0_9] : memref<1x1024xf32, #tpu.memory_space<vmem>>, vector<1x1024xf32>
    %8 = vector.broadcast %7 : vector<1x1024xf32> to vector<8x1024xf32>
    %9 = arith.addf %6, %8 : vector<8x1024xf32>
    %cst_10 = arith.constant 0.000000e+00 : f32
    %10 = vector.broadcast %cst_10 : f32 to vector<8x1024xf32>
    %11 = arith.maximumf %9, %10 : vector<8x1024xf32>
    %12 = arith.truncf %11 : vector<8x1024xf32> to vector<8x1024xbf16>
    %c0_11 = arith.constant 0 : index
    %c0_12 = arith.constant 0 : index
    %13 = vector.load %arg6[%c0_11, %c0_12] : memref<1024x512xbf16, #tpu.memory_space<vmem>>, vector<1024x512xbf16>
    %cst_13 = arith.constant dense<0.000000e+00> : vector<8x512xf32>
    %14 = tpu.matmul %12, %13, %cst_13 {dimension_numbers = #tpu.dot_dimension_numbers<[1], [0], [0], [1], [0, 0, 1, 1], [], []>} : vector<8x1024xbf16>, vector<1024x512xbf16>, vector<8x512xf32> -> vector<8x512xf32>
    %c0_14 = arith.constant 0 : index
    %c0_15 = arith.constant 0 : index
    %15 = vector.load %arg7[%c0_14, %c0_15] : memref<1x512xf32, #tpu.memory_space<vmem>>, vector<1x512xf32>
    %16 = vector.broadcast %15 : vector<1x512xf32> to vector<8x512xf32>
    %17 = arith.addf %14, %16 : vector<8x512xf32>
    %cst_16 = arith.constant 0.000000e+00 : f32
    %18 = vector.broadcast %cst_16 : f32 to vector<8x512xf32>
    %19 = arith.maximumf %17, %18 : vector<8x512xf32>
    %20 = arith.truncf %19 : vector<8x512xf32> to vector<8x512xbf16>
    %c0_17 = arith.constant 0 : index
    %c0_18 = arith.constant 0 : index
    %21 = vector.load %arg8[%c0_17, %c0_18] : memref<512x128xbf16, #tpu.memory_space<vmem>>, vector<512x128xbf16>
    %cst_19 = arith.constant dense<0.000000e+00> : vector<8x128xf32>
    %22 = tpu.matmul %20, %21, %cst_19 {dimension_numbers = #tpu.dot_dimension_numbers<[1], [0], [0], [1], [0, 0, 1, 1], [], []>} : vector<8x512xbf16>, vector<512x128xbf16>, vector<8x128xf32> -> vector<8x128xf32>
    %c0_20 = arith.constant 0 : index
    %c0_21 = arith.constant 0 : index
    %23 = vector.load %arg9[%c0_20, %c0_21] : memref<1x128xf32, #tpu.memory_space<vmem>>, vector<1x128xf32>
    %24 = vector.broadcast %23 : vector<1x128xf32> to vector<8x128xf32>
    %25 = arith.addf %22, %24 : vector<8x128xf32>
    %c0_22 = arith.constant 0 : index
    %c0_23 = arith.constant 0 : index
    %26 = vector.load %arg10[%c0_22, %c0_23] : memref<8x128xf32, #tpu.memory_space<vmem>>, vector<8x128xf32>
    tpu.vector_store %arg10[%c0_22, %c0_23], %25 {strides = array<i32>} : memref<8x128xf32, #tpu.memory_space<vmem>>, vector<8x128xf32>,
    return
  }
  func.func @transform_0(%arg0: i32) -> (i32, i32) {
    %c0_i32 = arith.constant 0 : i32
    %c0_i32_0 = arith.constant 0 : i32
    return %arg0, %c0_i32 : i32, i32
  }
  func.func @transform_1(%arg0: i32) -> (i32, i32) {
    %c0_i32 = arith.constant 0 : i32
    %c0_i32_0 = arith.constant 0 : i32
    return %arg0, %c0_i32 : i32, i32
  }
  func.func @transform_2(%arg0: i32) -> (i32, i32) {
    %c0_i32 = arith.constant 0 : i32
    %c0_i32_0 = arith.constant 0 : i32
    %c0_i32_1 = arith.constant 0 : i32
    return %c0_i32, %c0_i32_0 : i32, i32
  }
  func.func @transform_3(%arg0: i32) -> (i32, i32) {
    %c0_i32 = arith.constant 0 : i32
    %c0_i32_0 = arith.constant 0 : i32
    %c0_i32_1 = arith.constant 0 : i32
    return %c0_i32, %c0_i32_0 : i32, i32
  }
  func.func @transform_4(%arg0: i32) -> (i32, i32) {
    %c0_i32 = arith.constant 0 : i32
    %c0_i32_0 = arith.constant 0 : i32
    %c0_i32_1 = arith.constant 0 : i32
    return %c0_i32, %c0_i32_0 : i32, i32
  }
  func.func @transform_5(%arg0: i32) -> (i32, i32) {
    %c0_i32 = arith.constant 0 : i32
    %c0_i32_0 = arith.constant 0 : i32
    %c0_i32_1 = arith.constant 0 : i32
    return %c0_i32, %c0_i32_0 : i32, i32
  }
  func.func @transform_6(%arg0: i32) -> (i32, i32) {
    %c0_i32 = arith.constant 0 : i32
    %c0_i32_0 = arith.constant 0 : i32
    %c0_i32_1 = arith.constant 0 : i32
    return %c0_i32, %c0_i32_0 : i32, i32
  }
  func.func @transform_7(%arg0: i32) -> (i32, i32) {
    %c0_i32 = arith.constant 0 : i32
    %c0_i32_0 = arith.constant 0 : i32
    %c0_i32_1 = arith.constant 0 : i32
    return %c0_i32, %c0_i32_0 : i32, i32
  }
  func.func @transform_8(%arg0: i32) -> (i32, i32) {
    %c0_i32 = arith.constant 0 : i32
    %c0_i32_0 = arith.constant 0 : i32
    %c0_i32_1 = arith.constant 0 : i32
    return %c0_i32, %c0_i32_0 : i32, i32
  }
  func.func @transform_9(%arg0: i32) -> (i32, i32) {
    %c0_i32 = arith.constant 0 : i32
    %c0_i32_0 = arith.constant 0 : i32
    return %arg0, %c0_i32 : i32, i32
  }
}

</mosaic_0001>

<llo_original>
// kernel: tpu_custom_call.1
$region0: #{tpu_custom_call.1}
  #allocation0 [shape = 'u32[]', space=smem, size = 0x4, offset = 0x4, fixed_abs, tag = 'smem constant byte address 0x4 - core index']
  #allocation1 [shape = 'u32[144,128]{1,0:T(1,128)}', space=vmem, size = 0x12000, scoped, tag = 'internal scratch']
  %s0 = inlined_call_operand.hbm [shape: bf16[8,512], index: 0, kind: input, shape index: {}]
  %s1 = inlined_call_operand.hbm [shape: bf16[8,512], index: 1, kind: input, shape index: {}]
  %s2 = inlined_call_operand.hbm [shape: bf16[512,1024], index: 2, kind: input, shape index: {}]
  %s3 = inlined_call_operand.hbm [shape: bf16[512,1024], index: 3, kind: input, shape index: {}]
  %s4 = inlined_call_operand.hbm [shape: f32[1,1024], index: 4, kind: input, shape index: {}]
  %s5 = inlined_call_operand.hbm [shape: bf16[1024,512], index: 5, kind: input, shape index: {}]
  %s6 = inlined_call_operand.vmem [shape: f32[1,512], index: 6, kind: input, shape index: {}]
  %s7 = inlined_call_operand.hbm [shape: bf16[512,128], index: 7, kind: input, shape index: {}]
  %s8 = inlined_call_operand.vmem [shape: f32[1,128], index: 8, kind: input, shape index: {}]
  %s9 = inlined_call_operand.hbm [shape: f32[8,128], index: 9, kind: output, shape index: {}]
  %s10 = sld [smem:[#allocation0]]
  $region74: #{tpu_custom_call.1} parent=0
    _
  %s12 = ssub.s32 1, %s10
  %s13 = scalar_select 0, %s12, %s10
  $region1: #{tpu_custom_call.1} parent=0
    #allocation2 [shape = 'u8[8192]{0}', space=vmem, size = 0x2000, scoped, tag = 'input window, operand 0, single buffered']
    #allocation3 [shape = 's32[1]{0}', space=sflag, size = 0x4, scoped, tag = 'scoped memory for tpu_custom_call.1']
    #allocation4 [shape = 's32[1]{0}', space=sflag, size = 0x4, scoped, tag = 'scoped memory for tpu_custom_call.1']
    #allocation5 [shape = 'u8[8192]{0}', space=vmem, size = 0x2000, scoped, tag = 'input window, operand 1, single buffered']
    #allocation6 [shape = 's32[1]{0}', space=sflag, size = 0x4, scoped, tag = 'scoped memory for tpu_custom_call.1']
    #allocation7 [shape = 'u8[1048576]{0}', space=vmem, size = 0x100000, scoped, tag = 'input window, operand 2, single buffered']
    #allocation8 [shape = 'u8[1048576]{0}', space=vmem, size = 0x100000, scoped, tag = 'input window, operand 3, single buffered']
    #allocation9 [shape = 's32[1]{0}', space=sflag, size = 0x4, scoped, tag = 'scoped memory for tpu_custom_call.1']
    #allocation10 [shape = 'u8[4096]{0}', space=vmem, size = 0x1000, scoped, tag = 'input window, operand 4, single buffered']
    #allocation11 [shape = 'u8[1048576]{0}', space=vmem, size = 0x100000, scoped, tag = 'input window, operand 5, single buffered']
    #allocation12 [shape = 's32[1]{0}', space=sflag, size = 0x4, scoped, tag = 'scoped memory for tpu_custom_call.1']
    #allocation13 [shape = 'u8[131072]{0}', space=vmem, size = 0x20000, scoped, tag = 'input window, operand 7, single buffered']
    #allocation14 [shape = 'u8[4096]{0}', space=vmem, size = 0x1000, scoped, tag = 'output window, operand 0, single buffered']
    %14 = vsyncpa [#allocation3], 0
    %15 = vsyncpa [#allocation6], 0
    %16 = vsyncpa [#allocation9], 0
    %17 = vsyncpa [#allocation12], 0
    %18 = vsyncpa [#allocation4], 0
    // Predicated region
    $region2: #{tpu_custom_call.1} parent=1 // pred_check
      _
    $region3: #{tpu_custom_call.1} parent=1 // pred_check_branch
      %20 = sbr.rel (0) target = $region5
    $region4: #{tpu_custom_call.1} parent=1 // pred_region
      %s22 = ssub.s32 256, 256
      %23 = vsyncadd [#allocation3], %s22
      %s25 = sshll.u32 [#allocation2], 4
      %s26 = int_to_ptr.vmem [resolvable:$true] %s25
      %28 = dma.hbm_to_vmem [thread:$0]  %s0, 256, %s26, [#allocation3]
    $region5: #{tpu_custom_call.1} parent=1 // pred_fallthru
      _
    // Predicated region
    $region6: #{tpu_custom_call.1} parent=1 // pred_check
      _
    $region7: #{tpu_custom_call.1} parent=1 // pred_check_branch
      %30 = sbr.rel (0) target = $region9
    $region8: #{tpu_custom_call.1} parent=1 // pred_region
      %s32 = ssub.s32 256, 256
      %33 = vsyncadd [#allocation6], %s32
      %s35 = sshll.u32 [#allocation5], 4
      %s36 = int_to_ptr.vmem [resolvable:$true] %s35
      %38 = dma.hbm_to_vmem [thread:$0]  %s1, 256, %s36, [#allocation6]
    $region9: #{tpu_custom_call.1} parent=1 // pred_fallthru
      _
    // Predicated region
    $region10: #{tpu_custom_call.1} parent=1 // pred_check
      _
    $region11: #{tpu_custom_call.1} parent=1 // pred_check_branch
      %40 = sbr.rel (0) target = $region13
    $region12: #{tpu_custom_call.1} parent=1 // pred_region
      %s42 = ssub.s32 32768, 32768
      %43 = vsyncadd [#allocation6], %s42
      %s44 = sshll.u32 [#allocation7], 4
      %s45 = int_to_ptr.vmem [resolvable:$true] %s44
      %50 = dma.hbm_to_vmem [thread:$0]  %s2, 32768, %s45, [#allocation6], 512, 512, 32
    $region13: #{tpu_custom_call.1} parent=1 // pred_fallthru
      _
    // Predicated region
    $region14: #{tpu_custom_call.1} parent=1 // pred_check
      _
    $region15: #{tpu_custom_call.1} parent=1 // pred_check_branch
      %52 = sbr.rel (0) target = $region17
    $region16: #{tpu_custom_call.1} parent=1 // pred_region
      %s54 = ssub.s32 32768, 32768
      %55 = vsyncadd [#allocation9], %s54
      %s56 = sshll.u32 [#allocation8], 4
      %s57 = int_to_ptr.vmem [resolvable:$true] %s56
      %62 = dma.hbm_to_vmem [thread:$0]  %s3, 32768, %s57, [#allocation9], 512, 512, 32
    $region17: #{tpu_custom_call.1} parent=1 // pred_fallthru
      _
    // Predicated region
    $region18: #{tpu_custom_call.1} parent=1 // pred_check
      _
    $region19: #{tpu_custom_call.1} parent=1 // pred_check_branch
      %64 = sbr.rel (0) target = $region21
    $region20: #{tpu_custom_call.1} parent=1 // pred_region
      %s66 = ssub.s32 128, 128
      %67 = vsyncadd [#allocation9], %s66
      %s69 = sshll.u32 [#allocation10], 4
      %s70 = int_to_ptr.vmem [resolvable:$true] %s69
      %72 = dma.hbm_to_vmem [thread:$0]  %s4, 128, %s70, [#allocation9]
    $region21: #{tpu_custom_call.1} parent=1 // pred_fallthru
      _
    // Predicated region
    $region22: #{tpu_custom_call.1} parent=1 // pred_check
      _
    $region23: #{tpu_custom_call.1} parent=1 // pred_check_branch
      %74 = sbr.rel (0) target = $region25
    $region24: #{tpu_custom_call.1} parent=1 // pred_region
      %s76 = ssub.s32 32768, 32768
      %77 = vsyncadd [#allocation12], %s76
      %s78 = sshll.u32 [#allocation11], 4
      %s79 = int_to_ptr.vmem [resolvable:$true] %s78
      %84 = dma.hbm_to_vmem [thread:$0]  %s5, 32768, %s79, [#allocation12], 256, 256, 16
    $region25: #{tpu_custom_call.1} parent=1 // pred_fallthru
      _
    // Predicated region
    $region26: #{tpu_custom_call.1} parent=1 // pred_check
      _
    $region27: #{tpu_custom_call.1} parent=1 // pred_check_branch
      %86 = sbr.rel (0) target = $region29
    $region28: #{tpu_custom_call.1} parent=1 // pred_region
      _
    $region29: #{tpu_custom_call.1} parent=1 // pred_fallthru
      _
    // Predicated region
    $region30: #{tpu_custom_call.1} parent=1 // pred_check
      _
    $region31: #{tpu_custom_call.1} parent=1 // pred_check_branch
      %88 = sbr.rel (0) target = $region33
    $region32: #{tpu_custom_call.1} parent=1 // pred_region
      %s90 = ssub.s32 4096, 4096
      %91 = vsyncadd [#allocation12], %s90
      %s92 = sshll.u32 [#allocation13], 4
      %s93 = int_to_ptr.vmem [resolvable:$true] %s92
      %98 = dma.hbm_to_vmem [thread:$0]  %s7, 4096, %s93, [#allocation12], 64, 64, 4
    $region33: #{tpu_custom_call.1} parent=1 // pred_fallthru
      _
    // Predicated region
    $region34: #{tpu_custom_call.1} parent=1 // pred_check
      _
    $region35: #{tpu_custom_call.1} parent=1 // pred_check_branch
      %100 = sbr.rel (0) target = $region37
    $region36: #{tpu_custom_call.1} parent=1 // pred_region
      _
    $region37: #{tpu_custom_call.1} parent=1 // pred_fallthru
      _
    // Predicated region
    $region38: #{tpu_custom_call.1} parent=1 // pred_check
      _
    $region39: #{tpu_custom_call.1} parent=1 // pred_check_branch
      %102 = sbr.rel (0) target = $region41
    $region40: #{tpu_custom_call.1} parent=1 // pred_region
      %103 = dma.done [#allocation3], 256
    $region41: #{tpu_custom_call.1} parent=1 // pred_fallthru
      _
    // Predicated region
    $region42: #{tpu_custom_call.1} parent=1 // pred_check
      _
    $region43: #{tpu_custom_call.1} parent=1 // pred_check_branch
      %105 = sbr.rel (0) target = $region45
    $region44: #{tpu_custom_call.1} parent=1 // pred_region
      %106 = dma.done [#allocation6], 256
    $region45: #{tpu_custom_call.1} parent=1 // pred_fallthru
      _
    // Predicated region
    $region46: #{tpu_custom_call.1} parent=1 // pred_check
      _
    $region47: #{tpu_custom_call.1} parent=1 // pred_check_branch
      %108 = sbr.rel (0) target = $region49
    $region48: #{tpu_custom_call.1} parent=1 // pred_region
      %109 = dma.done [#allocation6], 32768
    $region49: #{tpu_custom_call.1} parent=1 // pred_fallthru
      _
    // Predicated region
    $region50: #{tpu_custom_call.1} parent=1 // pred_check
      _
    $region51: #{tpu_custom_call.1} parent=1 // pred_check_branch
      %111 = sbr.rel (0) target = $region53
    $region52: #{tpu_custom_call.1} parent=1 // pred_region
      %112 = dma.done [#allocation9], 32768
    $region53: #{tpu_custom_call.1} parent=1 // pred_fallthru
      _
    // Predicated region
    $region54: #{tpu_custom_call.1} parent=1 // pred_check
      _
    $region55: #{tpu_custom_call.1} parent=1 // pred_check_branch
      %114 = sbr.rel (0) target = $region57
    $region56: #{tpu_custom_call.1} parent=1 // pred_region
      %115 = dma.done [#allocation9], 128
    $region57: #{tpu_custom_call.1} parent=1 // pred_fallthru
      _
    // Predicated region
    $region58: #{tpu_custom_call.1} parent=1 // pred_check
      _
    $region59: #{tpu_custom_call.1} parent=1 // pred_check_branch
      %117 = sbr.rel (0) target = $region61
    $region60: #{tpu_custom_call.1} parent=1 // pred_region
      %118 = dma.done [#allocation12], 32768
    $region61: #{tpu_custom_call.1} parent=1 // pred_fallthru
      _
    // Predicated region
    $region62: #{tpu_custom_call.1} parent=1 // pred_check
      _
    $region63: #{tpu_custom_call.1} parent=1 // pred_check_branch
      %120 = sbr.rel (0) target = $region65
    $region64: #{tpu_custom_call.1} parent=1 // pred_region
      %121 = dma.done [#allocation12], 4096
    $region65: #{tpu_custom_call.1} parent=1 // pred_fallthru
      _
    %v123 = vld [vmem:[#allocation2] sm:$0xff]
    %v124 = vld [vmem:[#allocation2 + $0x8] sm:$0xff]
    %v125 = vld [vmem:[#allocation7] sm:$0xff]
    %v126 = vld [vmem:[#allocation7 + $0x8] sm:$0xff]
    %v127 = vld [vmem:[#allocation7 + $0x10] sm:$0xff]
    %v128 = vld [vmem:[#allocation7 + $0x18] sm:$0xff]
    %v129 = vld [vmem:[#allocation7 + $0x20] sm:$0xff]
    %v130 = vld [vmem:[#allocation7 + $0x28] sm:$0xff]
    %v131 = vld [vmem:[#allocation7 + $0x30] sm:$0xff]
    %v132 = vld [vmem:[#allocation7 + $0x38] sm:$0xff]
    %v133 = vld [vmem:[#allocation7 + $0x40] sm:$0xff]
    %v134 = vld [vmem:[#allocation7 + $0x48] sm:$0xff]
    %v135 = vld [vmem:[#allocation7 + $0x50] sm:$0xff]
    %v136 = vld [vmem:[#allocation7 + $0x58] sm:$0xff]
    %v137 = vld [vmem:[#allocation7 + $0x60] sm:$0xff]
    %v138 = vld [vmem:[#allocation7 + $0x68] sm:$0xff]
    %v139 = vld [vmem:[#allocation7 + $0x70] sm:$0xff]
    %v140 = vld [vmem:[#allocation7 + $0x78] sm:$0xff]
    %v141 = vld [vmem:[#allocation7 + $0x80] sm:$0xff]
    %v142 = vld [vmem:[#allocation7 + $0x88] sm:$0xff]
    %v143 = vld [vmem:[#allocation7 + $0x90] sm:$0xff]
    %v144 = vld [vmem:[#allocation7 + $0x98] sm:$0xff]
    %v145 = vld [vmem:[#allocation7 + $0xa0] sm:$0xff]
    %v146 = vld [vmem:[#allocation7 + $0xa8] sm:$0xff]
    %v147 = vld [vmem:[#allocation7 + $0xb0] sm:$0xff]
    %v148 = vld [vmem:[#allocation7 + $0xb8] sm:$0xff]
    %v149 = vld [vmem:[#allocation7 + $0xc0] sm:$0xff]
    %v150 = vld [vmem:[#allocation7 + $0xc8] sm:$0xff]
    %v151 = vld [vmem:[#allocation7 + $0xd0] sm:$0xff]
    %v152 = vld [vmem:[#allocation7 + $0xd8] sm:$0xff]
    %v153 = vld [vmem:[#allocation7 + $0xe0] sm:$0xff]
    %v154 = vld [vmem:[#allocation7 + $0xe8] sm:$0xff]
    %v155 = vld [vmem:[#allocation7 + $0xf0] sm:$0xff]
    %v156 = vld [vmem:[#allocation7 + $0xf8] sm:$0xff]
    %v157 = vld [vmem:[#allocation7 + $0x100] sm:$0xff]
    %v158 = vld [vmem:[#allocation7 + $0x108] sm:$0xff]
    %v159 = vld [vmem:[#allocation7 + $0x110] sm:$0xff]
    %v160 = vld [vmem:[#allocation7 + $0x118] sm:$0xff]
    %v161 = vld [vmem:[#allocation7 + $0x120] sm:$0xff]
    %v162 = vld [vmem:[#allocation7 + $0x128] sm:$0xff]
    %v163 = vld [vmem:[#allocation7 + $0x130] sm:$0xff]
    %v164 = vld [vmem:[#allocation7 + $0x138] sm:$0xff]
    %v165 = vld [vmem:[#allocation7 + $0x140] sm:$0xff]
    %v166 = vld [vmem:[#allocation7 + $0x148] sm:$0xff]
    %v167 = vld [vmem:[#allocation7 + $0x150] sm:$0xff]
    %v168 = vld [vmem:[#allocation7 + $0x158] sm:$0xff]
    %v169 = vld [vmem:[#allocation7 + $0x160] sm:$0xff]
    %v170 = vld [vmem:[#allocation7 + $0x168] sm:$0xff]
    %v171 = vld [vmem:[#allocation7 + $0x170] sm:$0xff]
    %v172 = vld [vmem:[#allocation7 + $0x178] sm:$0xff]
    %v173 = vld [vmem:[#allocation7 + $0x180] sm:$0xff]
    %v174 = vld [vmem:[#allocation7 + $0x188] sm:$0xff]
    %v175 = vld [vmem:[#allocation7 + $0x190] sm:$0xff]
    %v176 = vld [vmem:[#allocation7 + $0x198] sm:$0xff]
    %v177 = vld [vmem:[#allocation7 + $0x1a0] sm:$0xff]
    %v178 = vld [vmem:[#allocation7 + $0x1a8] sm:$0xff]
    %v179 = vld [vmem:[#allocation7 + $0x1b0] sm:$0xff]
    %v180 = vld [vmem:[#allocation7 + $0x1b8] sm:$0xff]
    %v181 = vld [vmem:[#allocation7 + $0x1c0] sm:$0xff]
    %v182 = vld [vmem:[#allocation7 + $0x1c8] sm:$0xff]
    %v183 = vld [vmem:[#allocation7 + $0x1d0] sm:$0xff]
    %v184 = vld [vmem:[#allocation7 + $0x1d8] sm:$0xff]
    %v185 = vld [vmem:[#allocation7 + $0x1e0] sm:$0xff]
    %v186 = vld [vmem:[#allocation7 + $0x1e8] sm:$0xff]
    %v187 = vld [vmem:[#allocation7 + $0x1f0] sm:$0xff]
    %v188 = vld [vmem:[#allocation7 + $0x1f8] sm:$0xff]
    %v189 = vld [vmem:[#allocation7 + $0x200] sm:$0xff]
    %v190 = vld [vmem:[#allocation7 + $0x208] sm:$0xff]
    %v191 = vld [vmem:[#allocation7 + $0x210] sm:$0xff]
    %v192 = vld [vmem:[#allocation7 + $0x218] sm:$0xff]
    %v193 = vld [vmem:[#allocation7 + $0x220] sm:$0xff]
    %v194 = vld [vmem:[#allocation7 + $0x228] sm:$0xff]
    %v195 = vld [vmem:[#allocation7 + $0x230] sm:$0xff]
    %v196 = vld [vmem:[#allocation7 + $0x238] sm:$0xff]
    %v197 = vld [vmem:[#allocation7 + $0x240] sm:$0xff]
    %v198 = vld [vmem:[#allocation7 + $0x248] sm:$0xff]
    %v199 = vld [vmem:[#allocation7 + $0x250] sm:$0xff]
    %v200 = vld [vmem:[#allocation7 + $0x258] sm:$0xff]
    %v201 = vld [vmem:[#allocation7 + $0x260] sm:$0xff]
    %v202 = vld [vmem:[#allocation7 + $0x268] sm:$0xff]
    %v203 = vld [vmem:[#allocation7 + $0x270] sm:$0xff]
    %v204 = vld [vmem:[#allocation7 + $0x278] sm:$0xff]
    %v205 = vld [vmem:[#allocation7 + $0x280] sm:$0xff]
    %v206 = vld [vmem:[#allocation7 + $0x288] sm:$0xff]
    %v207 = vld [vmem:[#allocation7 + $0x290] sm:$0xff]
    %v208 = vld [vmem:[#allocation7 + $0x298] sm:$0xff]
    %v209 = vld [vmem:[#allocation7 + $0x2a0] sm:$0xff]
    %v210 = vld [vmem:[#allocation7 + $0x2a8] sm:$0xff]
    %v211 = vld [vmem:[#allocation7 + $0x2b0] sm:$0xff]
    %v212 = vld [vmem:[#allocation7 + $0x2b8] sm:$0xff]
    %v213 = vld [vmem:[#allocation7 + $0x2c0] sm:$0xff]
    %v214 = vld [vmem:[#allocation7 + $0x2c8] sm:$0xff]
    %v215 = vld [vmem:[#allocation7 + $0x2d0] sm:$0xff]
    %v216 = vld [vmem:[#allocation7 + $0x2d8] sm:$0xff]
    %v217 = vld [vmem:[#allocation7 + $0x2e0] sm:$0xff]
    %v218 = vld [vmem:[#allocation7 + $0x2e8] sm:$0xff]
    %v219 = vld [vmem:[#allocation7 + $0x2f0] sm:$0xff]
    %v220 = vld [vmem:[#allocation7 + $0x2f8] sm:$0xff]
    %v221 = vld [vmem:[#allocation7 + $0x300] sm:$0xff]
    %v222 = vld [vmem:[#allocation7 + $0x308] sm:$0xff]
    %v223 = vld [vmem:[#allocation7 + $0x310] sm:$0xff]
    %v224 = vld [vmem:[#allocation7 + $0x318] sm:$0xff]
    %v225 = vld [vmem:[#allocation7 + $0x320] sm:$0xff]
    %v226 = vld [vmem:[#allocation7 + $0x328] sm:$0xff]
    %v227 = vld [vmem:[#allocation7 + $0x330] sm:$0xff]
    %v228 = vld [vmem:[#allocation7 + $0x338] sm:$0xff]
    %v229 = vld [vmem:[#allocation7 + $0x340] sm:$0xff]
    %v230 = vld [vmem:[#allocation7 + $0x348] sm:$0xff]
    %v231 = vld [vmem:[#allocation7 + $0x350] sm:$0xff]
    %v232 = vld [vmem:[#allocation7 + $0x358] sm:$0xff]
    %v233 = vld [vmem:[#allocation7 + $0x360] sm:$0xff]
    %v234 = vld [vmem:[#allocation7 + $0x368] sm:$0xff]
    %v235 = vld [vmem:[#allocation7 + $0x370] sm:$0xff]
    %v236 = vld [vmem:[#allocation7 + $0x378] sm:$0xff]
    %v237 = vld [vmem:[#allocation7 + $0x380] sm:$0xff]
    %v238 = vld [vmem:[#allocation7 + $0x388] sm:$0xff]
    %v239 = vld [vmem:[#allocation7 + $0x390] sm:$0xff]
    %v240 = vld [vmem:[#allocation7 + $0x398] sm:$0xff]
    %v241 = vld [vmem:[#allocation7 + $0x3a0] sm:$0xff]
    %v242 = vld [vmem:[#allocation7 + $0x3a8] sm:$0xff]
    %v243 = vld [vmem:[#allocation7 + $0x3b0] sm:$0xff]
    %v244 = vld [vmem:[#allocation7 + $0x3b8] sm:$0xff]
    %v245 = vld [vmem:[#allocation7 + $0x3c0] sm:$0xff]
    %v246 = vld [vmem:[#allocation7 + $0x3c8] sm:$0xff]
    %v247 = vld [vmem:[#allocation7 + $0x3d0] sm:$0xff]
    %v248 = vld [vmem:[#allocation7 + $0x3d8] sm:$0xff]
    %v249 = vld [vmem:[#allocation7 + $0x3e0] sm:$0xff]
    %v250 = vld [vmem:[#allocation7 + $0x3e8] sm:$0xff]
    %v251 = vld [vmem:[#allocation7 + $0x3f0] sm:$0xff]
    %v252 = vld [vmem:[#allocation7 + $0x3f8] sm:$0xff]
    %v253 = vld [vmem:[#allocation7 + $0x400] sm:$0xff]
    %v254 = vld [vmem:[#allocation7 + $0x408] sm:$0xff]
    %v255 = vld [vmem:[#allocation7 + $0x410] sm:$0xff]
    %v256 = vld [vmem:[#allocation7 + $0x418] sm:$0xff]
    %v257 = vld [vmem:[#allocation7 + $0x420] sm:$0xff]
    %v258 = vld [vmem:[#allocation7 + $0x428] sm:$0xff]
    %v259 = vld [vmem:[#allocation7 + $0x430] sm:$0xff]
    %v260 = vld [vmem:[#allocation7 + $0x438] sm:$0xff]
    %v261 = vld [vmem:[#allocation7 + $0x440] sm:$0xff]
    %v262 = vld [vmem:[#allocation7 + $0x448] sm:$0xff]
    %v263 = vld [vmem:[#allocation7 + $0x450] sm:$0xff]
    %v264 = vld [vmem:[#allocation7 + $0x458] sm:$0xff]
    %v265 = vld [vmem:[#allocation7 + $0x460] sm:$0xff]
    %v266 = vld [vmem:[#allocation7 + $0x468] sm:$0xff]
    %v267 = vld [vmem:[#allocation7 + $0x470] sm:$0xff]
    %v268 = vld [vmem:[#allocation7 + $0x478] sm:$0xff]
    %v269 = vld [vmem:[#allocation7 + $0x480] sm:$0xff]
    %v270 = vld [vmem:[#allocation7 + $0x488] sm:$0xff]
    %v271 = vld [vmem:[#allocation7 + $0x490] sm:$0xff]
    %v272 = vld [vmem:[#allocation7 + $0x498] sm:$0xff]
    %v273 = vld [vmem:[#allocation7 + $0x4a0] sm:$0xff]
    %v274 = vld [vmem:[#allocation7 + $0x4a8] sm:$0xff]
    %v275 = vld [vmem:[#allocation7 + $0x4b0] sm:$0xff]
    %v276 = vld [vmem:[#allocation7 + $0x4b8] sm:$0xff]
    %v277 = vld [vmem:[#allocation7 + $0x4c0] sm:$0xff]
    %v278 = vld [vmem:[#allocation7 + $0x4c8] sm:$0xff]
    %v279 = vld [vmem:[#allocation7 + $0x4d0] sm:$0xff]
    %v280 = vld [vmem:[#allocation7 + $0x4d8] sm:$0xff]
    %v281 = vld [vmem:[#allocation7 + $0x4e0] sm:$0xff]
    %v282 = vld [vmem:[#allocation7 + $0x4e8] sm:$0xff]
    %v283 = vld [vmem:[#allocation7 + $0x4f0] sm:$0xff]
    %v284 = vld [vmem:[#allocation7 + $0x4f8] sm:$0xff]
    %v285 = vld [vmem:[#allocation7 + $0x500] sm:$0xff]
    %v286 = vld [vmem:[#allocation7 + $0x508] sm:$0xff]
    %v287 = vld [vmem:[#allocation7 + $0x510] sm:$0xff]
    %v288 = vld [vmem:[#allocation7 + $0x518] sm:$0xff]
    %v289 = vld [vmem:[#allocation7 + $0x520] sm:$0xff]
    %v290 = vld [vmem:[#allocation7 + $0x528] sm:$0xff]
    %v291 = vld [vmem:[#allocation7 + $0x530] sm:$0xff]
    %v292 = vld [vmem:[#allocation7 + $0x538] sm:$0xff]
    %v293 = vld [vmem:[#allocation7 + $0x540] sm:$0xff]
    %v294 = vld [vmem:[#allocation7 + $0x548] sm:$0xff]
    %v295 = vld [vmem:[#allocation7 + $0x550] sm:$0xff]
    %v296 = vld [vmem:[#allocation7 + $0x558] sm:$0xff]
    %v297 = vld [vmem:[#allocation7 + $0x560] sm:$0xff]
    %v298 = vld [vmem:[#allocation7 + $0x568] sm:$0xff]
    %v299 = vld [vmem:[#allocation7 + $0x570] sm:$0xff]
    %v300 = vld [vmem:[#allocation7 + $0x578] sm:$0xff]
    %v301 = vld [vmem:[#allocation7 + $0x580] sm:$0xff]
    %v302 = vld [vmem:[#allocation7 + $0x588] sm:$0xff]
    %v303 = vld [vmem:[#allocation7 + $0x590] sm:$0xff]
    %v304 = vld [vmem:[#allocation7 + $0x598] sm:$0xff]
    %v305 = vld [vmem:[#allocation7 + $0x5a0] sm:$0xff]
    %v306 = vld [vmem:[#allocation7 + $0x5a8] sm:$0xff]
    %v307 = vld [vmem:[#allocation7 + $0x5b0] sm:$0xff]
    %v308 = vld [vmem:[#allocation7 + $0x5b8] sm:$0xff]
    %v309 = vld [vmem:[#allocation7 + $0x5c0] sm:$0xff]
    %v310 = vld [vmem:[#allocation7 + $0x5c8] sm:$0xff]
    %v311 = vld [vmem:[#allocation7 + $0x5d0] sm:$0xff]
    %v312 = vld [vmem:[#allocation7 + $0x5d8] sm:$0xff]
    %v313 = vld [vmem:[#allocation7 + $0x5e0] sm:$0xff]
    %v314 = vld [vmem:[#allocation7 + $0x5e8] sm:$0xff]
    %v315 = vld [vmem:[#allocation7 + $0x5f0] sm:$0xff]
    %v316 = vld [vmem:[#allocation7 + $0x5f8] sm:$0xff]
    %v317 = vld [vmem:[#allocation7 + $0x600] sm:$0xff]
    %v318 = vld [vmem:[#allocation7 + $0x608] sm:$0xff]
    %v319 = vld [vmem:[#allocation7 + $0x610] sm:$0xff]
    %v320 = vld [vmem:[#allocation7 + $0x618] sm:$0xff]
    %v321 = vld [vmem:[#allocation7 + $0x620] sm:$0xff]
    %v322 = vld [vmem:[#allocation7 + $0x628] sm:$0xff]
    %v323 = vld [vmem:[#allocation7 + $0x630] sm:$0xff]
    %v324 = vld [vmem:[#allocation7 + $0x638] sm:$0xff]
    %v325 = vld [vmem:[#allocation7 + $0x640] sm:$0xff]
    %v326 = vld [vmem:[#allocation7 + $0x648] sm:$0xff]
    %v327 = vld [vmem:[#allocation7 + $0x650] sm:$0xff]
    %v328 = vld [vmem:[#allocation7 + $0x658] sm:$0xff]
    %v329 = vld [vmem:[#allocation7 + $0x660] sm:$0xff]
    %v330 = vld [vmem:[#allocation7 + $0x668] sm:$0xff]
    %v331 = vld [vmem:[#allocation7 + $0x670] sm:$0xff]
    %v332 = vld [vmem:[#allocation7 + $0x678] sm:$0xff]
    %v333 = vld [vmem:[#allocation7 + $0x680] sm:$0xff]
    %v334 = vld [vmem:[#allocation7 + $0x688] sm:$0xff]
    %v335 = vld [vmem:[#allocation7 + $0x690] sm:$0xff]
    %v336 = vld [vmem:[#allocation7 + $0x698] sm:$0xff]
    %v337 = vld [vmem:[#allocation7 + $0x6a0] sm:$0xff]
    %v338 = vld [vmem:[#allocation7 + $0x6a8] sm:$0xff]
    %v339 = vld [vmem:[#allocation7 + $0x6b0] sm:$0xff]
    %v340 = vld [vmem:[#allocation7 + $0x6b8] sm:$0xff]
    %v341 = vld [vmem:[#allocation7 + $0x6c0] sm:$0xff]
    %v342 = vld [vmem:[#allocation7 + $0x6c8] sm:$0xff]
    %v343 = vld [vmem:[#allocation7 + $0x6d0] sm:$0xff]
    %v344 = vld [vmem:[#allocation7 + $0x6d8] sm:$0xff]
    %v345 = vld [vmem:[#allocation7 + $0x6e0] sm:$0xff]
    %v346 = vld [vmem:[#allocation7 + $0x6e8] sm:$0xff]
    %v347 = vld [vmem:[#allocation7 + $0x6f0] sm:$0xff]
    %v348 = vld [vmem:[#allocation7 + $0x6f8] sm:$0xff]
    %v349 = vld [vmem:[#allocation7 + $0x700] sm:$0xff]
    %v350 = vld [vmem:[#allocation7 + $0x708] sm:$0xff]
    %v351 = vld [vmem:[#allocation7 + $0x710] sm:$0xff]
    %v352 = vld [vmem:[#allocation7 + $0x718] sm:$0xff]
    %v353 = vld [vmem:[#allocation7 + $0x720] sm:$0xff]
    %v354 = vld [vmem:[#allocation7 + $0x728] sm:$0xff]
    %v355 = vld [vmem:[#allocation7 + $0x730] sm:$0xff]
    %v356 = vld [vmem:[#allocation7 + $0x738] sm:$0xff]
    %v357 = vld [vmem:[#allocation7 + $0x740] sm:$0xff]
    %v358 = vld [vmem:[#allocation7 + $0x748] sm:$0xff]
    %v359 = vld [vmem:[#allocation7 + $0x750] sm:$0xff]
    %v360 = vld [vmem:[#allocation7 + $0x758] sm:$0xff]
    %v361 = vld [vmem:[#allocation7 + $0x760] sm:$0xff]
    %v362 = vld [vmem:[#allocation7 + $0x768] sm:$0xff]
    %v363 = vld [vmem:[#allocation7 + $0x770] sm:$0xff]
    %v364 = vld [vmem:[#allocation7 + $0x778] sm:$0xff]
    %v365 = vld [vmem:[#allocation7 + $0x780] sm:$0xff]
    %v366 = vld [vmem:[#allocation7 + $0x788] sm:$0xff]
    %v367 = vld [vmem:[#allocation7 + $0x790] sm:$0xff]
    %v368 = vld [vmem:[#allocation7 + $0x798] sm:$0xff]
    %v369 = vld [vmem:[#allocation7 + $0x7a0] sm:$0xff]
    %v370 = vld [vmem:[#allocation7 + $0x7a8] sm:$0xff]
    %v371 = vld [vmem:[#allocation7 + $0x7b0] sm:$0xff]
    %v372 = vld [vmem:[#allocation7 + $0x7b8] sm:$0xff]
    %v373 = vld [vmem:[#allocation7 + $0x7c0] sm:$0xff]
    %v374 = vld [vmem:[#allocation7 + $0x7c8] sm:$0xff]
    %v375 = vld [vmem:[#allocation7 + $0x7d0] sm:$0xff]
    %v376 = vld [vmem:[#allocation7 + $0x7d8] sm:$0xff]
    %v377 = vld [vmem:[#allocation7 + $0x7e0] sm:$0xff]
    %v378 = vld [vmem:[#allocation7 + $0x7e8] sm:$0xff]
    %v379 = vld [vmem:[#allocation7 + $0x7f0] sm:$0xff]
    %v380 = vld [vmem:[#allocation7 + $0x7f8] sm:$0xff]
    %v381 = vld [vmem:[#allocation5] sm:$0xff]
    %v382 = vld [vmem:[#allocation5 + $0x8] sm:$0xff]
    %v383 = vld [vmem:[#allocation8] sm:$0xff]
    %v384 = vld [vmem:[#allocation8 + $0x8] sm:$0xff]
    %v385 = vld [vmem:[#allocation8 + $0x10] sm:$0xff]
    %v386 = vld [vmem:[#allocation8 + $0x18] sm:$0xff]
    %v387 = vld [vmem:[#allocation8 + $0x20] sm:$0xff]
    %v388 = vld [vmem:[#allocation8 + $0x28] sm:$0xff]
    %v389 = vld [vmem:[#allocation8 + $0x30] sm:$0xff]
    %v390 = vld [vmem:[#allocation8 + $0x38] sm:$0xff]
    %v391 = vld [vmem:[#allocation8 + $0x40] sm:$0xff]
    %v392 = vld [vmem:[#allocation8 + $0x48] sm:$0xff]
    %v393 = vld [vmem:[#allocation8 + $0x50] sm:$0xff]
    %v394 = vld [vmem:[#allocation8 + $0x58] sm:$0xff]
    %v395 = vld [vmem:[#allocation8 + $0x60] sm:$0xff]
    %v396 = vld [vmem:[#allocation8 + $0x68] sm:$0xff]
    %v397 = vld [vmem:[#allocation8 + $0x70] sm:$0xff]
    %v398 = vld [vmem:[#allocation8 + $0x78] sm:$0xff]
    %v399 = vld [vmem:[#allocation8 + $0x80] sm:$0xff]
    %v400 = vld [vmem:[#allocation8 + $0x88] sm:$0xff]
    %v401 = vld [vmem:[#allocation8 + $0x90] sm:$0xff]
    %v402 = vld [vmem:[#allocation8 + $0x98] sm:$0xff]
    %v403 = vld [vmem:[#allocation8 + $0xa0] sm:$0xff]
    %v404 = vld [vmem:[#allocation8 + $0xa8] sm:$0xff]
    %v405 = vld [vmem:[#allocation8 + $0xb0] sm:$0xff]
    %v406 = vld [vmem:[#allocation8 + $0xb8] sm:$0xff]
    %v407 = vld [vmem:[#allocation8 + $0xc0] sm:$0xff]
    %v408 = vld [vmem:[#allocation8 + $0xc8] sm:$0xff]
    %v409 = vld [vmem:[#allocation8 + $0xd0] sm:$0xff]
    %v410 = vld [vmem:[#allocation8 + $0xd8] sm:$0xff]
    %v411 = vld [vmem:[#allocation8 + $0xe0] sm:$0xff]
    %v412 = vld [vmem:[#allocation8 + $0xe8] sm:$0xff]
    %v413 = vld [vmem:[#allocation8 + $0xf0] sm:$0xff]
    %v414 = vld [vmem:[#allocation8 + $0xf8] sm:$0xff]
    %v415 = vld [vmem:[#allocation8 + $0x100] sm:$0xff]
    %v416 = vld [vmem:[#allocation8 + $0x108] sm:$0xff]
    %v417 = vld [vmem:[#allocation8 + $0x110] sm:$0xff]
    %v418 = vld [vmem:[#allocation8 + $0x118] sm:$0xff]
    %v419 = vld [vmem:[#allocation8 + $0x120] sm:$0xff]
    %v420 = vld [vmem:[#allocation8 + $0x128] sm:$0xff]
    %v421 = vld [vmem:[#allocation8 + $0x130] sm:$0xff]
    %v422 = vld [vmem:[#allocation8 + $0x138] sm:$0xff]
    %v423 = vld [vmem:[#allocation8 + $0x140] sm:$0xff]
    %v424 = vld [vmem:[#allocation8 + $0x148] sm:$0xff]
    %v425 = vld [vmem:[#allocation8 + $0x150] sm:$0xff]
    %v426 = vld [vmem:[#allocation8 + $0x158] sm:$0xff]
    %v427 = vld [vmem:[#allocation8 + $0x160] sm:$0xff]
    %v428 = vld [vmem:[#allocation8 + $0x168] sm:$0xff]
    %v429 = vld [vmem:[#allocation8 + $0x170] sm:$0xff]
    %v430 = vld [vmem:[#allocation8 + $0x178] sm:$0xff]
    %v431 = vld [vmem:[#allocation8 + $0x180] sm:$0xff]
    %v432 = vld [vmem:[#allocation8 + $0x188] sm:$0xff]
    %v433 = vld [vmem:[#allocation8 + $0x190] sm:$0xff]
    %v434 = vld [vmem:[#allocation8 + $0x198] sm:$0xff]
    %v435 = vld [vmem:[#allocation8 + $0x1a0] sm:$0xff]
    %v436 = vld [vmem:[#allocation8 + $0x1a8] sm:$0xff]
    %v437 = vld [vmem:[#allocation8 + $0x1b0] sm:$0xff]
    %v438 = vld [vmem:[#allocation8 + $0x1b8] sm:$0xff]
    %v439 = vld [vmem:[#allocation8 + $0x1c0] sm:$0xff]
    %v440 = vld [vmem:[#allocation8 + $0x1c8] sm:$0xff]
    %v441 = vld [vmem:[#allocation8 + $0x1d0] sm:$0xff]
    %v442 = vld [vmem:[#allocation8 + $0x1d8] sm:$0xff]
    %v443 = vld [vmem:[#allocation8 + $0x1e0] sm:$0xff]
    %v444 = vld [vmem:[#allocation8 + $0x1e8] sm:$0xff]
    %v445 = vld [vmem:[#allocation8 + $0x1f0] sm:$0xff]
    %v446 = vld [vmem:[#allocation8 + $0x1f8] sm:$0xff]
    %v447 = vld [vmem:[#allocation8 + $0x200] sm:$0xff]
    %v448 = vld [vmem:[#allocation8 + $0x208] sm:$0xff]
    %v449 = vld [vmem:[#allocation8 + $0x210] sm:$0xff]
    %v450 = vld [vmem:[#allocation8 + $0x218] sm:$0xff]
    %v451 = vld [vmem:[#allocation8 + $0x220] sm:$0xff]
    %v452 = vld [vmem:[#allocation8 + $0x228] sm:$0xff]
    %v453 = vld [vmem:[#allocation8 + $0x230] sm:$0xff]
    %v454 = vld [vmem:[#allocation8 + $0x238] sm:$0xff]
    %v455 = vld [vmem:[#allocation8 + $0x240] sm:$0xff]
    %v456 = vld [vmem:[#allocation8 + $0x248] sm:$0xff]
    %v457 = vld [vmem:[#allocation8 + $0x250] sm:$0xff]
    %v458 = vld [vmem:[#allocation8 + $0x258] sm:$0xff]
    %v459 = vld [vmem:[#allocation8 + $0x260] sm:$0xff]
    %v460 = vld [vmem:[#allocation8 + $0x268] sm:$0xff]
    %v461 = vld [vmem:[#allocation8 + $0x270] sm:$0xff]
    %v462 = vld [vmem:[#allocation8 + $0x278] sm:$0xff]
    %v463 = vld [vmem:[#allocation8 + $0x280] sm:$0xff]
    %v464 = vld [vmem:[#allocation8 + $0x288] sm:$0xff]
    %v465 = vld [vmem:[#allocation8 + $0x290] sm:$0xff]
    %v466 = vld [vmem:[#allocation8 + $0x298] sm:$0xff]
    %v467 = vld [vmem:[#allocation8 + $0x2a0] sm:$0xff]
    %v468 = vld [vmem:[#allocation8 + $0x2a8] sm:$0xff]
    %v469 = vld [vmem:[#allocation8 + $0x2b0] sm:$0xff]
    %v470 = vld [vmem:[#allocation8 + $0x2b8] sm:$0xff]
    %v471 = vld [vmem:[#allocation8 + $0x2c0] sm:$0xff]
    %v472 = vld [vmem:[#allocation8 + $0x2c8] sm:$0xff]
    %v473 = vld [vmem:[#allocation8 + $0x2d0] sm:$0xff]
    %v474 = vld [vmem:[#allocation8 + $0x2d8] sm:$0xff]
    %v475 = vld [vmem:[#allocation8 + $0x2e0] sm:$0xff]
    %v476 = vld [vmem:[#allocation8 + $0x2e8] sm:$0xff]
    %v477 = vld [vmem:[#allocation8 + $0x2f0] sm:$0xff]
    %v478 = vld [vmem:[#allocation8 + $0x2f8] sm:$0xff]
    %v479 = vld [vmem:[#allocation8 + $0x300] sm:$0xff]
    %v480 = vld [vmem:[#allocation8 + $0x308] sm:$0xff]
    %v481 = vld [vmem:[#allocation8 + $0x310] sm:$0xff]
    %v482 = vld [vmem:[#allocation8 + $0x318] sm:$0xff]
    %v483 = vld [vmem:[#allocation8 + $0x320] sm:$0xff]
    %v484 = vld [vmem:[#allocation8 + $0x328] sm:$0xff]
    %v485 = vld [vmem:[#allocation8 + $0x330] sm:$0xff]
    %v486 = vld [vmem:[#allocation8 + $0x338] sm:$0xff]
    %v487 = vld [vmem:[#allocation8 + $0x340] sm:$0xff]
    %v488 = vld [vmem:[#allocation8 + $0x348] sm:$0xff]
    %v489 = vld [vmem:[#allocation8 + $0x350] sm:$0xff]
    %v490 = vld [vmem:[#allocation8 + $0x358] sm:$0xff]
    %v491 = vld [vmem:[#allocation8 + $0x360] sm:$0xff]
    %v492 = vld [vmem:[#allocation8 + $0x368] sm:$0xff]
    %v493 = vld [vmem:[#allocation8 + $0x370] sm:$0xff]
    %v494 = vld [vmem:[#allocation8 + $0x378] sm:$0xff]
    %v495 = vld [vmem:[#allocation8 + $0x380] sm:$0xff]
    %v496 = vld [vmem:[#allocation8 + $0x388] sm:$0xff]
    %v497 = vld [vmem:[#allocation8 + $0x390] sm:$0xff]
    %v498 = vld [vmem:[#allocation8 + $0x398] sm:$0xff]
    %v499 = vld [vmem:[#allocation8 + $0x3a0] sm:$0xff]
    %v500 = vld [vmem:[#allocation8 + $0x3a8] sm:$0xff]
    %v501 = vld [vmem:[#allocation8 + $0x3b0] sm:$0xff]
    %v502 = vld [vmem:[#allocation8 + $0x3b8] sm:$0xff]
    %v503 = vld [vmem:[#allocation8 + $0x3c0] sm:$0xff]
    %v504 = vld [vmem:[#allocation8 + $0x3c8] sm:$0xff]
    %v505 = vld [vmem:[#allocation8 + $0x3d0] sm:$0xff]
    %v506 = vld [vmem:[#allocation8 + $0x3d8] sm:$0xff]
    %v507 = vld [vmem:[#allocation8 + $0x3e0] sm:$0xff]
    %v508 = vld [vmem:[#allocation8 + $0x3e8] sm:$0xff]
    %v509 = vld [vmem:[#allocation8 + $0x3f0] sm:$0xff]
    %v510 = vld [vmem:[#allocation8 + $0x3f8] sm:$0xff]
    %v511 = vld [vmem:[#allocation8 + $0x400] sm:$0xff]
    %v512 = vld [vmem:[#allocation8 + $0x408] sm:$0xff]
    %v513 = vld [vmem:[#allocation8 + $0x410] sm:$0xff]
    %v514 = vld [vmem:[#allocation8 + $0x418] sm:$0xff]
    %v515 = vld [vmem:[#allocation8 + $0x420] sm:$0xff]
    %v516 = vld [vmem:[#allocation8 + $0x428] sm:$0xff]
    %v517 = vld [vmem:[#allocation8 + $0x430] sm:$0xff]
    %v518 = vld [vmem:[#allocation8 + $0x438] sm:$0xff]
    %v519 = vld [vmem:[#allocation8 + $0x440] sm:$0xff]
    %v520 = vld [vmem:[#allocation8 + $0x448] sm:$0xff]
    %v521 = vld [vmem:[#allocation8 + $0x450] sm:$0xff]
    %v522 = vld [vmem:[#allocation8 + $0x458] sm:$0xff]
    %v523 = vld [vmem:[#allocation8 + $0x460] sm:$0xff]
    %v524 = vld [vmem:[#allocation8 + $0x468] sm:$0xff]
    %v525 = vld [vmem:[#allocation8 + $0x470] sm:$0xff]
    %v526 = vld [vmem:[#allocation8 + $0x478] sm:$0xff]
    %v527 = vld [vmem:[#allocation8 + $0x480] sm:$0xff]
    %v528 = vld [vmem:[#allocation8 + $0x488] sm:$0xff]
    %v529 = vld [vmem:[#allocation8 + $0x490] sm:$0xff]
    %v530 = vld [vmem:[#allocation8 + $0x498] sm:$0xff]
    %v531 = vld [vmem:[#allocation8 + $0x4a0] sm:$0xff]
    %v532 = vld [vmem:[#allocation8 + $0x4a8] sm:$0xff]
    %v533 = vld [vmem:[#allocation8 + $0x4b0] sm:$0xff]
    %v534 = vld [vmem:[#allocation8 + $0x4b8] sm:$0xff]
    %v535 = vld [vmem:[#allocation8 + $0x4c0] sm:$0xff]
    %v536 = vld [vmem:[#allocation8 + $0x4c8] sm:$0xff]
    %v537 = vld [vmem:[#allocation8 + $0x4d0] sm:$0xff]
    %v538 = vld [vmem:[#allocation8 + $0x4d8] sm:$0xff]
    %v539 = vld [vmem:[#allocation8 + $0x4e0] sm:$0xff]
    %v540 = vld [vmem:[#allocation8 + $0x4e8] sm:$0xff]
    %v541 = vld [vmem:[#allocation8 + $0x4f0] sm:$0xff]
    %v542 = vld [vmem:[#allocation8 + $0x4f8] sm:$0xff]
    %v543 = vld [vmem:[#allocation8 + $0x500] sm:$0xff]
    %v544 = vld [vmem:[#allocation8 + $0x508] sm:$0xff]
    %v545 = vld [vmem:[#allocation8 + $0x510] sm:$0xff]
    %v546 = vld [vmem:[#allocation8 + $0x518] sm:$0xff]
    %v547 = vld [vmem:[#allocation8 + $0x520] sm:$0xff]
    %v548 = vld [vmem:[#allocation8 + $0x528] sm:$0xff]
    %v549 = vld [vmem:[#allocation8 + $0x530] sm:$0xff]
    %v550 = vld [vmem:[#allocation8 + $0x538] sm:$0xff]
    %v551 = vld [vmem:[#allocation8 + $0x540] sm:$0xff]
    %v552 = vld [vmem:[#allocation8 + $0x548] sm:$0xff]
    %v553 = vld [vmem:[#allocation8 + $0x550] sm:$0xff]
    %v554 = vld [vmem:[#allocation8 + $0x558] sm:$0xff]
    %v555 = vld [vmem:[#allocation8 + $0x560] sm:$0xff]
    %v556 = vld [vmem:[#allocation8 + $0x568] sm:$0xff]
    %v557 = vld [vmem:[#allocation8 + $0x570] sm:$0xff]
    %v558 = vld [vmem:[#allocation8 + $0x578] sm:$0xff]
    %v559 = vld [vmem:[#allocation8 + $0x580] sm:$0xff]
    %v560 = vld [vmem:[#allocation8 + $0x588] sm:$0xff]
    %v561 = vld [vmem:[#allocation8 + $0x590] sm:$0xff]
    %v562 = vld [vmem:[#allocation8 + $0x598] sm:$0xff]
    %v563 = vld [vmem:[#allocation8 + $0x5a0] sm:$0xff]
    %v564 = vld [vmem:[#allocation8 + $0x5a8] sm:$0xff]
    %v565 = vld [vmem:[#allocation8 + $0x5b0] sm:$0xff]
    %v566 = vld [vmem:[#allocation8 + $0x5b8] sm:$0xff]
    %v567 = vld [vmem:[#allocation8 + $0x5c0] sm:$0xff]
    %v568 = vld [vmem:[#allocation8 + $0x5c8] sm:$0xff]
    %v569 = vld [vmem:[#allocation8 + $0x5d0] sm:$0xff]
    %v570 = vld [vmem:[#allocation8 + $0x5d8] sm:$0xff]
    %v571 = vld [vmem:[#allocation8 + $0x5e0] sm:$0xff]
    %v572 = vld [vmem:[#allocation8 + $0x5e8] sm:$0xff]
    %v573 = vld [vmem:[#allocation8 + $0x5f0] sm:$0xff]
    %v574 = vld [vmem:[#allocation8 + $0x5f8] sm:$0xff]
    %v575 = vld [vmem:[#allocation8 + $0x600] sm:$0xff]
    %v576 = vld [vmem:[#allocation8 + $0x608] sm:$0xff]
    %v577 = vld [vmem:[#allocation8 + $0x610] sm:$0xff]
    %v578 = vld [vmem:[#allocation8 + $0x618] sm:$0xff]
    %v579 = vld [vmem:[#allocation8 + $0x620] sm:$0xff]
    %v580 = vld [vmem:[#allocation8 + $0x628] sm:$0xff]
    %v581 = vld [vmem:[#allocation8 + $0x630] sm:$0xff]
    %v582 = vld [vmem:[#allocation8 + $0x638] sm:$0xff]
    %v583 = vld [vmem:[#allocation8 + $0x640] sm:$0xff]
    %v584 = vld [vmem:[#allocation8 + $0x648] sm:$0xff]
    %v585 = vld [vmem:[#allocation8 + $0x650] sm:$0xff]
    %v586 = vld [vmem:[#allocation8 + $0x658] sm:$0xff]
    %v587 = vld [vmem:[#allocation8 + $0x660] sm:$0xff]
    %v588 = vld [vmem:[#allocation8 + $0x668] sm:$0xff]
    %v589 = vld [vmem:[#allocation8 + $0x670] sm:$0xff]
    %v590 = vld [vmem:[#allocation8 + $0x678] sm:$0xff]
    %v591 = vld [vmem:[#allocation8 + $0x680] sm:$0xff]
    %v592 = vld [vmem:[#allocation8 + $0x688] sm:$0xff]
    %v593 = vld [vmem:[#allocation8 + $0x690] sm:$0xff]
    %v594 = vld [vmem:[#allocation8 + $0x698] sm:$0xff]
    %v595 = vld [vmem:[#allocation8 + $0x6a0] sm:$0xff]
    %v596 = vld [vmem:[#allocation8 + $0x6a8] sm:$0xff]
    %v597 = vld [vmem:[#allocation8 + $0x6b0] sm:$0xff]
    %v598 = vld [vmem:[#allocation8 + $0x6b8] sm:$0xff]
    %v599 = vld [vmem:[#allocation8 + $0x6c0] sm:$0xff]
    %v600 = vld [vmem:[#allocation8 + $0x6c8] sm:$0xff]
    %v601 = vld [vmem:[#allocation8 + $0x6d0] sm:$0xff]
    %v602 = vld [vmem:[#allocation8 + $0x6d8] sm:$0xff]
    %v603 = vld [vmem:[#allocation8 + $0x6e0] sm:$0xff]
    %v604 = vld [vmem:[#allocation8 + $0x6e8] sm:$0xff]
    %v605 = vld [vmem:[#allocation8 + $0x6f0] sm:$0xff]
    %v606 = vld [vmem:[#allocation8 + $0x6f8] sm:$0xff]
    %v607 = vld [vmem:[#allocation8 + $0x700] sm:$0xff]
    %v608 = vld [vmem:[#allocation8 + $0x708] sm:$0xff]
    %v609 = vld [vmem:[#allocation8 + $0x710] sm:$0xff]
    %v610 = vld [vmem:[#allocation8 + $0x718] sm:$0xff]
    %v611 = vld [vmem:[#allocation8 + $0x720] sm:$0xff]
    %v612 = vld [vmem:[#allocation8 + $0x728] sm:$0xff]
    %v613 = vld [vmem:[#allocation8 + $0x730] sm:$0xff]
    %v614 = vld [vmem:[#allocation8 + $0x738] sm:$0xff]
    %v615 = vld [vmem:[#allocation8 + $0x740] sm:$0xff]
    %v616 = vld [vmem:[#allocation8 + $0x748] sm:$0xff]
    %v617 = vld [vmem:[#allocation8 + $0x750] sm:$0xff]
    %v618 = vld [vmem:[#allocation8 + $0x758] sm:$0xff]
    %v619 = vld [vmem:[#allocation8 + $0x760] sm:$0xff]
    %v620 = vld [vmem:[#allocation8 + $0x768] sm:$0xff]
    %v621 = vld [vmem:[#allocation8 + $0x770] sm:$0xff]
    %v622 = vld [vmem:[#allocation8 + $0x778] sm:$0xff]
    %v623 = vld [vmem:[#allocation8 + $0x780] sm:$0xff]
    %v624 = vld [vmem:[#allocation8 + $0x788] sm:$0xff]
    %v625 = vld [vmem:[#allocation8 + $0x790] sm:$0xff]
    %v626 = vld [vmem:[#allocation8 + $0x798] sm:$0xff]
    %v627 = vld [vmem:[#allocation8 + $0x7a0] sm:$0xff]
    %v628 = vld [vmem:[#allocation8 + $0x7a8] sm:$0xff]
    %v629 = vld [vmem:[#allocation8 + $0x7b0] sm:$0xff]
    %v630 = vld [vmem:[#allocation8 + $0x7b8] sm:$0xff]
    %v631 = vld [vmem:[#allocation8 + $0x7c0] sm:$0xff]
    %v632 = vld [vmem:[#allocation8 + $0x7c8] sm:$0xff]
    %v633 = vld [vmem:[#allocation8 + $0x7d0] sm:$0xff]
    %v634 = vld [vmem:[#allocation8 + $0x7d8] sm:$0xff]
    %v635 = vld [vmem:[#allocation8 + $0x7e0] sm:$0xff]
    %v636 = vld [vmem:[#allocation8 + $0x7e8] sm:$0xff]
    %v637 = vld [vmem:[#allocation8 + $0x7f0] sm:$0xff]
    %v638 = vld [vmem:[#allocation8 + $0x7f8] sm:$0xff]
    %v641 = vunpack.c.l.b16 %v381
    %v642 = vunpack.c.h.b16 %v381
    %v643 = vunpack.c.l.b16 %v382
    %v644 = vunpack.c.h.b16 %v382
    %v645 = vpack.c.b16 %v641, %v641
    %v646 = vpack.c.b16 %v642, %v642
    %v647 = vpack.c.b16 %v643, %v643
    %v648 = vpack.c.b16 %v644, %v644
    %v909 = vunpack.c.l.b16 %v383
    %v910 = vunpack.c.h.b16 %v383
    %v911 = vunpack.c.l.b16 %v384
    %v912 = vunpack.c.h.b16 %v384
    %v913 = vunpack.c.l.b16 %v385
    %v914 = vunpack.c.h.b16 %v385
    %v915 = vunpack.c.l.b16 %v386
    %v916 = vunpack.c.h.b16 %v386
    %v917 = vunpack.c.l.b16 %v387
    %v918 = vunpack.c.h.b16 %v387
    %v919 = vunpack.c.l.b16 %v388
    %v920 = vunpack.c.h.b16 %v388
    %v921 = vunpack.c.l.b16 %v389
    %v922 = vunpack.c.h.b16 %v389
    %v923 = vunpack.c.l.b16 %v390
    %v924 = vunpack.c.h.b16 %v390
    %v925 = vunpack.c.l.b16 %v391
    %v926 = vunpack.c.h.b16 %v391
    %v927 = vunpack.c.l.b16 %v392
    %v928 = vunpack.c.h.b16 %v392
    %v929 = vunpack.c.l.b16 %v393
    %v930 = vunpack.c.h.b16 %v393
    %v931 = vunpack.c.l.b16 %v394
    %v932 = vunpack.c.h.b16 %v394
    %v933 = vunpack.c.l.b16 %v395
    %v934 = vunpack.c.h.b16 %v395
    %v935 = vunpack.c.l.b16 %v396
    %v936 = vunpack.c.h.b16 %v396
    %v937 = vunpack.c.l.b16 %v397
    %v938 = vunpack.c.h.b16 %v397
    %v939 = vunpack.c.l.b16 %v398
    %v940 = vunpack.c.h.b16 %v398
    %v941 = vunpack.c.l.b16 %v399
    %v942 = vunpack.c.h.b16 %v399
    %v943 = vunpack.c.l.b16 %v400
    %v944 = vunpack.c.h.b16 %v400
    %v945 = vunpack.c.l.b16 %v401
    %v946 = vunpack.c.h.b16 %v401
    %v947 = vunpack.c.l.b16 %v402
    %v948 = vunpack.c.h.b16 %v402
    %v949 = vunpack.c.l.b16 %v403
    %v950 = vunpack.c.h.b16 %v403
    %v951 = vunpack.c.l.b16 %v404
    %v952 = vunpack.c.h.b16 %v404
    %v953 = vunpack.c.l.b16 %v405
    %v954 = vunpack.c.h.b16 %v405
    %v955 = vunpack.c.l.b16 %v406
    %v956 = vunpack.c.h.b16 %v406
    %v957 = vunpack.c.l.b16 %v407
    %v958 = vunpack.c.h.b16 %v407
    %v959 = vunpack.c.l.b16 %v408
    %v960 = vunpack.c.h.b16 %v408
    %v961 = vunpack.c.l.b16 %v409
    %v962 = vunpack.c.h.b16 %v409
    %v963 = vunpack.c.l.b16 %v410
    %v964 = vunpack.c.h.b16 %v410
    %v965 = vunpack.c.l.b16 %v411
    %v966 = vunpack.c.h.b16 %v411
    %v967 = vunpack.c.l.b16 %v412
    %v968 = vunpack.c.h.b16 %v412
    %v969 = vunpack.c.l.b16 %v413
    %v970 = vunpack.c.h.b16 %v413
    %v971 = vunpack.c.l.b16 %v414
    %v972 = vunpack.c.h.b16 %v414
    %v973 = vunpack.c.l.b16 %v415
    %v974 = vunpack.c.h.b16 %v415
    %v975 = vunpack.c.l.b16 %v416
    %v976 = vunpack.c.h.b16 %v416
    %v977 = vunpack.c.l.b16 %v417
    %v978 = vunpack.c.h.b16 %v417
    %v979 = vunpack.c.l.b16 %v418
    %v980 = vunpack.c.h.b16 %v418
    %v981 = vunpack.c.l.b16 %v419
    %v982 = vunpack.c.h.b16 %v419
    %v983 = vunpack.c.l.b16 %v420
    %v984 = vunpack.c.h.b16 %v420
    %v985 = vunpack.c.l.b16 %v421
    %v986 = vunpack.c.h.b16 %v421
    %v987 = vunpack.c.l.b16 %v422
    %v988 = vunpack.c.h.b16 %v422
    %v989 = vunpack.c.l.b16 %v423
    %v990 = vunpack.c.h.b16 %v423
    %v991 = vunpack.c.l.b16 %v424
    %v992 = vunpack.c.h.b16 %v424
    %v993 = vunpack.c.l.b16 %v425
    %v994 = vunpack.c.h.b16 %v425
    %v995 = vunpack.c.l.b16 %v426
    %v996 = vunpack.c.h.b16 %v426
    %v997 = vunpack.c.l.b16 %v427
    %v998 = vunpack.c.h.b16 %v427
    %v999 = vunpack.c.l.b16 %v428
    %v1000 = vunpack.c.h.b16 %v428
    %v1001 = vunpack.c.l.b16 %v429
    %v1002 = vunpack.c.h.b16 %v429
    %v1003 = vunpack.c.l.b16 %v430
    %v1004 = vunpack.c.h.b16 %v430
    %v1005 = vunpack.c.l.b16 %v431
    %v1006 = vunpack.c.h.b16 %v431
    %v1007 = vunpack.c.l.b16 %v432
    %v1008 = vunpack.c.h.b16 %v432
    %v1009 = vunpack.c.l.b16 %v433
    %v1010 = vunpack.c.h.b16 %v433
    %v1011 = vunpack.c.l.b16 %v434
    %v1012 = vunpack.c.h.b16 %v434
    %v1013 = vunpack.c.l.b16 %v435
    %v1014 = vunpack.c.h.b16 %v435
    %v1015 = vunpack.c.l.b16 %v436
    %v1016 = vunpack.c.h.b16 %v436
    %v1017 = vunpack.c.l.b16 %v437
    %v1018 = vunpack.c.h.b16 %v437
    %v1019 = vunpack.c.l.b16 %v438
    %v1020 = vunpack.c.h.b16 %v438
    %v1021 = vunpack.c.l.b16 %v439
    %v1022 = vunpack.c.h.b16 %v439
    %v1023 = vunpack.c.l.b16 %v440
    %v1024 = vunpack.c.h.b16 %v440
    %v1025 = vunpack.c.l.b16 %v441
    %v1026 = vunpack.c.h.b16 %v441
    %v1027 = vunpack.c.l.b16 %v442
    %v1028 = vunpack.c.h.b16 %v442
    %v1029 = vunpack.c.l.b16 %v443
    %v1030 = vunpack.c.h.b16 %v443
    %v1031 = vunpack.c.l.b16 %v444
    %v1032 = vunpack.c.h.b16 %v444
    %v1033 = vunpack.c.l.b16 %v445
    %v1034 = vunpack.c.h.b16 %v445
    %v1035 = vunpack.c.l.b16 %v446
    %v1036 = vunpack.c.h.b16 %v446
    %v1037 = vunpack.c.l.b16 %v447
    %v1038 = vunpack.c.h.b16 %v447
    %v1039 = vunpack.c.l.b16 %v448
    %v1040 = vunpack.c.h.b16 %v448
    %v1041 = vunpack.c.l.b16 %v449
    %v1042 = vunpack.c.h.b16 %v449
    %v1043 = vunpack.c.l.b16 %v450
    %v1044 = vunpack.c.h.b16 %v450
    %v1045 = vunpack.c.l.b16 %v451
    %v1046 = vunpack.c.h.b16 %v451
    %v1047 = vunpack.c.l.b16 %v452
    %v1048 = vunpack.c.h.b16 %v452
    %v1049 = vunpack.c.l.b16 %v453
    %v1050 = vunpack.c.h.b16 %v453
    %v1051 = vunpack.c.l.b16 %v454
    %v1052 = vunpack.c.h.b16 %v454
    %v1053 = vunpack.c.l.b16 %v455
    %v1054 = vunpack.c.h.b16 %v455
    %v1055 = vunpack.c.l.b16 %v456
    %v1056 = vunpack.c.h.b16 %v456
    %v1057 = vunpack.c.l.b16 %v457
    %v1058 = vunpack.c.h.b16 %v457
    %v1059 = vunpack.c.l.b16 %v458
    %v1060 = vunpack.c.h.b16 %v458
    %v1061 = vunpack.c.l.b16 %v459
    %v1062 = vunpack.c.h.b16 %v459
    %v1063 = vunpack.c.l.b16 %v460
    %v1064 = vunpack.c.h.b16 %v460
    %v1065 = vunpack.c.l.b16 %v461
    %v1066 = vunpack.c.h.b16 %v461
    %v1067 = vunpack.c.l.b16 %v462
    %v1068 = vunpack.c.h.b16 %v462
    %v1069 = vunpack.c.l.b16 %v463
    %v1070 = vunpack.c.h.b16 %v463
    %v1071 = vunpack.c.l.b16 %v464
    %v1072 = vunpack.c.h.b16 %v464
    %v1073 = vunpack.c.l.b16 %v465
    %v1074 = vunpack.c.h.b16 %v465
    %v1075 = vunpack.c.l.b16 %v466
    %v1076 = vunpack.c.h.b16 %v466
    %v1077 = vunpack.c.l.b16 %v467
    %v1078 = vunpack.c.h.b16 %v467
    %v1079 = vunpack.c.l.b16 %v468
    %v1080 = vunpack.c.h.b16 %v468
    %v1081 = vunpack.c.l.b16 %v469
    %v1082 = vunpack.c.h.b16 %v469
    %v1083 = vunpack.c.l.b16 %v470
    %v1084 = vunpack.c.h.b16 %v470
    %v1085 = vunpack.c.l.b16 %v471
    %v1086 = vunpack.c.h.b16 %v471
    %v1087 = vunpack.c.l.b16 %v472
    %v1088 = vunpack.c.h.b16 %v472
    %v1089 = vunpack.c.l.b16 %v473
    %v1090 = vunpack.c.h.b16 %v473
    %v1091 = vunpack.c.l.b16 %v474
    %v1092 = vunpack.c.h.b16 %v474
    %v1093 = vunpack.c.l.b16 %v475
    %v1094 = vunpack.c.h.b16 %v475
    %v1095 = vunpack.c.l.b16 %v476
    %v1096 = vunpack.c.h.b16 %v476
    %v1097 = vunpack.c.l.b16 %v477
    %v1098 = vunpack.c.h.b16 %v477
    %v1099 = vunpack.c.l.b16 %v478
    %v1100 = vunpack.c.h.b16 %v478
    %v1101 = vunpack.c.l.b16 %v479
    %v1102 = vunpack.c.h.b16 %v479
    %v1103 = vunpack.c.l.b16 %v480
    %v1104 = vunpack.c.h.b16 %v480
    %v1105 = vunpack.c.l.b16 %v481
    %v1106 = vunpack.c.h.b16 %v481
    %v1107 = vunpack.c.l.b16 %v482
    %v1108 = vunpack.c.h.b16 %v482
    %v1109 = vunpack.c.l.b16 %v483
    %v1110 = vunpack.c.h.b16 %v483
    %v1111 = vunpack.c.l.b16 %v484
    %v1112 = vunpack.c.h.b16 %v484
    %v1113 = vunpack.c.l.b16 %v485
    %v1114 = vunpack.c.h.b16 %v485
    %v1115 = vunpack.c.l.b16 %v486
    %v1116 = vunpack.c.h.b16 %v486
    %v1117 = vunpack.c.l.b16 %v487
    %v1118 = vunpack.c.h.b16 %v487
    %v1119 = vunpack.c.l.b16 %v488
    %v1120 = vunpack.c.h.b16 %v488
    %v1121 = vunpack.c.l.b16 %v489
    %v1122 = vunpack.c.h.b16 %v489
    %v1123 = vunpack.c.l.b16 %v490
    %v1124 = vunpack.c.h.b16 %v490
    %v1125 = vunpack.c.l.b16 %v491
    %v1126 = vunpack.c.h.b16 %v491
    %v1127 = vunpack.c.l.b16 %v492
    %v1128 = vunpack.c.h.b16 %v492
    %v1129 = vunpack.c.l.b16 %v493
    %v1130 = vunpack.c.h.b16 %v493
    %v1131 = vunpack.c.l.b16 %v494
    %v1132 = vunpack.c.h.b16 %v494
    %v1133 = vunpack.c.l.b16 %v495
    %v1134 = vunpack.c.h.b16 %v495
    %v1135 = vunpack.c.l.b16 %v496
    %v1136 = vunpack.c.h.b16 %v496
    %v1137 = vunpack.c.l.b16 %v497
    %v1138 = vunpack.c.h.b16 %v497
    %v1139 = vunpack.c.l.b16 %v498
    %v1140 = vunpack.c.h.b16 %v498
    %v1141 = vunpack.c.l.b16 %v499
    %v1142 = vunpack.c.h.b16 %v499
    %v1143 = vunpack.c.l.b16 %v500
    %v1144 = vunpack.c.h.b16 %v500
    %v1145 = vunpack.c.l.b16 %v501
    %v1146 = vunpack.c.h.b16 %v501
    %v1147 = vunpack.c.l.b16 %v502
    %v1148 = vunpack.c.h.b16 %v502
    %v1149 = vunpack.c.l.b16 %v503
    %v1150 = vunpack.c.h.b16 %v503
    %v1151 = vunpack.c.l.b16 %v504
    %v1152 = vunpack.c.h.b16 %v504
    %v1153 = vunpack.c.l.b16 %v505
    %v1154 = vunpack.c.h.b16 %v505
    %v1155 = vunpack.c.l.b16 %v506
    %v1156 = vunpack.c.h.b16 %v506
    %v1157 = vunpack.c.l.b16 %v507
    %v1158 = vunpack.c.h.b16 %v507
    %v1159 = vunpack.c.l.b16 %v508
    %v1160 = vunpack.c.h.b16 %v508
    %v1161 = vunpack.c.l.b16 %v509
    %v1162 = vunpack.c.h.b16 %v509
    %v1163 = vunpack.c.l.b16 %v510
    %v1164 = vunpack.c.h.b16 %v510
    %v1165 = vunpack.c.l.b16 %v511
    %v1166 = vunpack.c.h.b16 %v511
    %v1167 = vunpack.c.l.b16 %v512
    %v1168 = vunpack.c.h.b16 %v512
    %v1169 = vunpack.c.l.b16 %v513
    %v1170 = vunpack.c.h.b16 %v513
    %v1171 = vunpack.c.l.b16 %v514
    %v1172 = vunpack.c.h.b16 %v514
    %v1173 = vunpack.c.l.b16 %v515
    %v1174 = vunpack.c.h.b16 %v515
    %v1175 = vunpack.c.l.b16 %v516
    %v1176 = vunpack.c.h.b16 %v516
    %v1177 = vunpack.c.l.b16 %v517
    %v1178 = vunpack.c.h.b16 %v517
    %v1179 = vunpack.c.l.b16 %v518
    %v1180 = vunpack.c.h.b16 %v518
    %v1181 = vunpack.c.l.b16 %v519
    %v1182 = vunpack.c.h.b16 %v519
    %v1183 = vunpack.c.l.b16 %v520
    %v1184 = vunpack.c.h.b16 %v520
    %v1185 = vunpack.c.l.b16 %v521
    %v1186 = vunpack.c.h.b16 %v521
    %v1187 = vunpack.c.l.b16 %v522
    %v1188 = vunpack.c.h.b16 %v522
    %v1189 = vunpack.c.l.b16 %v523
    %v1190 = vunpack.c.h.b16 %v523
    %v1191 = vunpack.c.l.b16 %v524
    %v1192 = vunpack.c.h.b16 %v524
    %v1193 = vunpack.c.l.b16 %v525
    %v1194 = vunpack.c.h.b16 %v525
    %v1195 = vunpack.c.l.b16 %v526
    %v1196 = vunpack.c.h.b16 %v526
    %v1197 = vunpack.c.l.b16 %v527
    %v1198 = vunpack.c.h.b16 %v527
    %v1199 = vunpack.c.l.b16 %v528
    %v1200 = vunpack.c.h.b16 %v528
    %v1201 = vunpack.c.l.b16 %v529
    %v1202 = vunpack.c.h.b16 %v529
    %v1203 = vunpack.c.l.b16 %v530
    %v1204 = vunpack.c.h.b16 %v530
    %v1205 = vunpack.c.l.b16 %v531
    %v1206 = vunpack.c.h.b16 %v531
    %v1207 = vunpack.c.l.b16 %v532
    %v1208 = vunpack.c.h.b16 %v532
    %v1209 = vunpack.c.l.b16 %v533
    %v1210 = vunpack.c.h.b16 %v533
    %v1211 = vunpack.c.l.b16 %v534
    %v1212 = vunpack.c.h.b16 %v534
    %v1213 = vunpack.c.l.b16 %v535
    %v1214 = vunpack.c.h.b16 %v535
    %v1215 = vunpack.c.l.b16 %v536
    %v1216 = vunpack.c.h.b16 %v536
    %v1217 = vunpack.c.l.b16 %v537
    %v1218 = vunpack.c.h.b16 %v537
    %v1219 = vunpack.c.l.b16 %v538
    %v1220 = vunpack.c.h.b16 %v538
    %v1221 = vunpack.c.l.b16 %v539
    %v1222 = vunpack.c.h.b16 %v539
    %v1223 = vunpack.c.l.b16 %v540
    %v1224 = vunpack.c.h.b16 %v540
    %v1225 = vunpack.c.l.b16 %v541
    %v1226 = vunpack.c.h.b16 %v541
    %v1227 = vunpack.c.l.b16 %v542
    %v1228 = vunpack.c.h.b16 %v542
    %v1229 = vunpack.c.l.b16 %v543
    %v1230 = vunpack.c.h.b16 %v543
    %v1231 = vunpack.c.l.b16 %v544
    %v1232 = vunpack.c.h.b16 %v544
    %v1233 = vunpack.c.l.b16 %v545
    %v1234 = vunpack.c.h.b16 %v545
    %v1235 = vunpack.c.l.b16 %v546
    %v1236 = vunpack.c.h.b16 %v546
    %v1237 = vunpack.c.l.b16 %v547
    %v1238 = vunpack.c.h.b16 %v547
    %v1239 = vunpack.c.l.b16 %v548
    %v1240 = vunpack.c.h.b16 %v548
    %v1241 = vunpack.c.l.b16 %v549
    %v1242 = vunpack.c.h.b16 %v549
    %v1243 = vunpack.c.l.b16 %v550
    %v1244 = vunpack.c.h.b16 %v550
    %v1245 = vunpack.c.l.b16 %v551
    %v1246 = vunpack.c.h.b16 %v551
    %v1247 = vunpack.c.l.b16 %v552
    %v1248 = vunpack.c.h.b16 %v552
    %v1249 = vunpack.c.l.b16 %v553
    %v1250 = vunpack.c.h.b16 %v553
    %v1251 = vunpack.c.l.b16 %v554
    %v1252 = vunpack.c.h.b16 %v554
    %v1253 = vunpack.c.l.b16 %v555
    %v1254 = vunpack.c.h.b16 %v555
    %v1255 = vunpack.c.l.b16 %v556
    %v1256 = vunpack.c.h.b16 %v556
    %v1257 = vunpack.c.l.b16 %v557
    %v1258 = vunpack.c.h.b16 %v557
    %v1259 = vunpack.c.l.b16 %v558
    %v1260 = vunpack.c.h.b16 %v558
    %v1261 = vunpack.c.l.b16 %v559
    %v1262 = vunpack.c.h.b16 %v559
    %v1263 = vunpack.c.l.b16 %v560
    %v1264 = vunpack.c.h.b16 %v560
    %v1265 = vunpack.c.l.b16 %v561
    %v1266 = vunpack.c.h.b16 %v561
    %v1267 = vunpack.c.l.b16 %v562
    %v1268 = vunpack.c.h.b16 %v562
    %v1269 = vunpack.c.l.b16 %v563
    %v1270 = vunpack.c.h.b16 %v563
    %v1271 = vunpack.c.l.b16 %v564
    %v1272 = vunpack.c.h.b16 %v564
    %v1273 = vunpack.c.l.b16 %v565
    %v1274 = vunpack.c.h.b16 %v565
    %v1275 = vunpack.c.l.b16 %v566
    %v1276 = vunpack.c.h.b16 %v566
    %v1277 = vunpack.c.l.b16 %v567
    %v1278 = vunpack.c.h.b16 %v567
    %v1279 = vunpack.c.l.b16 %v568
    %v1280 = vunpack.c.h.b16 %v568
    %v1281 = vunpack.c.l.b16 %v569
    %v1282 = vunpack.c.h.b16 %v569
    %v1283 = vunpack.c.l.b16 %v570
    %v1284 = vunpack.c.h.b16 %v570
    %v1285 = vunpack.c.l.b16 %v571
    %v1286 = vunpack.c.h.b16 %v571
    %v1287 = vunpack.c.l.b16 %v572
    %v1288 = vunpack.c.h.b16 %v572
    %v1289 = vunpack.c.l.b16 %v573
    %v1290 = vunpack.c.h.b16 %v573
    %v1291 = vunpack.c.l.b16 %v574
    %v1292 = vunpack.c.h.b16 %v574
    %v1293 = vunpack.c.l.b16 %v575
    %v1294 = vunpack.c.h.b16 %v575
    %v1295 = vunpack.c.l.b16 %v576
    %v1296 = vunpack.c.h.b16 %v576
    %v1297 = vunpack.c.l.b16 %v577
    %v1298 = vunpack.c.h.b16 %v577
    %v1299 = vunpack.c.l.b16 %v578
    %v1300 = vunpack.c.h.b16 %v578
    %v1301 = vunpack.c.l.b16 %v579
    %v1302 = vunpack.c.h.b16 %v579
    %v1303 = vunpack.c.l.b16 %v580
    %v1304 = vunpack.c.h.b16 %v580
    %v1305 = vunpack.c.l.b16 %v581
    %v1306 = vunpack.c.h.b16 %v581
    %v1307 = vunpack.c.l.b16 %v582
    %v1308 = vunpack.c.h.b16 %v582
    %v1309 = vunpack.c.l.b16 %v583
    %v1310 = vunpack.c.h.b16 %v583
    %v1311 = vunpack.c.l.b16 %v584
    %v1312 = vunpack.c.h.b16 %v584
    %v1313 = vunpack.c.l.b16 %v585
    %v1314 = vunpack.c.h.b16 %v585
    %v1315 = vunpack.c.l.b16 %v586
    %v1316 = vunpack.c.h.b16 %v586
    %v1317 = vunpack.c.l.b16 %v587
    %v1318 = vunpack.c.h.b16 %v587
    %v1319 = vunpack.c.l.b16 %v588
    %v1320 = vunpack.c.h.b16 %v588
    %v1321 = vunpack.c.l.b16 %v589
    %v1322 = vunpack.c.h.b16 %v589
    %v1323 = vunpack.c.l.b16 %v590
    %v1324 = vunpack.c.h.b16 %v590
    %v1325 = vunpack.c.l.b16 %v591
    %v1326 = vunpack.c.h.b16 %v591
    %v1327 = vunpack.c.l.b16 %v592
    %v1328 = vunpack.c.h.b16 %v592
    %v1329 = vunpack.c.l.b16 %v593
    %v1330 = vunpack.c.h.b16 %v593
    %v1331 = vunpack.c.l.b16 %v594
    %v1332 = vunpack.c.h.b16 %v594
    %v1333 = vunpack.c.l.b16 %v595
    %v1334 = vunpack.c.h.b16 %v595
    %v1335 = vunpack.c.l.b16 %v596
    %v1336 = vunpack.c.h.b16 %v596
    %v1337 = vunpack.c.l.b16 %v597
    %v1338 = vunpack.c.h.b16 %v597
    %v1339 = vunpack.c.l.b16 %v598
    %v1340 = vunpack.c.h.b16 %v598
    %v1341 = vunpack.c.l.b16 %v599
    %v1342 = vunpack.c.h.b16 %v599
    %v1343 = vunpack.c.l.b16 %v600
    %v1344 = vunpack.c.h.b16 %v600
    %v1345 = vunpack.c.l.b16 %v601
    %v1346 = vunpack.c.h.b16 %v601
    %v1347 = vunpack.c.l.b16 %v602
    %v1348 = vunpack.c.h.b16 %v602
    %v1349 = vunpack.c.l.b16 %v603
    %v1350 = vunpack.c.h.b16 %v603
    %v1351 = vunpack.c.l.b16 %v604
    %v1352 = vunpack.c.h.b16 %v604
    %v1353 = vunpack.c.l.b16 %v605
    %v1354 = vunpack.c.h.b16 %v605
    %v1355 = vunpack.c.l.b16 %v606
    %v1356 = vunpack.c.h.b16 %v606
    %v1357 = vunpack.c.l.b16 %v607
    %v1358 = vunpack.c.h.b16 %v607
    %v1359 = vunpack.c.l.b16 %v608
    %v1360 = vunpack.c.h.b16 %v608
    %v1361 = vunpack.c.l.b16 %v609
    %v1362 = vunpack.c.h.b16 %v609
    %v1363 = vunpack.c.l.b16 %v610
    %v1364 = vunpack.c.h.b16 %v610
    %v1365 = vunpack.c.l.b16 %v611
    %v1366 = vunpack.c.h.b16 %v611
    %v1367 = vunpack.c.l.b16 %v612
    %v1368 = vunpack.c.h.b16 %v612
    %v1369 = vunpack.c.l.b16 %v613
    %v1370 = vunpack.c.h.b16 %v613
    %v1371 = vunpack.c.l.b16 %v614
    %v1372 = vunpack.c.h.b16 %v614
    %v1373 = vunpack.c.l.b16 %v615
    %v1374 = vunpack.c.h.b16 %v615
    %v1375 = vunpack.c.l.b16 %v616
    %v1376 = vunpack.c.h.b16 %v616
    %v1377 = vunpack.c.l.b16 %v617
    %v1378 = vunpack.c.h.b16 %v617
    %v1379 = vunpack.c.l.b16 %v618
    %v1380 = vunpack.c.h.b16 %v618
    %v1381 = vunpack.c.l.b16 %v619
    %v1382 = vunpack.c.h.b16 %v619
    %v1383 = vunpack.c.l.b16 %v620
    %v1384 = vunpack.c.h.b16 %v620
    %v1385 = vunpack.c.l.b16 %v621
    %v1386 = vunpack.c.h.b16 %v621
    %v1387 = vunpack.c.l.b16 %v622
    %v1388 = vunpack.c.h.b16 %v622
    %v1389 = vunpack.c.l.b16 %v623
    %v1390 = vunpack.c.h.b16 %v623
    %v1391 = vunpack.c.l.b16 %v624
    %v1392 = vunpack.c.h.b16 %v624
    %v1393 = vunpack.c.l.b16 %v625
    %v1394 = vunpack.c.h.b16 %v625
    %v1395 = vunpack.c.l.b16 %v626
    %v1396 = vunpack.c.h.b16 %v626
    %v1397 = vunpack.c.l.b16 %v627
    %v1398 = vunpack.c.h.b16 %v627
    %v1399 = vunpack.c.l.b16 %v628
    %v1400 = vunpack.c.h.b16 %v628
    %v1401 = vunpack.c.l.b16 %v629
    %v1402 = vunpack.c.h.b16 %v629
    %v1403 = vunpack.c.l.b16 %v630
    %v1404 = vunpack.c.h.b16 %v630
    %v1405 = vunpack.c.l.b16 %v631
    %v1406 = vunpack.c.h.b16 %v631
    %v1407 = vunpack.c.l.b16 %v632
    %v1408 = vunpack.c.h.b16 %v632
    %v1409 = vunpack.c.l.b16 %v633
    %v1410 = vunpack.c.h.b16 %v633
    %v1411 = vunpack.c.l.b16 %v634
    %v1412 = vunpack.c.h.b16 %v634
    %v1413 = vunpack.c.l.b16 %v635
    %v1414 = vunpack.c.h.b16 %v635
    %v1415 = vunpack.c.l.b16 %v636
    %v1416 = vunpack.c.h.b16 %v636
    %v1417 = vunpack.c.l.b16 %v637
    %v1418 = vunpack.c.h.b16 %v637
    %v1419 = vunpack.c.l.b16 %v638
    %v1420 = vunpack.c.h.b16 %v638
    %v1421 = vpack.c.b16 %v917, %v909
    %v1422 = vpack.c.b16 %v918, %v910
    %v1423 = vpack.c.b16 %v919, %v911
    %v1424 = vpack.c.b16 %v920, %v912
    %v1425 = vpack.c.b16 %v921, %v913
    %v1426 = vpack.c.b16 %v922, %v914
    %v1427 = vpack.c.b16 %v923, %v915
    %v1428 = vpack.c.b16 %v924, %v916
    %v1429 = vpack.c.b16 %v933, %v925
    %v1430 = vpack.c.b16 %v934, %v926
    %v1431 = vpack.c.b16 %v935, %v927
    %v1432 = vpack.c.b16 %v936, %v928
    %v1433 = vpack.c.b16 %v937, %v929
    %v1434 = vpack.c.b16 %v938, %v930
    %v1435 = vpack.c.b16 %v939, %v931
    %v1436 = vpack.c.b16 %v940, %v932
    %v1437 = vpack.c.b16 %v949, %v941
    %v1438 = vpack.c.b16 %v950, %v942
    %v1439 = vpack.c.b16 %v951, %v943
    %v1440 = vpack.c.b16 %v952, %v944
    %v1441 = vpack.c.b16 %v953, %v945
    %v1442 = vpack.c.b16 %v954, %v946
    %v1443 = vpack.c.b16 %v955, %v947
    %v1444 = vpack.c.b16 %v956, %v948
    %v1445 = vpack.c.b16 %v965, %v957
    %v1446 = vpack.c.b16 %v966, %v958
    %v1447 = vpack.c.b16 %v967, %v959
    %v1448 = vpack.c.b16 %v968, %v960
    %v1449 = vpack.c.b16 %v969, %v961
    %v1450 = vpack.c.b16 %v970, %v962
    %v1451 = vpack.c.b16 %v971, %v963
    %v1452 = vpack.c.b16 %v972, %v964
    %v1453 = vpack.c.b16 %v981, %v973
    %v1454 = vpack.c.b16 %v982, %v974
    %v1455 = vpack.c.b16 %v983, %v975
    %v1456 = vpack.c.b16 %v984, %v976
    %v1457 = vpack.c.b16 %v985, %v977
    %v1458 = vpack.c.b16 %v986, %v978
    %v1459 = vpack.c.b16 %v987, %v979
    %v1460 = vpack.c.b16 %v988, %v980
    %v1461 = vpack.c.b16 %v997, %v989
    %v1462 = vpack.c.b16 %v998, %v990
    %v1463 = vpack.c.b16 %v999, %v991
    %v1464 = vpack.c.b16 %v1000, %v992
    %v1465 = vpack.c.b16 %v1001, %v993
    %v1466 = vpack.c.b16 %v1002, %v994
    %v1467 = vpack.c.b16 %v1003, %v995
    %v1468 = vpack.c.b16 %v1004, %v996
    %v1469 = vpack.c.b16 %v1013, %v1005
    %v1470 = vpack.c.b16 %v1014, %v1006
    %v1471 = vpack.c.b16 %v1015, %v1007
    %v1472 = vpack.c.b16 %v1016, %v1008
    %v1473 = vpack.c.b16 %v1017, %v1009
    %v1474 = vpack.c.b16 %v1018, %v1010
    %v1475 = vpack.c.b16 %v1019, %v1011
    %v1476 = vpack.c.b16 %v1020, %v1012
    %v1477 = vpack.c.b16 %v1029, %v1021
    %v1478 = vpack.c.b16 %v1030, %v1022
    %v1479 = vpack.c.b16 %v1031, %v1023
    %v1480 = vpack.c.b16 %v1032, %v1024
    %v1481 = vpack.c.b16 %v1033, %v1025
    %v1482 = vpack.c.b16 %v1034, %v1026
    %v1483 = vpack.c.b16 %v1035, %v1027
    %v1484 = vpack.c.b16 %v1036, %v1028
    %v1485 = vpack.c.b16 %v1045, %v1037
    %v1486 = vpack.c.b16 %v1046, %v1038
    %v1487 = vpack.c.b16 %v1047, %v1039
    %v1488 = vpack.c.b16 %v1048, %v1040
    %v1489 = vpack.c.b16 %v1049, %v1041
    %v1490 = vpack.c.b16 %v1050, %v1042
    %v1491 = vpack.c.b16 %v1051, %v1043
    %v1492 = vpack.c.b16 %v1052, %v1044
    %v1493 = vpack.c.b16 %v1061, %v1053
    %v1494 = vpack.c.b16 %v1062, %v1054
    %v1495 = vpack.c.b16 %v1063, %v1055
    %v1496 = vpack.c.b16 %v1064, %v1056
    %v1497 = vpack.c.b16 %v1065, %v1057
    %v1498 = vpack.c.b16 %v1066, %v1058
    %v1499 = vpack.c.b16 %v1067, %v1059
    %v1500 = vpack.c.b16 %v1068, %v1060
    %v1501 = vpack.c.b16 %v1077, %v1069
    %v1502 = vpack.c.b16 %v1078, %v1070
    %v1503 = vpack.c.b16 %v1079, %v1071
    %v1504 = vpack.c.b16 %v1080, %v1072
    %v1505 = vpack.c.b16 %v1081, %v1073
    %v1506 = vpack.c.b16 %v1082, %v1074
    %v1507 = vpack.c.b16 %v1083, %v1075
    %v1508 = vpack.c.b16 %v1084, %v1076
    %v1509 = vpack.c.b16 %v1093, %v1085
    %v1510 = vpack.c.b16 %v1094, %v1086
    %v1511 = vpack.c.b16 %v1095, %v1087
    %v1512 = vpack.c.b16 %v1096, %v1088
    %v1513 = vpack.c.b16 %v1097, %v1089
    %v1514 = vpack.c.b16 %v1098, %v1090
    %v1515 = vpack.c.b16 %v1099, %v1091
    %v1516 = vpack.c.b16 %v1100, %v1092
    %v1517 = vpack.c.b16 %v1109, %v1101
    %v1518 = vpack.c.b16 %v1110, %v1102
    %v1519 = vpack.c.b16 %v1111, %v1103
    %v1520 = vpack.c.b16 %v1112, %v1104
    %v1521 = vpack.c.b16 %v1113, %v1105
    %v1522 = vpack.c.b16 %v1114, %v1106
    %v1523 = vpack.c.b16 %v1115, %v1107
    %v1524 = vpack.c.b16 %v1116, %v1108
    %v1525 = vpack.c.b16 %v1125, %v1117
    %v1526 = vpack.c.b16 %v1126, %v1118
    %v1527 = vpack.c.b16 %v1127, %v1119
    %v1528 = vpack.c.b16 %v1128, %v1120
    %v1529 = vpack.c.b16 %v1129, %v1121
    %v1530 = vpack.c.b16 %v1130, %v1122
    %v1531 = vpack.c.b16 %v1131, %v1123
    %v1532 = vpack.c.b16 %v1132, %v1124
    %v1533 = vpack.c.b16 %v1141, %v1133
    %v1534 = vpack.c.b16 %v1142, %v1134
    %v1535 = vpack.c.b16 %v1143, %v1135
    %v1536 = vpack.c.b16 %v1144, %v1136
    %v1537 = vpack.c.b16 %v1145, %v1137
    %v1538 = vpack.c.b16 %v1146, %v1138
    %v1539 = vpack.c.b16 %v1147, %v1139
    %v1540 = vpack.c.b16 %v1148, %v1140
    %v1541 = vpack.c.b16 %v1157, %v1149
    %v1542 = vpack.c.b16 %v1158, %v1150
    %v1543 = vpack.c.b16 %v1159, %v1151
    %v1544 = vpack.c.b16 %v1160, %v1152
    %v1545 = vpack.c.b16 %v1161, %v1153
    %v1546 = vpack.c.b16 %v1162, %v1154
    %v1547 = vpack.c.b16 %v1163, %v1155
    %v1548 = vpack.c.b16 %v1164, %v1156
    %v1549 = vpack.c.b16 %v1173, %v1165
    %v1550 = vpack.c.b16 %v1174, %v1166
    %v1551 = vpack.c.b16 %v1175, %v1167
    %v1552 = vpack.c.b16 %v1176, %v1168
    %v1553 = vpack.c.b16 %v1177, %v1169
    %v1554 = vpack.c.b16 %v1178, %v1170
    %v1555 = vpack.c.b16 %v1179, %v1171
    %v1556 = vpack.c.b16 %v1180, %v1172
    %v1557 = vpack.c.b16 %v1189, %v1181
    %v1558 = vpack.c.b16 %v1190, %v1182
    %v1559 = vpack.c.b16 %v1191, %v1183
    %v1560 = vpack.c.b16 %v1192, %v1184
    %v1561 = vpack.c.b16 %v1193, %v1185
    %v1562 = vpack.c.b16 %v1194, %v1186
    %v1563 = vpack.c.b16 %v1195, %v1187
    %v1564 = vpack.c.b16 %v1196, %v1188
    %v1565 = vpack.c.b16 %v1205, %v1197
    %v1566 = vpack.c.b16 %v1206, %v1198
    %v1567 = vpack.c.b16 %v1207, %v1199
    %v1568 = vpack.c.b16 %v1208, %v1200
    %v1569 = vpack.c.b16 %v1209, %v1201
    %v1570 = vpack.c.b16 %v1210, %v1202
    %v1571 = vpack.c.b16 %v1211, %v1203
    %v1572 = vpack.c.b16 %v1212, %v1204
    %v1573 = vpack.c.b16 %v1221, %v1213
    %v1574 = vpack.c.b16 %v1222, %v1214
    %v1575 = vpack.c.b16 %v1223, %v1215
    %v1576 = vpack.c.b16 %v1224, %v1216
    %v1577 = vpack.c.b16 %v1225, %v1217
    %v1578 = vpack.c.b16 %v1226, %v1218
    %v1579 = vpack.c.b16 %v1227, %v1219
    %v1580 = vpack.c.b16 %v1228, %v1220
    %v1581 = vpack.c.b16 %v1237, %v1229
    %v1582 = vpack.c.b16 %v1238, %v1230
    %v1583 = vpack.c.b16 %v1239, %v1231
    %v1584 = vpack.c.b16 %v1240, %v1232
    %v1585 = vpack.c.b16 %v1241, %v1233
    %v1586 = vpack.c.b16 %v1242, %v1234
    %v1587 = vpack.c.b16 %v1243, %v1235
    %v1588 = vpack.c.b16 %v1244, %v1236
    %v1589 = vpack.c.b16 %v1253, %v1245
    %v1590 = vpack.c.b16 %v1254, %v1246
    %v1591 = vpack.c.b16 %v1255, %v1247
    %v1592 = vpack.c.b16 %v1256, %v1248
    %v1593 = vpack.c.b16 %v1257, %v1249
    %v1594 = vpack.c.b16 %v1258, %v1250
    %v1595 = vpack.c.b16 %v1259, %v1251
    %v1596 = vpack.c.b16 %v1260, %v1252
    %v1597 = vpack.c.b16 %v1269, %v1261
    %v1598 = vpack.c.b16 %v1270, %v1262
    %v1599 = vpack.c.b16 %v1271, %v1263
    %v1600 = vpack.c.b16 %v1272, %v1264
    %v1601 = vpack.c.b16 %v1273, %v1265
    %v1602 = vpack.c.b16 %v1274, %v1266
    %v1603 = vpack.c.b16 %v1275, %v1267
    %v1604 = vpack.c.b16 %v1276, %v1268
    %v1605 = vpack.c.b16 %v1285, %v1277
    %v1606 = vpack.c.b16 %v1286, %v1278
    %v1607 = vpack.c.b16 %v1287, %v1279
    %v1608 = vpack.c.b16 %v1288, %v1280
    %v1609 = vpack.c.b16 %v1289, %v1281
    %v1610 = vpack.c.b16 %v1290, %v1282
    %v1611 = vpack.c.b16 %v1291, %v1283
    %v1612 = vpack.c.b16 %v1292, %v1284
    %v1613 = vpack.c.b16 %v1301, %v1293
    %v1614 = vpack.c.b16 %v1302, %v1294
    %v1615 = vpack.c.b16 %v1303, %v1295
    %v1616 = vpack.c.b16 %v1304, %v1296
    %v1617 = vpack.c.b16 %v1305, %v1297
    %v1618 = vpack.c.b16 %v1306, %v1298
    %v1619 = vpack.c.b16 %v1307, %v1299
    %v1620 = vpack.c.b16 %v1308, %v1300
    %v1621 = vpack.c.b16 %v1317, %v1309
    %v1622 = vpack.c.b16 %v1318, %v1310
    %v1623 = vpack.c.b16 %v1319, %v1311
    %v1624 = vpack.c.b16 %v1320, %v1312
    %v1625 = vpack.c.b16 %v1321, %v1313
    %v1626 = vpack.c.b16 %v1322, %v1314
    %v1627 = vpack.c.b16 %v1323, %v1315
    %v1628 = vpack.c.b16 %v1324, %v1316
    %v1629 = vpack.c.b16 %v1333, %v1325
    %v1630 = vpack.c.b16 %v1334, %v1326
    %v1631 = vpack.c.b16 %v1335, %v1327
    %v1632 = vpack.c.b16 %v1336, %v1328
    %v1633 = vpack.c.b16 %v1337, %v1329
    %v1634 = vpack.c.b16 %v1338, %v1330
    %v1635 = vpack.c.b16 %v1339, %v1331
    %v1636 = vpack.c.b16 %v1340, %v1332
    %v1637 = vpack.c.b16 %v1349, %v1341
    %v1638 = vpack.c.b16 %v1350, %v1342
    %v1639 = vpack.c.b16 %v1351, %v1343
    %v1640 = vpack.c.b16 %v1352, %v1344
    %v1641 = vpack.c.b16 %v1353, %v1345
    %v1642 = vpack.c.b16 %v1354, %v1346
    %v1643 = vpack.c.b16 %v1355, %v1347
    %v1644 = vpack.c.b16 %v1356, %v1348
    %v1645 = vpack.c.b16 %v1365, %v1357
    %v1646 = vpack.c.b16 %v1366, %v1358
    %v1647 = vpack.c.b16 %v1367, %v1359
    %v1648 = vpack.c.b16 %v1368, %v1360
    %v1649 = vpack.c.b16 %v1369, %v1361
    %v1650 = vpack.c.b16 %v1370, %v1362
    %v1651 = vpack.c.b16 %v1371, %v1363
    %v1652 = vpack.c.b16 %v1372, %v1364
    %v1653 = vpack.c.b16 %v1381, %v1373
    %v1654 = vpack.c.b16 %v1382, %v1374
    %v1655 = vpack.c.b16 %v1383, %v1375
    %v1656 = vpack.c.b16 %v1384, %v1376
    %v1657 = vpack.c.b16 %v1385, %v1377
    %v1658 = vpack.c.b16 %v1386, %v1378
    %v1659 = vpack.c.b16 %v1387, %v1379
    %v1660 = vpack.c.b16 %v1388, %v1380
    %v1661 = vpack.c.b16 %v1397, %v1389
    %v1662 = vpack.c.b16 %v1398, %v1390
    %v1663 = vpack.c.b16 %v1399, %v1391
    %v1664 = vpack.c.b16 %v1400, %v1392
    %v1665 = vpack.c.b16 %v1401, %v1393
    %v1666 = vpack.c.b16 %v1402, %v1394
    %v1667 = vpack.c.b16 %v1403, %v1395
    %v1668 = vpack.c.b16 %v1404, %v1396
    %v1669 = vpack.c.b16 %v1413, %v1405
    %v1670 = vpack.c.b16 %v1414, %v1406
    %v1671 = vpack.c.b16 %v1415, %v1407
    %v1672 = vpack.c.b16 %v1416, %v1408
    %v1673 = vpack.c.b16 %v1417, %v1409
    %v1674 = vpack.c.b16 %v1418, %v1410
    %v1675 = vpack.c.b16 %v1419, %v1411
    %v1676 = vpack.c.b16 %v1420, %v1412
    %1933 = vmatprep.subr.bf16.mxu0 %v1478
    %1934 = vmatpush1.bf16.msra.mxu0 %v1477
    %1935 = vmatprep.subr.bf16.mxu0 %v1470
    %1936 = vmatpush1.bf16.msra.mxu0 %v1469
    %1937 = vmatprep.subr.bf16.mxu0 %v1462
    %1938 = vmatpush1.bf16.msra.mxu0 %v1461
    %1939 = vmatprep.subr.bf16.mxu0 %v1454
    %1940 = vmatpush1.bf16.msra.mxu0 %v1453
    %1941 = vmatprep.subr.bf16.mxu0 %v1446
    %1942 = vmatpush1.bf16.msra.mxu0 %v1445
    %1943 = vmatprep.subr.bf16.mxu0 %v1438
    %1944 = vmatpush1.bf16.msra.mxu0 %v1437
    %1945 = vmatprep.subr.bf16.mxu0 %v1430
    %1946 = vmatpush1.bf16.msra.mxu0 %v1429
    %1947 = vmatprep.subr.bf16.mxu0 %v1422
    %1948 = vmatpush1.bf16.msra.mxu0 %v1421
    %1949 = vmatprep.subr.bf16.mxu0 %v1542
    %1950 = vmatpush2.bf16.msra.mxu0 %v1541
    %1951 = vmatprep.subr.bf16.mxu0 %v1534
    %1952 = vmatpush2.bf16.msra.mxu0 %v1533
    %1953 = vmatprep.subr.bf16.mxu0 %v1526
    %1954 = vmatpush2.bf16.msra.mxu0 %v1525
    %1955 = vmatprep.subr.bf16.mxu0 %v1518
    %1956 = vmatpush2.bf16.msra.mxu0 %v1517
    %1957 = vmatprep.subr.bf16.mxu0 %v1510
    %1958 = vmatpush2.bf16.msra.mxu0 %v1509
    %1959 = vmatprep.subr.bf16.mxu0 %v1502
    %1960 = vmatpush2.bf16.msra.mxu0 %v1501
    %1961 = vmatprep.subr.bf16.mxu0 %v1494
    %1962 = vmatpush2.bf16.msra.mxu0 %v1493
    %1963 = vmatprep.subr.bf16.mxu0 %v1486
    %1964 = vmatpush2.bf16.msra.mxu0 %v1485
    %1965 = vmatprep.mubr.bf16.mxu0 %v646
    %1966 = vmatmul.mubr.bf16.gmra.mxu0 %v645
    %v1967 = vpop.f32.mrf.mxu0
    %v1968 = vadd.f32 0.0, %v1967
    %v1969 = vpop.f32.mrf.mxu0
    %v1970 = vadd.f32 0.0, %v1969
    %v1971 = vpop.f32.mrf.mxu0
    %v1972 = vpop.f32.mrf.mxu0
    %1973 = vdwg.mxu0
    %1974 = vmatprep.subr.bf16.mxu0 %v1606
    %1975 = vmatpush1.bf16.msra.mxu0 %v1605
    %1976 = vmatprep.subr.bf16.mxu0 %v1598
    %1977 = vmatpush1.bf16.msra.mxu0 %v1597
    %1978 = vmatprep.subr.bf16.mxu0 %v1590
    %1979 = vmatpush1.bf16.msra.mxu0 %v1589
    %1980 = vmatprep.subr.bf16.mxu0 %v1582
    %1981 = vmatpush1.bf16.msra.mxu0 %v1581
    %1982 = vmatprep.subr.bf16.mxu0 %v1574
    %1983 = vmatpush1.bf16.msra.mxu0 %v1573
    %1984 = vmatprep.subr.bf16.mxu0 %v1566
    %1985 = vmatpush1.bf16.msra.mxu0 %v1565
    %1986 = vmatprep.subr.bf16.mxu0 %v1558
    %1987 = vmatpush1.bf16.msra.mxu0 %v1557
    %1988 = vmatprep.subr.bf16.mxu0 %v1550
    %1989 = vmatpush1.bf16.msra.mxu0 %v1549
    %1990 = vmatprep.subr.bf16.mxu0 %v1670
    %1991 = vmatpush2.bf16.msra.mxu0 %v1669
    %1992 = vmatprep.subr.bf16.mxu0 %v1662
    %1993 = vmatpush2.bf16.msra.mxu0 %v1661
    %1994 = vmatprep.subr.bf16.mxu0 %v1654
    %1995 = vmatpush2.bf16.msra.mxu0 %v1653
    %1996 = vmatprep.subr.bf16.mxu0 %v1646
    %1997 = vmatpush2.bf16.msra.mxu0 %v1645
    %1998 = vmatprep.subr.bf16.mxu0 %v1638
    %1999 = vmatpush2.bf16.msra.mxu0 %v1637
    %2000 = vmatprep.subr.bf16.mxu0 %v1630
    %2001 = vmatpush2.bf16.msra.mxu0 %v1629
    %2002 = vmatprep.subr.bf16.mxu0 %v1622
    %2003 = vmatpush2.bf16.msra.mxu0 %v1621
    %2004 = vmatprep.subr.bf16.mxu0 %v1614
    %2005 = vmatpush2.bf16.msra.mxu0 %v1613
    %2006 = vmatprep.mubr.bf16.mxu0 %v648
    %2007 = vmatmul.mubr.bf16.gmra.mxu0 %v647
    %v2008 = vpop.f32.mrf.mxu0
    %v2009 = vadd.f32 %v1968, %v2008
    %v2010 = vpop.f32.mrf.mxu0
    %v2011 = vadd.f32 %v1970, %v2010
    %v2012 = vpop.f32.mrf.mxu0
    %v2013 = vpop.f32.mrf.mxu0
    %2014 = vdwg.mxu0
    %2015 = vmatprep.subr.bf16.mxu0 %v1480
    %2016 = vmatpush1.bf16.msra.mxu0 %v1479
    %2017 = vmatprep.subr.bf16.mxu0 %v1472
    %2018 = vmatpush1.bf16.msra.mxu0 %v1471
    %2019 = vmatprep.subr.bf16.mxu0 %v1464
    %2020 = vmatpush1.bf16.msra.mxu0 %v1463
    %2021 = vmatprep.subr.bf16.mxu0 %v1456
    %2022 = vmatpush1.bf16.msra.mxu0 %v1455
    %2023 = vmatprep.subr.bf16.mxu0 %v1448
    %2024 = vmatpush1.bf16.msra.mxu0 %v1447
    %2025 = vmatprep.subr.bf16.mxu0 %v1440
    %2026 = vmatpush1.bf16.msra.mxu0 %v1439
    %2027 = vmatprep.subr.bf16.mxu0 %v1432
    %2028 = vmatpush1.bf16.msra.mxu0 %v1431
    %2029 = vmatprep.subr.bf16.mxu0 %v1424
    %2030 = vmatpush1.bf16.msra.mxu0 %v1423
    %2031 = vmatprep.subr.bf16.mxu0 %v1544
    %2032 = vmatpush2.bf16.msra.mxu0 %v1543
    %2033 = vmatprep.subr.bf16.mxu0 %v1536
    %2034 = vmatpush2.bf16.msra.mxu0 %v1535
    %2035 = vmatprep.subr.bf16.mxu0 %v1528
    %2036 = vmatpush2.bf16.msra.mxu0 %v1527
    %2037 = vmatprep.subr.bf16.mxu0 %v1520
    %2038 = vmatpush2.bf16.msra.mxu0 %v1519
    %2039 = vmatprep.subr.bf16.mxu0 %v1512
    %2040 = vmatpush2.bf16.msra.mxu0 %v1511
    %2041 = vmatprep.subr.bf16.mxu0 %v1504
    %2042 = vmatpush2.bf16.msra.mxu0 %v1503
    %2043 = vmatprep.subr.bf16.mxu0 %v1496
    %2044 = vmatpush2.bf16.msra.mxu0 %v1495
    %2045 = vmatprep.subr.bf16.mxu0 %v1488
    %2046 = vmatpush2.bf16.msra.mxu0 %v1487
    %2047 = vmatprep.mubr.bf16.mxu0 %v646
    %2048 = vmatmul.mubr.bf16.gmra.mxu0 %v645
    %v2049 = vpop.f32.mrf.mxu0
    %v2050 = vadd.f32 0.0, %v2049
    %v2051 = vpop.f32.mrf.mxu0
    %v2052 = vadd.f32 0.0, %v2051
    %v2053 = vpop.f32.mrf.mxu0
    %v2054 = vpop.f32.mrf.mxu0
    %2055 = vdwg.mxu0
    %2056 = vmatprep.subr.bf16.mxu0 %v1608
    %2057 = vmatpush1.bf16.msra.mxu0 %v1607
    %2058 = vmatprep.subr.bf16.mxu0 %v1600
    %2059 = vmatpush1.bf16.msra.mxu0 %v1599
    %2060 = vmatprep.subr.bf16.mxu0 %v1592
    %2061 = vmatpush1.bf16.msra.mxu0 %v1591
    %2062 = vmatprep.subr.bf16.mxu0 %v1584
    %2063 = vmatpush1.bf16.msra.mxu0 %v1583
    %2064 = vmatprep.subr.bf16.mxu0 %v1576
    %2065 = vmatpush1.bf16.msra.mxu0 %v1575
    %2066 = vmatprep.subr.bf16.mxu0 %v1568
    %2067 = vmatpush1.bf16.msra.mxu0 %v1567
    %2068 = vmatprep.subr.bf16.mxu0 %v1560
    %2069 = vmatpush1.bf16.msra.mxu0 %v1559
    %2070 = vmatprep.subr.bf16.mxu0 %v1552
    %2071 = vmatpush1.bf16.msra.mxu0 %v1551
    %2072 = vmatprep.subr.bf16.mxu0 %v1672
    %2073 = vmatpush2.bf16.msra.mxu0 %v1671
    %2074 = vmatprep.subr.bf16.mxu0 %v1664
    %2075 = vmatpush2.bf16.msra.mxu0 %v1663
    %2076 = vmatprep.subr.bf16.mxu0 %v1656
    %2077 = vmatpush2.bf16.msra.mxu0 %v1655
    %2078 = vmatprep.subr.bf16.mxu0 %v1648
    %2079 = vmatpush2.bf16.msra.mxu0 %v1647
    %2080 = vmatprep.subr.bf16.mxu0 %v1640
    %2081 = vmatpush2.bf16.msra.mxu0 %v1639
    %2082 = vmatprep.subr.bf16.mxu0 %v1632
    %2083 = vmatpush2.bf16.msra.mxu0 %v1631
    %2084 = vmatprep.subr.bf16.mxu0 %v1624
    %2085 = vmatpush2.bf16.msra.mxu0 %v1623
    %2086 = vmatprep.subr.bf16.mxu0 %v1616
    %2087 = vmatpush2.bf16.msra.mxu0 %v1615
    %2088 = vmatprep.mubr.bf16.mxu0 %v648
    %2089 = vmatmul.mubr.bf16.gmra.mxu0 %v647
    %v2090 = vpop.f32.mrf.mxu0
    %v2091 = vadd.f32 %v2050, %v2090
    %v2092 = vpop.f32.mrf.mxu0
    %v2093 = vadd.f32 %v2052, %v2092
    %v2094 = vpop.f32.mrf.mxu0
    %v2095 = vpop.f32.mrf.mxu0
    %2096 = vdwg.mxu0
    %2097 = vmatprep.subr.bf16.mxu0 %v1482
    %2098 = vmatpush1.bf16.msra.mxu0 %v1481
    %2099 = vmatprep.subr.bf16.mxu0 %v1474
    %2100 = vmatpush1.bf16.msra.mxu0 %v1473
    %2101 = vmatprep.subr.bf16.mxu0 %v1466
    %2102 = vmatpush1.bf16.msra.mxu0 %v1465
    %2103 = vmatprep.subr.bf16.mxu0 %v1458
    %2104 = vmatpush1.bf16.msra.mxu0 %v1457
    %2105 = vmatprep.subr.bf16.mxu0 %v1450
    %2106 = vmatpush1.bf16.msra.mxu0 %v1449
    %2107 = vmatprep.subr.bf16.mxu0 %v1442
    %2108 = vmatpush1.bf16.msra.mxu0 %v1441
    %2109 = vmatprep.subr.bf16.mxu0 %v1434
    %2110 = vmatpush1.bf16.msra.mxu0 %v1433
    %2111 = vmatprep.subr.bf16.mxu0 %v1426
    %2112 = vmatpush1.bf16.msra.mxu0 %v1425
    %2113 = vmatprep.subr.bf16.mxu0 %v1546
    %2114 = vmatpush2.bf16.msra.mxu0 %v1545
    %2115 = vmatprep.subr.bf16.mxu0 %v1538
    %2116 = vmatpush2.bf16.msra.mxu0 %v1537
    %2117 = vmatprep.subr.bf16.mxu0 %v1530
    %2118 = vmatpush2.bf16.msra.mxu0 %v1529
    %2119 = vmatprep.subr.bf16.mxu0 %v1522
    %2120 = vmatpush2.bf16.msra.mxu0 %v1521
    %2121 = vmatprep.subr.bf16.mxu0 %v1514
    %2122 = vmatpush2.bf16.msra.mxu0 %v1513
    %2123 = vmatprep.subr.bf16.mxu0 %v1506
    %2124 = vmatpush2.bf16.msra.mxu0 %v1505
    %2125 = vmatprep.subr.bf16.mxu0 %v1498
    %2126 = vmatpush2.bf16.msra.mxu0 %v1497
    %2127 = vmatprep.subr.bf16.mxu0 %v1490
    %2128 = vmatpush2.bf16.msra.mxu0 %v1489
    %2129 = vmatprep.mubr.bf16.mxu0 %v646
    %2130 = vmatmul.mubr.bf16.gmra.mxu0 %v645
    %v2131 = vpop.f32.mrf.mxu0
    %v2132 = vadd.f32 0.0, %v2131
    %v2133 = vpop.f32.mrf.mxu0
    %v2134 = vadd.f32 0.0, %v2133
    %v2135 = vpop.f32.mrf.mxu0
    %v2136 = vpop.f32.mrf.mxu0
    %2137 = vdwg.mxu0
    %2138 = vmatprep.subr.bf16.mxu0 %v1610
    %2139 = vmatpush1.bf16.msra.mxu0 %v1609
    %2140 = vmatprep.subr.bf16.mxu0 %v1602
    %2141 = vmatpush1.bf16.msra.mxu0 %v1601
    %2142 = vmatprep.subr.bf16.mxu0 %v1594
    %2143 = vmatpush1.bf16.msra.mxu0 %v1593
    %2144 = vmatprep.subr.bf16.mxu0 %v1586
    %2145 = vmatpush1.bf16.msra.mxu0 %v1585
    %2146 = vmatprep.subr.bf16.mxu0 %v1578
    %2147 = vmatpush1.bf16.msra.mxu0 %v1577
    %2148 = vmatprep.subr.bf16.mxu0 %v1570
    %2149 = vmatpush1.bf16.msra.mxu0 %v1569
    %2150 = vmatprep.subr.bf16.mxu0 %v1562
    %2151 = vmatpush1.bf16.msra.mxu0 %v1561
    %2152 = vmatprep.subr.bf16.mxu0 %v1554
    %2153 = vmatpush1.bf16.msra.mxu0 %v1553
    %2154 = vmatprep.subr.bf16.mxu0 %v1674
    %2155 = vmatpush2.bf16.msra.mxu0 %v1673
    %2156 = vmatprep.subr.bf16.mxu0 %v1666
    %2157 = vmatpush2.bf16.msra.mxu0 %v1665
    %2158 = vmatprep.subr.bf16.mxu0 %v1658
    %2159 = vmatpush2.bf16.msra.mxu0 %v1657
    %2160 = vmatprep.subr.bf16.mxu0 %v1650
    %2161 = vmatpush2.bf16.msra.mxu0 %v1649
    %2162 = vmatprep.subr.bf16.mxu0 %v1642
    %2163 = vmatpush2.bf16.msra.mxu0 %v1641
    %2164 = vmatprep.subr.bf16.mxu0 %v1634
    %2165 = vmatpush2.bf16.msra.mxu0 %v1633
    %2166 = vmatprep.subr.bf16.mxu0 %v1626
    %2167 = vmatpush2.bf16.msra.mxu0 %v1625
    %2168 = vmatprep.subr.bf16.mxu0 %v1618
    %2169 = vmatpush2.bf16.msra.mxu0 %v1617
    %2170 = vmatprep.mubr.bf16.mxu0 %v648
    %2171 = vmatmul.mubr.bf16.gmra.mxu0 %v647
    %v2172 = vpop.f32.mrf.mxu0
    %v2173 = vadd.f32 %v2132, %v2172
    %v2174 = vpop.f32.mrf.mxu0
    %v2175 = vadd.f32 %v2134, %v2174
    %v2176 = vpop.f32.mrf.mxu0
    %v2177 = vpop.f32.mrf.mxu0
    %2178 = vdwg.mxu0
    %2179 = vmatprep.subr.bf16.mxu0 %v1484
    %2180 = vmatpush1.bf16.msra.mxu0 %v1483
    %2181 = vmatprep.subr.bf16.mxu0 %v1476
    %2182 = vmatpush1.bf16.msra.mxu0 %v1475
    %2183 = vmatprep.subr.bf16.mxu0 %v1468
    %2184 = vmatpush1.bf16.msra.mxu0 %v1467
    %2185 = vmatprep.subr.bf16.mxu0 %v1460
    %2186 = vmatpush1.bf16.msra.mxu0 %v1459
    %2187 = vmatprep.subr.bf16.mxu0 %v1452
    %2188 = vmatpush1.bf16.msra.mxu0 %v1451
    %2189 = vmatprep.subr.bf16.mxu0 %v1444
    %2190 = vmatpush1.bf16.msra.mxu0 %v1443
    %2191 = vmatprep.subr.bf16.mxu0 %v1436
    %2192 = vmatpush1.bf16.msra.mxu0 %v1435
    %2193 = vmatprep.subr.bf16.mxu0 %v1428
    %2194 = vmatpush1.bf16.msra.mxu0 %v1427
    %2195 = vmatprep.subr.bf16.mxu0 %v1548
    %2196 = vmatpush2.bf16.msra.mxu0 %v1547
    %2197 = vmatprep.subr.bf16.mxu0 %v1540
    %2198 = vmatpush2.bf16.msra.mxu0 %v1539
    %2199 = vmatprep.subr.bf16.mxu0 %v1532
    %2200 = vmatpush2.bf16.msra.mxu0 %v1531
    %2201 = vmatprep.subr.bf16.mxu0 %v1524
    %2202 = vmatpush2.bf16.msra.mxu0 %v1523
    %2203 = vmatprep.subr.bf16.mxu0 %v1516
    %2204 = vmatpush2.bf16.msra.mxu0 %v1515
    %2205 = vmatprep.subr.bf16.mxu0 %v1508
    %2206 = vmatpush2.bf16.msra.mxu0 %v1507
    %2207 = vmatprep.subr.bf16.mxu0 %v1500
    %2208 = vmatpush2.bf16.msra.mxu0 %v1499
    %2209 = vmatprep.subr.bf16.mxu0 %v1492
    %2210 = vmatpush2.bf16.msra.mxu0 %v1491
    %2211 = vmatprep.mubr.bf16.mxu0 %v646
    %2212 = vmatmul.mubr.bf16.gmra.mxu0 %v645
    %v2213 = vpop.f32.mrf.mxu0
    %v2214 = vadd.f32 0.0, %v2213
    %v2215 = vpop.f32.mrf.mxu0
    %v2216 = vadd.f32 0.0, %v2215
    %v2217 = vpop.f32.mrf.mxu0
    %v2218 = vpop.f32.mrf.mxu0
    %2219 = vdwg.mxu0
    %2220 = vmatprep.subr.bf16.mxu0 %v1612
    %2221 = vmatpush1.bf16.msra.mxu0 %v1611
    %2222 = vmatprep.subr.bf16.mxu0 %v1604
    %2223 = vmatpush1.bf16.msra.mxu0 %v1603
    %2224 = vmatprep.subr.bf16.mxu0 %v1596
    %2225 = vmatpush1.bf16.msra.mxu0 %v1595
    %2226 = vmatprep.subr.bf16.mxu0 %v1588
    %2227 = vmatpush1.bf16.msra.mxu0 %v1587
    %2228 = vmatprep.subr.bf16.mxu0 %v1580
    %2229 = vmatpush1.bf16.msra.mxu0 %v1579
    %2230 = vmatprep.subr.bf16.mxu0 %v1572
    %2231 = vmatpush1.bf16.msra.mxu0 %v1571
    %2232 = vmatprep.subr.bf16.mxu0 %v1564
    %2233 = vmatpush1.bf16.msra.mxu0 %v1563
    %2234 = vmatprep.subr.bf16.mxu0 %v1556
    %2235 = vmatpush1.bf16.msra.mxu0 %v1555
    %2236 = vmatprep.subr.bf16.mxu0 %v1676
    %2237 = vmatpush2.bf16.msra.mxu0 %v1675
    %2238 = vmatprep.subr.bf16.mxu0 %v1668
    %2239 = vmatpush2.bf16.msra.mxu0 %v1667
    %2240 = vmatprep.subr.bf16.mxu0 %v1660
    %2241 = vmatpush2.bf16.msra.mxu0 %v1659
    %2242 = vmatprep.subr.bf16.mxu0 %v1652
    %2243 = vmatpush2.bf16.msra.mxu0 %v1651
    %2244 = vmatprep.subr.bf16.mxu0 %v1644
    %2245 = vmatpush2.bf16.msra.mxu0 %v1643
    %2246 = vmatprep.subr.bf16.mxu0 %v1636
    %2247 = vmatpush2.bf16.msra.mxu0 %v1635
    %2248 = vmatprep.subr.bf16.mxu0 %v1628
    %2249 = vmatpush2.bf16.msra.mxu0 %v1627
    %2250 = vmatprep.subr.bf16.mxu0 %v1620
    %2251 = vmatpush2.bf16.msra.mxu0 %v1619
    %2252 = vmatprep.mubr.bf16.mxu0 %v648
    %2253 = vmatmul.mubr.bf16.gmra.mxu0 %v647
    %v2254 = vpop.f32.mrf.mxu0
    %v2255 = vadd.f32 %v2214, %v2254
    %v2256 = vpop.f32.mrf.mxu0
    %v2257 = vadd.f32 %v2216, %v2256
    %v2258 = vpop.f32.mrf.mxu0
    %v2259 = vpop.f32.mrf.mxu0
    %2260 = vdwg.mxu0
    %v2263 = vunpack.c.l.b16 %v123
    %v2264 = vunpack.c.h.b16 %v123
    %v2265 = vunpack.c.l.b16 %v124
    %v2266 = vunpack.c.h.b16 %v124
    %v2267 = vpack.c.b16 %v2263, %v2263
    %v2268 = vpack.c.b16 %v2264, %v2264
    %v2269 = vpack.c.b16 %v2265, %v2265
    %v2270 = vpack.c.b16 %v2266, %v2266
    %v2531 = vunpack.c.l.b16 %v125
    %v2532 = vunpack.c.h.b16 %v125
    %v2533 = vunpack.c.l.b16 %v126
    %v2534 = vunpack.c.h.b16 %v126
    %v2535 = vunpack.c.l.b16 %v127
    %v2536 = vunpack.c.h.b16 %v127
    %v2537 = vunpack.c.l.b16 %v128
    %v2538 = vunpack.c.h.b16 %v128
    %v2539 = vunpack.c.l.b16 %v129
    %v2540 = vunpack.c.h.b16 %v129
    %v2541 = vunpack.c.l.b16 %v130
    %v2542 = vunpack.c.h.b16 %v130
    %v2543 = vunpack.c.l.b16 %v131
    %v2544 = vunpack.c.h.b16 %v131
    %v2545 = vunpack.c.l.b16 %v132
    %v2546 = vunpack.c.h.b16 %v132
    %v2547 = vunpack.c.l.b16 %v133
    %v2548 = vunpack.c.h.b16 %v133
    %v2549 = vunpack.c.l.b16 %v134
    %v2550 = vunpack.c.h.b16 %v134
    %v2551 = vunpack.c.l.b16 %v135
    %v2552 = vunpack.c.h.b16 %v135
    %v2553 = vunpack.c.l.b16 %v136
    %v2554 = vunpack.c.h.b16 %v136
    %v2555 = vunpack.c.l.b16 %v137
    %v2556 = vunpack.c.h.b16 %v137
    %v2557 = vunpack.c.l.b16 %v138
    %v2558 = vunpack.c.h.b16 %v138
    %v2559 = vunpack.c.l.b16 %v139
    %v2560 = vunpack.c.h.b16 %v139
    %v2561 = vunpack.c.l.b16 %v140
    %v2562 = vunpack.c.h.b16 %v140
    %v2563 = vunpack.c.l.b16 %v141
    %v2564 = vunpack.c.h.b16 %v141
    %v2565 = vunpack.c.l.b16 %v142
    %v2566 = vunpack.c.h.b16 %v142
    %v2567 = vunpack.c.l.b16 %v143
    %v2568 = vunpack.c.h.b16 %v143
    %v2569 = vunpack.c.l.b16 %v144
    %v2570 = vunpack.c.h.b16 %v144
    %v2571 = vunpack.c.l.b16 %v145
    %v2572 = vunpack.c.h.b16 %v145
    %v2573 = vunpack.c.l.b16 %v146
    %v2574 = vunpack.c.h.b16 %v146
    %v2575 = vunpack.c.l.b16 %v147
    %v2576 = vunpack.c.h.b16 %v147
    %v2577 = vunpack.c.l.b16 %v148
    %v2578 = vunpack.c.h.b16 %v148
    %v2579 = vunpack.c.l.b16 %v149
    %v2580 = vunpack.c.h.b16 %v149
    %v2581 = vunpack.c.l.b16 %v150
    %v2582 = vunpack.c.h.b16 %v150
    %v2583 = vunpack.c.l.b16 %v151
    %v2584 = vunpack.c.h.b16 %v151
    %v2585 = vunpack.c.l.b16 %v152
    %v2586 = vunpack.c.h.b16 %v152
    %v2587 = vunpack.c.l.b16 %v153
    %v2588 = vunpack.c.h.b16 %v153
    %v2589 = vunpack.c.l.b16 %v154
    %v2590 = vunpack.c.h.b16 %v154
    %v2591 = vunpack.c.l.b16 %v155
    %v2592 = vunpack.c.h.b16 %v155
    %v2593 = vunpack.c.l.b16 %v156
    %v2594 = vunpack.c.h.b16 %v156
    %v2595 = vunpack.c.l.b16 %v157
    %v2596 = vunpack.c.h.b16 %v157
    %v2597 = vunpack.c.l.b16 %v158
    %v2598 = vunpack.c.h.b16 %v158
    %v2599 = vunpack.c.l.b16 %v159
    %v2600 = vunpack.c.h.b16 %v159
    %v2601 = vunpack.c.l.b16 %v160
    %v2602 = vunpack.c.h.b16 %v160
    %v2603 = vunpack.c.l.b16 %v161
    %v2604 = vunpack.c.h.b16 %v161
    %v2605 = vunpack.c.l.b16 %v162
    %v2606 = vunpack.c.h.b16 %v162
    %v2607 = vunpack.c.l.b16 %v163
    %v2608 = vunpack.c.h.b16 %v163
    %v2609 = vunpack.c.l.b16 %v164
    %v2610 = vunpack.c.h.b16 %v164
    %v2611 = vunpack.c.l.b16 %v165
    %v2612 = vunpack.c.h.b16 %v165
    %v2613 = vunpack.c.l.b16 %v166
    %v2614 = vunpack.c.h.b16 %v166
    %v2615 = vunpack.c.l.b16 %v167
    %v2616 = vunpack.c.h.b16 %v167
    %v2617 = vunpack.c.l.b16 %v168
    %v2618 = vunpack.c.h.b16 %v168
    %v2619 = vunpack.c.l.b16 %v169
    %v2620 = vunpack.c.h.b16 %v169
    %v2621 = vunpack.c.l.b16 %v170
    %v2622 = vunpack.c.h.b16 %v170
    %v2623 = vunpack.c.l.b16 %v171
    %v2624 = vunpack.c.h.b16 %v171
    %v2625 = vunpack.c.l.b16 %v172
    %v2626 = vunpack.c.h.b16 %v172
    %v2627 = vunpack.c.l.b16 %v173
    %v2628 = vunpack.c.h.b16 %v173
    %v2629 = vunpack.c.l.b16 %v174
    %v2630 = vunpack.c.h.b16 %v174
    %v2631 = vunpack.c.l.b16 %v175
    %v2632 = vunpack.c.h.b16 %v175
    %v2633 = vunpack.c.l.b16 %v176
    %v2634 = vunpack.c.h.b16 %v176
    %v2635 = vunpack.c.l.b16 %v177
    %v2636 = vunpack.c.h.b16 %v177
    %v2637 = vunpack.c.l.b16 %v178
    %v2638 = vunpack.c.h.b16 %v178
    %v2639 = vunpack.c.l.b16 %v179
    %v2640 = vunpack.c.h.b16 %v179
    %v2641 = vunpack.c.l.b16 %v180
    %v2642 = vunpack.c.h.b16 %v180
    %v2643 = vunpack.c.l.b16 %v181
    %v2644 = vunpack.c.h.b16 %v181
    %v2645 = vunpack.c.l.b16 %v182
    %v2646 = vunpack.c.h.b16 %v182
    %v2647 = vunpack.c.l.b16 %v183
    %v2648 = vunpack.c.h.b16 %v183
    %v2649 = vunpack.c.l.b16 %v184
    %v2650 = vunpack.c.h.b16 %v184
    %v2651 = vunpack.c.l.b16 %v185
    %v2652 = vunpack.c.h.b16 %v185
    %v2653 = vunpack.c.l.b16 %v186
    %v2654 = vunpack.c.h.b16 %v186
    %v2655 = vunpack.c.l.b16 %v187
    %v2656 = vunpack.c.h.b16 %v187
    %v2657 = vunpack.c.l.b16 %v188
    %v2658 = vunpack.c.h.b16 %v188
    %v2659 = vunpack.c.l.b16 %v189
    %v2660 = vunpack.c.h.b16 %v189
    %v2661 = vunpack.c.l.b16 %v190
    %v2662 = vunpack.c.h.b16 %v190
    %v2663 = vunpack.c.l.b16 %v191
    %v2664 = vunpack.c.h.b16 %v191
    %v2665 = vunpack.c.l.b16 %v192
    %v2666 = vunpack.c.h.b16 %v192
    %v2667 = vunpack.c.l.b16 %v193
    %v2668 = vunpack.c.h.b16 %v193
    %v2669 = vunpack.c.l.b16 %v194
    %v2670 = vunpack.c.h.b16 %v194
    %v2671 = vunpack.c.l.b16 %v195
    %v2672 = vunpack.c.h.b16 %v195
    %v2673 = vunpack.c.l.b16 %v196
    %v2674 = vunpack.c.h.b16 %v196
    %v2675 = vunpack.c.l.b16 %v197
    %v2676 = vunpack.c.h.b16 %v197
    %v2677 = vunpack.c.l.b16 %v198
    %v2678 = vunpack.c.h.b16 %v198
    %v2679 = vunpack.c.l.b16 %v199
    %v2680 = vunpack.c.h.b16 %v199
    %v2681 = vunpack.c.l.b16 %v200
    %v2682 = vunpack.c.h.b16 %v200
    %v2683 = vunpack.c.l.b16 %v201
    %v2684 = vunpack.c.h.b16 %v201
    %v2685 = vunpack.c.l.b16 %v202
    %v2686 = vunpack.c.h.b16 %v202
    %v2687 = vunpack.c.l.b16 %v203
    %v2688 = vunpack.c.h.b16 %v203
    %v2689 = vunpack.c.l.b16 %v204
    %v2690 = vunpack.c.h.b16 %v204
    %v2691 = vunpack.c.l.b16 %v205
    %v2692 = vunpack.c.h.b16 %v205
    %v2693 = vunpack.c.l.b16 %v206
    %v2694 = vunpack.c.h.b16 %v206
    %v2695 = vunpack.c.l.b16 %v207
    %v2696 = vunpack.c.h.b16 %v207
    %v2697 = vunpack.c.l.b16 %v208
    %v2698 = vunpack.c.h.b16 %v208
    %v2699 = vunpack.c.l.b16 %v209
    %v2700 = vunpack.c.h.b16 %v209
    %v2701 = vunpack.c.l.b16 %v210
    %v2702 = vunpack.c.h.b16 %v210
    %v2703 = vunpack.c.l.b16 %v211
    %v2704 = vunpack.c.h.b16 %v211
    %v2705 = vunpack.c.l.b16 %v212
    %v2706 = vunpack.c.h.b16 %v212
    %v2707 = vunpack.c.l.b16 %v213
    %v2708 = vunpack.c.h.b16 %v213
    %v2709 = vunpack.c.l.b16 %v214
    %v2710 = vunpack.c.h.b16 %v214
    %v2711 = vunpack.c.l.b16 %v215
    %v2712 = vunpack.c.h.b16 %v215
    %v2713 = vunpack.c.l.b16 %v216
    %v2714 = vunpack.c.h.b16 %v216
    %v2715 = vunpack.c.l.b16 %v217
    %v2716 = vunpack.c.h.b16 %v217
    %v2717 = vunpack.c.l.b16 %v218
    %v2718 = vunpack.c.h.b16 %v218
    %v2719 = vunpack.c.l.b16 %v219
    %v2720 = vunpack.c.h.b16 %v219
    %v2721 = vunpack.c.l.b16 %v220
    %v2722 = vunpack.c.h.b16 %v220
    %v2723 = vunpack.c.l.b16 %v221
    %v2724 = vunpack.c.h.b16 %v221
    %v2725 = vunpack.c.l.b16 %v222
    %v2726 = vunpack.c.h.b16 %v222
    %v2727 = vunpack.c.l.b16 %v223
    %v2728 = vunpack.c.h.b16 %v223
    %v2729 = vunpack.c.l.b16 %v224
    %v2730 = vunpack.c.h.b16 %v224
    %v2731 = vunpack.c.l.b16 %v225
    %v2732 = vunpack.c.h.b16 %v225
    %v2733 = vunpack.c.l.b16 %v226
    %v2734 = vunpack.c.h.b16 %v226
    %v2735 = vunpack.c.l.b16 %v227
    %v2736 = vunpack.c.h.b16 %v227
    %v2737 = vunpack.c.l.b16 %v228
    %v2738 = vunpack.c.h.b16 %v228
    %v2739 = vunpack.c.l.b16 %v229
    %v2740 = vunpack.c.h.b16 %v229
    %v2741 = vunpack.c.l.b16 %v230
    %v2742 = vunpack.c.h.b16 %v230
    %v2743 = vunpack.c.l.b16 %v231
    %v2744 = vunpack.c.h.b16 %v231
    %v2745 = vunpack.c.l.b16 %v232
    %v2746 = vunpack.c.h.b16 %v232
    %v2747 = vunpack.c.l.b16 %v233
    %v2748 = vunpack.c.h.b16 %v233
    %v2749 = vunpack.c.l.b16 %v234
    %v2750 = vunpack.c.h.b16 %v234
    %v2751 = vunpack.c.l.b16 %v235
    %v2752 = vunpack.c.h.b16 %v235
    %v2753 = vunpack.c.l.b16 %v236
    %v2754 = vunpack.c.h.b16 %v236
    %v2755 = vunpack.c.l.b16 %v237
    %v2756 = vunpack.c.h.b16 %v237
    %v2757 = vunpack.c.l.b16 %v238
    %v2758 = vunpack.c.h.b16 %v238
    %v2759 = vunpack.c.l.b16 %v239
    %v2760 = vunpack.c.h.b16 %v239
    %v2761 = vunpack.c.l.b16 %v240
    %v2762 = vunpack.c.h.b16 %v240
    %v2763 = vunpack.c.l.b16 %v241
    %v2764 = vunpack.c.h.b16 %v241
    %v2765 = vunpack.c.l.b16 %v242
    %v2766 = vunpack.c.h.b16 %v242
    %v2767 = vunpack.c.l.b16 %v243
    %v2768 = vunpack.c.h.b16 %v243
    %v2769 = vunpack.c.l.b16 %v244
    %v2770 = vunpack.c.h.b16 %v244
    %v2771 = vunpack.c.l.b16 %v245
    %v2772 = vunpack.c.h.b16 %v245
    %v2773 = vunpack.c.l.b16 %v246
    %v2774 = vunpack.c.h.b16 %v246
    %v2775 = vunpack.c.l.b16 %v247
    %v2776 = vunpack.c.h.b16 %v247
    %v2777 = vunpack.c.l.b16 %v248
    %v2778 = vunpack.c.h.b16 %v248
    %v2779 = vunpack.c.l.b16 %v249
    %v2780 = vunpack.c.h.b16 %v249
    %v2781 = vunpack.c.l.b16 %v250
    %v2782 = vunpack.c.h.b16 %v250
    %v2783 = vunpack.c.l.b16 %v251
    %v2784 = vunpack.c.h.b16 %v251
    %v2785 = vunpack.c.l.b16 %v252
    %v2786 = vunpack.c.h.b16 %v252
    %v2787 = vunpack.c.l.b16 %v253
    %v2788 = vunpack.c.h.b16 %v253
    %v2789 = vunpack.c.l.b16 %v254
    %v2790 = vunpack.c.h.b16 %v254
    %v2791 = vunpack.c.l.b16 %v255
    %v2792 = vunpack.c.h.b16 %v255
    %v2793 = vunpack.c.l.b16 %v256
    %v2794 = vunpack.c.h.b16 %v256
    %v2795 = vunpack.c.l.b16 %v257
    %v2796 = vunpack.c.h.b16 %v257
    %v2797 = vunpack.c.l.b16 %v258
    %v2798 = vunpack.c.h.b16 %v258
    %v2799 = vunpack.c.l.b16 %v259
    %v2800 = vunpack.c.h.b16 %v259
    %v2801 = vunpack.c.l.b16 %v260
    %v2802 = vunpack.c.h.b16 %v260
    %v2803 = vunpack.c.l.b16 %v261
    %v2804 = vunpack.c.h.b16 %v261
    %v2805 = vunpack.c.l.b16 %v262
    %v2806 = vunpack.c.h.b16 %v262
    %v2807 = vunpack.c.l.b16 %v263
    %v2808 = vunpack.c.h.b16 %v263
    %v2809 = vunpack.c.l.b16 %v264
    %v2810 = vunpack.c.h.b16 %v264
    %v2811 = vunpack.c.l.b16 %v265
    %v2812 = vunpack.c.h.b16 %v265
    %v2813 = vunpack.c.l.b16 %v266
    %v2814 = vunpack.c.h.b16 %v266
    %v2815 = vunpack.c.l.b16 %v267
    %v2816 = vunpack.c.h.b16 %v267
    %v2817 = vunpack.c.l.b16 %v268
    %v2818 = vunpack.c.h.b16 %v268
    %v2819 = vunpack.c.l.b16 %v269
    %v2820 = vunpack.c.h.b16 %v269
    %v2821 = vunpack.c.l.b16 %v270
    %v2822 = vunpack.c.h.b16 %v270
    %v2823 = vunpack.c.l.b16 %v271
    %v2824 = vunpack.c.h.b16 %v271
    %v2825 = vunpack.c.l.b16 %v272
    %v2826 = vunpack.c.h.b16 %v272
    %v2827 = vunpack.c.l.b16 %v273
    %v2828 = vunpack.c.h.b16 %v273
    %v2829 = vunpack.c.l.b16 %v274
    %v2830 = vunpack.c.h.b16 %v274
    %v2831 = vunpack.c.l.b16 %v275
    %v2832 = vunpack.c.h.b16 %v275
    %v2833 = vunpack.c.l.b16 %v276
    %v2834 = vunpack.c.h.b16 %v276
    %v2835 = vunpack.c.l.b16 %v277
    %v2836 = vunpack.c.h.b16 %v277
    %v2837 = vunpack.c.l.b16 %v278
    %v2838 = vunpack.c.h.b16 %v278
    %v2839 = vunpack.c.l.b16 %v279
    %v2840 = vunpack.c.h.b16 %v279
    %v2841 = vunpack.c.l.b16 %v280
    %v2842 = vunpack.c.h.b16 %v280
    %v2843 = vunpack.c.l.b16 %v281
    %v2844 = vunpack.c.h.b16 %v281
    %v2845 = vunpack.c.l.b16 %v282
    %v2846 = vunpack.c.h.b16 %v282
    %v2847 = vunpack.c.l.b16 %v283
    %v2848 = vunpack.c.h.b16 %v283
    %v2849 = vunpack.c.l.b16 %v284
    %v2850 = vunpack.c.h.b16 %v284
    %v2851 = vunpack.c.l.b16 %v285
    %v2852 = vunpack.c.h.b16 %v285
    %v2853 = vunpack.c.l.b16 %v286
    %v2854 = vunpack.c.h.b16 %v286
    %v2855 = vunpack.c.l.b16 %v287
    %v2856 = vunpack.c.h.b16 %v287
    %v2857 = vunpack.c.l.b16 %v288
    %v2858 = vunpack.c.h.b16 %v288
    %v2859 = vunpack.c.l.b16 %v289
    %v2860 = vunpack.c.h.b16 %v289
    %v2861 = vunpack.c.l.b16 %v290
    %v2862 = vunpack.c.h.b16 %v290
    %v2863 = vunpack.c.l.b16 %v291
    %v2864 = vunpack.c.h.b16 %v291
    %v2865 = vunpack.c.l.b16 %v292
    %v2866 = vunpack.c.h.b16 %v292
    %v2867 = vunpack.c.l.b16 %v293
    %v2868 = vunpack.c.h.b16 %v293
    %v2869 = vunpack.c.l.b16 %v294
    %v2870 = vunpack.c.h.b16 %v294
    %v2871 = vunpack.c.l.b16 %v295
    %v2872 = vunpack.c.h.b16 %v295
    %v2873 = vunpack.c.l.b16 %v296
    %v2874 = vunpack.c.h.b16 %v296
    %v2875 = vunpack.c.l.b16 %v297
    %v2876 = vunpack.c.h.b16 %v297
    %v2877 = vunpack.c.l.b16 %v298
    %v2878 = vunpack.c.h.b16 %v298
    %v2879 = vunpack.c.l.b16 %v299
    %v2880 = vunpack.c.h.b16 %v299
    %v2881 = vunpack.c.l.b16 %v300
    %v2882 = vunpack.c.h.b16 %v300
    %v2883 = vunpack.c.l.b16 %v301
    %v2884 = vunpack.c.h.b16 %v301
    %v2885 = vunpack.c.l.b16 %v302
    %v2886 = vunpack.c.h.b16 %v302
    %v2887 = vunpack.c.l.b16 %v303
    %v2888 = vunpack.c.h.b16 %v303
    %v2889 = vunpack.c.l.b16 %v304
    %v2890 = vunpack.c.h.b16 %v304
    %v2891 = vunpack.c.l.b16 %v305
    %v2892 = vunpack.c.h.b16 %v305
    %v2893 = vunpack.c.l.b16 %v306
    %v2894 = vunpack.c.h.b16 %v306
    %v2895 = vunpack.c.l.b16 %v307
    %v2896 = vunpack.c.h.b16 %v307
    %v2897 = vunpack.c.l.b16 %v308
    %v2898 = vunpack.c.h.b16 %v308
    %v2899 = vunpack.c.l.b16 %v309
    %v2900 = vunpack.c.h.b16 %v309
    %v2901 = vunpack.c.l.b16 %v310
    %v2902 = vunpack.c.h.b16 %v310
    %v2903 = vunpack.c.l.b16 %v311
    %v2904 = vunpack.c.h.b16 %v311
    %v2905 = vunpack.c.l.b16 %v312
    %v2906 = vunpack.c.h.b16 %v312
    %v2907 = vunpack.c.l.b16 %v313
    %v2908 = vunpack.c.h.b16 %v313
    %v2909 = vunpack.c.l.b16 %v314
    %v2910 = vunpack.c.h.b16 %v314
    %v2911 = vunpack.c.l.b16 %v315
    %v2912 = vunpack.c.h.b16 %v315
    %v2913 = vunpack.c.l.b16 %v316
    %v2914 = vunpack.c.h.b16 %v316
    %v2915 = vunpack.c.l.b16 %v317
    %v2916 = vunpack.c.h.b16 %v317
    %v2917 = vunpack.c.l.b16 %v318
    %v2918 = vunpack.c.h.b16 %v318
    %v2919 = vunpack.c.l.b16 %v319
    %v2920 = vunpack.c.h.b16 %v319
    %v2921 = vunpack.c.l.b16 %v320
    %v2922 = vunpack.c.h.b16 %v320
    %v2923 = vunpack.c.l.b16 %v321
    %v2924 = vunpack.c.h.b16 %v321
    %v2925 = vunpack.c.l.b16 %v322
    %v2926 = vunpack.c.h.b16 %v322
    %v2927 = vunpack.c.l.b16 %v323
    %v2928 = vunpack.c.h.b16 %v323
    %v2929 = vunpack.c.l.b16 %v324
    %v2930 = vunpack.c.h.b16 %v324
    %v2931 = vunpack.c.l.b16 %v325
    %v2932 = vunpack.c.h.b16 %v325
    %v2933 = vunpack.c.l.b16 %v326
    %v2934 = vunpack.c.h.b16 %v326
    %v2935 = vunpack.c.l.b16 %v327
    %v2936 = vunpack.c.h.b16 %v327
    %v2937 = vunpack.c.l.b16 %v328
    %v2938 = vunpack.c.h.b16 %v328
    %v2939 = vunpack.c.l.b16 %v329
    %v2940 = vunpack.c.h.b16 %v329
    %v2941 = vunpack.c.l.b16 %v330
    %v2942 = vunpack.c.h.b16 %v330
    %v2943 = vunpack.c.l.b16 %v331
    %v2944 = vunpack.c.h.b16 %v331
    %v2945 = vunpack.c.l.b16 %v332
    %v2946 = vunpack.c.h.b16 %v332
    %v2947 = vunpack.c.l.b16 %v333
    %v2948 = vunpack.c.h.b16 %v333
    %v2949 = vunpack.c.l.b16 %v334
    %v2950 = vunpack.c.h.b16 %v334
    %v2951 = vunpack.c.l.b16 %v335
    %v2952 = vunpack.c.h.b16 %v335
    %v2953 = vunpack.c.l.b16 %v336
    %v2954 = vunpack.c.h.b16 %v336
    %v2955 = vunpack.c.l.b16 %v337
    %v2956 = vunpack.c.h.b16 %v337
    %v2957 = vunpack.c.l.b16 %v338
    %v2958 = vunpack.c.h.b16 %v338
    %v2959 = vunpack.c.l.b16 %v339
    %v2960 = vunpack.c.h.b16 %v339
    %v2961 = vunpack.c.l.b16 %v340
    %v2962 = vunpack.c.h.b16 %v340
    %v2963 = vunpack.c.l.b16 %v341
    %v2964 = vunpack.c.h.b16 %v341
    %v2965 = vunpack.c.l.b16 %v342
    %v2966 = vunpack.c.h.b16 %v342
    %v2967 = vunpack.c.l.b16 %v343
    %v2968 = vunpack.c.h.b16 %v343
    %v2969 = vunpack.c.l.b16 %v344
    %v2970 = vunpack.c.h.b16 %v344
    %v2971 = vunpack.c.l.b16 %v345
    %v2972 = vunpack.c.h.b16 %v345
    %v2973 = vunpack.c.l.b16 %v346
    %v2974 = vunpack.c.h.b16 %v346
    %v2975 = vunpack.c.l.b16 %v347
    %v2976 = vunpack.c.h.b16 %v347
    %v2977 = vunpack.c.l.b16 %v348
    %v2978 = vunpack.c.h.b16 %v348
    %v2979 = vunpack.c.l.b16 %v349
    %v2980 = vunpack.c.h.b16 %v349
    %v2981 = vunpack.c.l.b16 %v350
    %v2982 = vunpack.c.h.b16 %v350
    %v2983 = vunpack.c.l.b16 %v351
    %v2984 = vunpack.c.h.b16 %v351
    %v2985 = vunpack.c.l.b16 %v352
    %v2986 = vunpack.c.h.b16 %v352
    %v2987 = vunpack.c.l.b16 %v353
    %v2988 = vunpack.c.h.b16 %v353
    %v2989 = vunpack.c.l.b16 %v354
    %v2990 = vunpack.c.h.b16 %v354
    %v2991 = vunpack.c.l.b16 %v355
    %v2992 = vunpack.c.h.b16 %v355
    %v2993 = vunpack.c.l.b16 %v356
    %v2994 = vunpack.c.h.b16 %v356
    %v2995 = vunpack.c.l.b16 %v357
    %v2996 = vunpack.c.h.b16 %v357
    %v2997 = vunpack.c.l.b16 %v358
    %v2998 = vunpack.c.h.b16 %v358
    %v2999 = vunpack.c.l.b16 %v359
    %v3000 = vunpack.c.h.b16 %v359
    %v3001 = vunpack.c.l.b16 %v360
    %v3002 = vunpack.c.h.b16 %v360
    %v3003 = vunpack.c.l.b16 %v361
    %v3004 = vunpack.c.h.b16 %v361
    %v3005 = vunpack.c.l.b16 %v362
    %v3006 = vunpack.c.h.b16 %v362
    %v3007 = vunpack.c.l.b16 %v363
    %v3008 = vunpack.c.h.b16 %v363
    %v3009 = vunpack.c.l.b16 %v364
    %v3010 = vunpack.c.h.b16 %v364
    %v3011 = vunpack.c.l.b16 %v365
    %v3012 = vunpack.c.h.b16 %v365
    %v3013 = vunpack.c.l.b16 %v366
    %v3014 = vunpack.c.h.b16 %v366
    %v3015 = vunpack.c.l.b16 %v367
    %v3016 = vunpack.c.h.b16 %v367
    %v3017 = vunpack.c.l.b16 %v368
    %v3018 = vunpack.c.h.b16 %v368
    %v3019 = vunpack.c.l.b16 %v369
    %v3020 = vunpack.c.h.b16 %v369
    %v3021 = vunpack.c.l.b16 %v370
    %v3022 = vunpack.c.h.b16 %v370
    %v3023 = vunpack.c.l.b16 %v371
    %v3024 = vunpack.c.h.b16 %v371
    %v3025 = vunpack.c.l.b16 %v372
    %v3026 = vunpack.c.h.b16 %v372
    %v3027 = vunpack.c.l.b16 %v373
    %v3028 = vunpack.c.h.b16 %v373
    %v3029 = vunpack.c.l.b16 %v374
    %v3030 = vunpack.c.h.b16 %v374
    %v3031 = vunpack.c.l.b16 %v375
    %v3032 = vunpack.c.h.b16 %v375
    %v3033 = vunpack.c.l.b16 %v376
    %v3034 = vunpack.c.h.b16 %v376
    %v3035 = vunpack.c.l.b16 %v377
    %v3036 = vunpack.c.h.b16 %v377
    %v3037 = vunpack.c.l.b16 %v378
    %v3038 = vunpack.c.h.b16 %v378
    %v3039 = vunpack.c.l.b16 %v379
    %v3040 = vunpack.c.h.b16 %v379
    %v3041 = vunpack.c.l.b16 %v380
    %v3042 = vunpack.c.h.b16 %v380
    %v3043 = vpack.c.b16 %v2539, %v2531
    %v3044 = vpack.c.b16 %v2540, %v2532
    %v3045 = vpack.c.b16 %v2541, %v2533
    %v3046 = vpack.c.b16 %v2542, %v2534
    %v3047 = vpack.c.b16 %v2543, %v2535
    %v3048 = vpack.c.b16 %v2544, %v2536
    %v3049 = vpack.c.b16 %v2545, %v2537
    %v3050 = vpack.c.b16 %v2546, %v2538
    %v3051 = vpack.c.b16 %v2555, %v2547
    %v3052 = vpack.c.b16 %v2556, %v2548
    %v3053 = vpack.c.b16 %v2557, %v2549
    %v3054 = vpack.c.b16 %v2558, %v2550
    %v3055 = vpack.c.b16 %v2559, %v2551
    %v3056 = vpack.c.b16 %v2560, %v2552
    %v3057 = vpack.c.b16 %v2561, %v2553
    %v3058 = vpack.c.b16 %v2562, %v2554
    %v3059 = vpack.c.b16 %v2571, %v2563
    %v3060 = vpack.c.b16 %v2572, %v2564
    %v3061 = vpack.c.b16 %v2573, %v2565
    %v3062 = vpack.c.b16 %v2574, %v2566
    %v3063 = vpack.c.b16 %v2575, %v2567
    %v3064 = vpack.c.b16 %v2576, %v2568
    %v3065 = vpack.c.b16 %v2577, %v2569
    %v3066 = vpack.c.b16 %v2578, %v2570
    %v3067 = vpack.c.b16 %v2587, %v2579
    %v3068 = vpack.c.b16 %v2588, %v2580
    %v3069 = vpack.c.b16 %v2589, %v2581
    %v3070 = vpack.c.b16 %v2590, %v2582
    %v3071 = vpack.c.b16 %v2591, %v2583
    %v3072 = vpack.c.b16 %v2592, %v2584
    %v3073 = vpack.c.b16 %v2593, %v2585
    %v3074 = vpack.c.b16 %v2594, %v2586
    %v3075 = vpack.c.b16 %v2603, %v2595
    %v3076 = vpack.c.b16 %v2604, %v2596
    %v3077 = vpack.c.b16 %v2605, %v2597
    %v3078 = vpack.c.b16 %v2606, %v2598
    %v3079 = vpack.c.b16 %v2607, %v2599
    %v3080 = vpack.c.b16 %v2608, %v2600
    %v3081 = vpack.c.b16 %v2609, %v2601
    %v3082 = vpack.c.b16 %v2610, %v2602
    %v3083 = vpack.c.b16 %v2619, %v2611
    %v3084 = vpack.c.b16 %v2620, %v2612
    %v3085 = vpack.c.b16 %v2621, %v2613
    %v3086 = vpack.c.b16 %v2622, %v2614
    %v3087 = vpack.c.b16 %v2623, %v2615
    %v3088 = vpack.c.b16 %v2624, %v2616
    %v3089 = vpack.c.b16 %v2625, %v2617
    %v3090 = vpack.c.b16 %v2626, %v2618
    %v3091 = vpack.c.b16 %v2635, %v2627
    %v3092 = vpack.c.b16 %v2636, %v2628
    %v3093 = vpack.c.b16 %v2637, %v2629
    %v3094 = vpack.c.b16 %v2638, %v2630
    %v3095 = vpack.c.b16 %v2639, %v2631
    %v3096 = vpack.c.b16 %v2640, %v2632
    %v3097 = vpack.c.b16 %v2641, %v2633
    %v3098 = vpack.c.b16 %v2642, %v2634
    %v3099 = vpack.c.b16 %v2651, %v2643
    %v3100 = vpack.c.b16 %v2652, %v2644
    %v3101 = vpack.c.b16 %v2653, %v2645
    %v3102 = vpack.c.b16 %v2654, %v2646
    %v3103 = vpack.c.b16 %v2655, %v2647
    %v3104 = vpack.c.b16 %v2656, %v2648
    %v3105 = vpack.c.b16 %v2657, %v2649
    %v3106 = vpack.c.b16 %v2658, %v2650
    %v3107 = vpack.c.b16 %v2667, %v2659
    %v3108 = vpack.c.b16 %v2668, %v2660
    %v3109 = vpack.c.b16 %v2669, %v2661
    %v3110 = vpack.c.b16 %v2670, %v2662
    %v3111 = vpack.c.b16 %v2671, %v2663
    %v3112 = vpack.c.b16 %v2672, %v2664
    %v3113 = vpack.c.b16 %v2673, %v2665
    %v3114 = vpack.c.b16 %v2674, %v2666
    %v3115 = vpack.c.b16 %v2683, %v2675
    %v3116 = vpack.c.b16 %v2684, %v2676
    %v3117 = vpack.c.b16 %v2685, %v2677
    %v3118 = vpack.c.b16 %v2686, %v2678
    %v3119 = vpack.c.b16 %v2687, %v2679
    %v3120 = vpack.c.b16 %v2688, %v2680
    %v3121 = vpack.c.b16 %v2689, %v2681
    %v3122 = vpack.c.b16 %v2690, %v2682
    %v3123 = vpack.c.b16 %v2699, %v2691
    %v3124 = vpack.c.b16 %v2700, %v2692
    %v3125 = vpack.c.b16 %v2701, %v2693
    %v3126 = vpack.c.b16 %v2702, %v2694
    %v3127 = vpack.c.b16 %v2703, %v2695
    %v3128 = vpack.c.b16 %v2704, %v2696
    %v3129 = vpack.c.b16 %v2705, %v2697
    %v3130 = vpack.c.b16 %v2706, %v2698
    %v3131 = vpack.c.b16 %v2715, %v2707
    %v3132 = vpack.c.b16 %v2716, %v2708
    %v3133 = vpack.c.b16 %v2717, %v2709
    %v3134 = vpack.c.b16 %v2718, %v2710
    %v3135 = vpack.c.b16 %v2719, %v2711
    %v3136 = vpack.c.b16 %v2720, %v2712
    %v3137 = vpack.c.b16 %v2721, %v2713
    %v3138 = vpack.c.b16 %v2722, %v2714
    %v3139 = vpack.c.b16 %v2731, %v2723
    %v3140 = vpack.c.b16 %v2732, %v2724
    %v3141 = vpack.c.b16 %v2733, %v2725
    %v3142 = vpack.c.b16 %v2734, %v2726
    %v3143 = vpack.c.b16 %v2735, %v2727
    %v3144 = vpack.c.b16 %v2736, %v2728
    %v3145 = vpack.c.b16 %v2737, %v2729
    %v3146 = vpack.c.b16 %v2738, %v2730
    %v3147 = vpack.c.b16 %v2747, %v2739
    %v3148 = vpack.c.b16 %v2748, %v2740
    %v3149 = vpack.c.b16 %v2749, %v2741
    %v3150 = vpack.c.b16 %v2750, %v2742
    %v3151 = vpack.c.b16 %v2751, %v2743
    %v3152 = vpack.c.b16 %v2752, %v2744
    %v3153 = vpack.c.b16 %v2753, %v2745
    %v3154 = vpack.c.b16 %v2754, %v2746
    %v3155 = vpack.c.b16 %v2763, %v2755
    %v3156 = vpack.c.b16 %v2764, %v2756
    %v3157 = vpack.c.b16 %v2765, %v2757
    %v3158 = vpack.c.b16 %v2766, %v2758
    %v3159 = vpack.c.b16 %v2767, %v2759
    %v3160 = vpack.c.b16 %v2768, %v2760
    %v3161 = vpack.c.b16 %v2769, %v2761
    %v3162 = vpack.c.b16 %v2770, %v2762
    %v3163 = vpack.c.b16 %v2779, %v2771
    %v3164 = vpack.c.b16 %v2780, %v2772
    %v3165 = vpack.c.b16 %v2781, %v2773
    %v3166 = vpack.c.b16 %v2782, %v2774
    %v3167 = vpack.c.b16 %v2783, %v2775
    %v3168 = vpack.c.b16 %v2784, %v2776
    %v3169 = vpack.c.b16 %v2785, %v2777
    %v3170 = vpack.c.b16 %v2786, %v2778
    %v3171 = vpack.c.b16 %v2795, %v2787
    %v3172 = vpack.c.b16 %v2796, %v2788
    %v3173 = vpack.c.b16 %v2797, %v2789
    %v3174 = vpack.c.b16 %v2798, %v2790
    %v3175 = vpack.c.b16 %v2799, %v2791
    %v3176 = vpack.c.b16 %v2800, %v2792
    %v3177 = vpack.c.b16 %v2801, %v2793
    %v3178 = vpack.c.b16 %v2802, %v2794
    %v3179 = vpack.c.b16 %v2811, %v2803
    %v3180 = vpack.c.b16 %v2812, %v2804
    %v3181 = vpack.c.b16 %v2813, %v2805
    %v3182 = vpack.c.b16 %v2814, %v2806
    %v3183 = vpack.c.b16 %v2815, %v2807
    %v3184 = vpack.c.b16 %v2816, %v2808
    %v3185 = vpack.c.b16 %v2817, %v2809
    %v3186 = vpack.c.b16 %v2818, %v2810
    %v3187 = vpack.c.b16 %v2827, %v2819
    %v3188 = vpack.c.b16 %v2828, %v2820
    %v3189 = vpack.c.b16 %v2829, %v2821
    %v3190 = vpack.c.b16 %v2830, %v2822
    %v3191 = vpack.c.b16 %v2831, %v2823
    %v3192 = vpack.c.b16 %v2832, %v2824
    %v3193 = vpack.c.b16 %v2833, %v2825
    %v3194 = vpack.c.b16 %v2834, %v2826
    %v3195 = vpack.c.b16 %v2843, %v2835
    %v3196 = vpack.c.b16 %v2844, %v2836
    %v3197 = vpack.c.b16 %v2845, %v2837
    %v3198 = vpack.c.b16 %v2846, %v2838
    %v3199 = vpack.c.b16 %v2847, %v2839
    %v3200 = vpack.c.b16 %v2848, %v2840
    %v3201 = vpack.c.b16 %v2849, %v2841
    %v3202 = vpack.c.b16 %v2850, %v2842
    %v3203 = vpack.c.b16 %v2859, %v2851
    %v3204 = vpack.c.b16 %v2860, %v2852
    %v3205 = vpack.c.b16 %v2861, %v2853
    %v3206 = vpack.c.b16 %v2862, %v2854
    %v3207 = vpack.c.b16 %v2863, %v2855
    %v3208 = vpack.c.b16 %v2864, %v2856
    %v3209 = vpack.c.b16 %v2865, %v2857
    %v3210 = vpack.c.b16 %v2866, %v2858
    %v3211 = vpack.c.b16 %v2875, %v2867
    %v3212 = vpack.c.b16 %v2876, %v2868
    %v3213 = vpack.c.b16 %v2877, %v2869
    %v3214 = vpack.c.b16 %v2878, %v2870
    %v3215 = vpack.c.b16 %v2879, %v2871
    %v3216 = vpack.c.b16 %v2880, %v2872
    %v3217 = vpack.c.b16 %v2881, %v2873
    %v3218 = vpack.c.b16 %v2882, %v2874
    %v3219 = vpack.c.b16 %v2891, %v2883
    %v3220 = vpack.c.b16 %v2892, %v2884
    %v3221 = vpack.c.b16 %v2893, %v2885
    %v3222 = vpack.c.b16 %v2894, %v2886
    %v3223 = vpack.c.b16 %v2895, %v2887
    %v3224 = vpack.c.b16 %v2896, %v2888
    %v3225 = vpack.c.b16 %v2897, %v2889
    %v3226 = vpack.c.b16 %v2898, %v2890
    %v3227 = vpack.c.b16 %v2907, %v2899
    %v3228 = vpack.c.b16 %v2908, %v2900
    %v3229 = vpack.c.b16 %v2909, %v2901
    %v3230 = vpack.c.b16 %v2910, %v2902
    %v3231 = vpack.c.b16 %v2911, %v2903
    %v3232 = vpack.c.b16 %v2912, %v2904
    %v3233 = vpack.c.b16 %v2913, %v2905
    %v3234 = vpack.c.b16 %v2914, %v2906
    %v3235 = vpack.c.b16 %v2923, %v2915
    %v3236 = vpack.c.b16 %v2924, %v2916
    %v3237 = vpack.c.b16 %v2925, %v2917
    %v3238 = vpack.c.b16 %v2926, %v2918
    %v3239 = vpack.c.b16 %v2927, %v2919
    %v3240 = vpack.c.b16 %v2928, %v2920
    %v3241 = vpack.c.b16 %v2929, %v2921
    %v3242 = vpack.c.b16 %v2930, %v2922
    %v3243 = vpack.c.b16 %v2939, %v2931
    %v3244 = vpack.c.b16 %v2940, %v2932
    %v3245 = vpack.c.b16 %v2941, %v2933
    %v3246 = vpack.c.b16 %v2942, %v2934
    %v3247 = vpack.c.b16 %v2943, %v2935
    %v3248 = vpack.c.b16 %v2944, %v2936
    %v3249 = vpack.c.b16 %v2945, %v2937
    %v3250 = vpack.c.b16 %v2946, %v2938
    %v3251 = vpack.c.b16 %v2955, %v2947
    %v3252 = vpack.c.b16 %v2956, %v2948
    %v3253 = vpack.c.b16 %v2957, %v2949
    %v3254 = vpack.c.b16 %v2958, %v2950
    %v3255 = vpack.c.b16 %v2959, %v2951
    %v3256 = vpack.c.b16 %v2960, %v2952
    %v3257 = vpack.c.b16 %v2961, %v2953
    %v3258 = vpack.c.b16 %v2962, %v2954
    %v3259 = vpack.c.b16 %v2971, %v2963
    %v3260 = vpack.c.b16 %v2972, %v2964
    %v3261 = vpack.c.b16 %v2973, %v2965
    %v3262 = vpack.c.b16 %v2974, %v2966
    %v3263 = vpack.c.b16 %v2975, %v2967
    %v3264 = vpack.c.b16 %v2976, %v2968
    %v3265 = vpack.c.b16 %v2977, %v2969
    %v3266 = vpack.c.b16 %v2978, %v2970
    %v3267 = vpack.c.b16 %v2987, %v2979
    %v3268 = vpack.c.b16 %v2988, %v2980
    %v3269 = vpack.c.b16 %v2989, %v2981
    %v3270 = vpack.c.b16 %v2990, %v2982
    %v3271 = vpack.c.b16 %v2991, %v2983
    %v3272 = vpack.c.b16 %v2992, %v2984
    %v3273 = vpack.c.b16 %v2993, %v2985
    %v3274 = vpack.c.b16 %v2994, %v2986
    %v3275 = vpack.c.b16 %v3003, %v2995
    %v3276 = vpack.c.b16 %v3004, %v2996
    %v3277 = vpack.c.b16 %v3005, %v2997
    %v3278 = vpack.c.b16 %v3006, %v2998
    %v3279 = vpack.c.b16 %v3007, %v2999
    %v3280 = vpack.c.b16 %v3008, %v3000
    %v3281 = vpack.c.b16 %v3009, %v3001
    %v3282 = vpack.c.b16 %v3010, %v3002
    %v3283 = vpack.c.b16 %v3019, %v3011
    %v3284 = vpack.c.b16 %v3020, %v3012
    %v3285 = vpack.c.b16 %v3021, %v3013
    %v3286 = vpack.c.b16 %v3022, %v3014
    %v3287 = vpack.c.b16 %v3023, %v3015
    %v3288 = vpack.c.b16 %v3024, %v3016
    %v3289 = vpack.c.b16 %v3025, %v3017
    %v3290 = vpack.c.b16 %v3026, %v3018
    %v3291 = vpack.c.b16 %v3035, %v3027
    %v3292 = vpack.c.b16 %v3036, %v3028
    %v3293 = vpack.c.b16 %v3037, %v3029
    %v3294 = vpack.c.b16 %v3038, %v3030
    %v3295 = vpack.c.b16 %v3039, %v3031
    %v3296 = vpack.c.b16 %v3040, %v3032
    %v3297 = vpack.c.b16 %v3041, %v3033
    %v3298 = vpack.c.b16 %v3042, %v3034
    %3555 = vmatprep.subr.bf16.mxu0 %v3100
    %3556 = vmatpush1.bf16.msra.mxu0 %v3099
    %3557 = vmatprep.subr.bf16.mxu0 %v3092
    %3558 = vmatpush1.bf16.msra.mxu0 %v3091
    %3559 = vmatprep.subr.bf16.mxu0 %v3084
    %3560 = vmatpush1.bf16.msra.mxu0 %v3083
    %3561 = vmatprep.subr.bf16.mxu0 %v3076
    %3562 = vmatpush1.bf16.msra.mxu0 %v3075
    %3563 = vmatprep.subr.bf16.mxu0 %v3068
    %3564 = vmatpush1.bf16.msra.mxu0 %v3067
    %3565 = vmatprep.subr.bf16.mxu0 %v3060
    %3566 = vmatpush1.bf16.msra.mxu0 %v3059
    %3567 = vmatprep.subr.bf16.mxu0 %v3052
    %3568 = vmatpush1.bf16.msra.mxu0 %v3051
    %3569 = vmatprep.subr.bf16.mxu0 %v3044
    %3570 = vmatpush1.bf16.msra.mxu0 %v3043
    %3571 = vmatprep.subr.bf16.mxu0 %v3164
    %3572 = vmatpush2.bf16.msra.mxu0 %v3163
    %3573 = vmatprep.subr.bf16.mxu0 %v3156
    %3574 = vmatpush2.bf16.msra.mxu0 %v3155
    %3575 = vmatprep.subr.bf16.mxu0 %v3148
    %3576 = vmatpush2.bf16.msra.mxu0 %v3147
    %3577 = vmatprep.subr.bf16.mxu0 %v3140
    %3578 = vmatpush2.bf16.msra.mxu0 %v3139
    %3579 = vmatprep.subr.bf16.mxu0 %v3132
    %3580 = vmatpush2.bf16.msra.mxu0 %v3131
    %3581 = vmatprep.subr.bf16.mxu0 %v3124
    %3582 = vmatpush2.bf16.msra.mxu0 %v3123
    %3583 = vmatprep.subr.bf16.mxu0 %v3116
    %3584 = vmatpush2.bf16.msra.mxu0 %v3115
    %3585 = vmatprep.subr.bf16.mxu0 %v3108
    %3586 = vmatpush2.bf16.msra.mxu0 %v3107
    %3587 = vmatprep.mubr.bf16.mxu0 %v2268
    %3588 = vmatmul.mubr.bf16.gmra.mxu0 %v2267
    %v3589 = vpop.f32.mrf.mxu0
    %v3590 = vadd.f32 %v2009, %v3589
    %v3591 = vpop.f32.mrf.mxu0
    %v3592 = vadd.f32 %v2011, %v3591
    %v3593 = vpop.f32.mrf.mxu0
    %v3594 = vpop.f32.mrf.mxu0
    %3595 = vdwg.mxu0
    %3596 = vmatprep.subr.bf16.mxu0 %v3228
    %3597 = vmatpush1.bf16.msra.mxu0 %v3227
    %3598 = vmatprep.subr.bf16.mxu0 %v3220
    %3599 = vmatpush1.bf16.msra.mxu0 %v3219
    %3600 = vmatprep.subr.bf16.mxu0 %v3212
    %3601 = vmatpush1.bf16.msra.mxu0 %v3211
    %3602 = vmatprep.subr.bf16.mxu0 %v3204
    %3603 = vmatpush1.bf16.msra.mxu0 %v3203
    %3604 = vmatprep.subr.bf16.mxu0 %v3196
    %3605 = vmatpush1.bf16.msra.mxu0 %v3195
    %3606 = vmatprep.subr.bf16.mxu0 %v3188
    %3607 = vmatpush1.bf16.msra.mxu0 %v3187
    %3608 = vmatprep.subr.bf16.mxu0 %v3180
    %3609 = vmatpush1.bf16.msra.mxu0 %v3179
    %3610 = vmatprep.subr.bf16.mxu0 %v3172
    %3611 = vmatpush1.bf16.msra.mxu0 %v3171
    %3612 = vmatprep.subr.bf16.mxu0 %v3292
    %3613 = vmatpush2.bf16.msra.mxu0 %v3291
    %3614 = vmatprep.subr.bf16.mxu0 %v3284
    %3615 = vmatpush2.bf16.msra.mxu0 %v3283
    %3616 = vmatprep.subr.bf16.mxu0 %v3276
    %3617 = vmatpush2.bf16.msra.mxu0 %v3275
    %3618 = vmatprep.subr.bf16.mxu0 %v3268
    %3619 = vmatpush2.bf16.msra.mxu0 %v3267
    %3620 = vmatprep.subr.bf16.mxu0 %v3260
    %3621 = vmatpush2.bf16.msra.mxu0 %v3259
    %3622 = vmatprep.subr.bf16.mxu0 %v3252
    %3623 = vmatpush2.bf16.msra.mxu0 %v3251
    %3624 = vmatprep.subr.bf16.mxu0 %v3244
    %3625 = vmatpush2.bf16.msra.mxu0 %v3243
    %3626 = vmatprep.subr.bf16.mxu0 %v3236
    %3627 = vmatpush2.bf16.msra.mxu0 %v3235
    %3628 = vmatprep.mubr.bf16.mxu0 %v2270
    %3629 = vmatmul.mubr.bf16.gmra.mxu0 %v2269
    %v3630 = vpop.f32.mrf.mxu0
    %v3631 = vadd.f32 %v3590, %v3630
    %v3632 = vpop.f32.mrf.mxu0
    %v3633 = vadd.f32 %v3592, %v3632
    %v3634 = vpop.f32.mrf.mxu0
    %v3635 = vpop.f32.mrf.mxu0
    %3636 = vdwg.mxu0
    %3637 = vmatprep.subr.bf16.mxu0 %v3102
    %3638 = vmatpush1.bf16.msra.mxu0 %v3101
    %3639 = vmatprep.subr.bf16.mxu0 %v3094
    %3640 = vmatpush1.bf16.msra.mxu0 %v3093
    %3641 = vmatprep.subr.bf16.mxu0 %v3086
    %3642 = vmatpush1.bf16.msra.mxu0 %v3085
    %3643 = vmatprep.subr.bf16.mxu0 %v3078
    %3644 = vmatpush1.bf16.msra.mxu0 %v3077
    %3645 = vmatprep.subr.bf16.mxu0 %v3070
    %3646 = vmatpush1.bf16.msra.mxu0 %v3069
    %3647 = vmatprep.subr.bf16.mxu0 %v3062
    %3648 = vmatpush1.bf16.msra.mxu0 %v3061
    %3649 = vmatprep.subr.bf16.mxu0 %v3054
    %3650 = vmatpush1.bf16.msra.mxu0 %v3053
    %3651 = vmatprep.subr.bf16.mxu0 %v3046
    %3652 = vmatpush1.bf16.msra.mxu0 %v3045
    %3653 = vmatprep.subr.bf16.mxu0 %v3166
    %3654 = vmatpush2.bf16.msra.mxu0 %v3165
    %3655 = vmatprep.subr.bf16.mxu0 %v3158
    %3656 = vmatpush2.bf16.msra.mxu0 %v3157
    %3657 = vmatprep.subr.bf16.mxu0 %v3150
    %3658 = vmatpush2.bf16.msra.mxu0 %v3149
    %3659 = vmatprep.subr.bf16.mxu0 %v3142
    %3660 = vmatpush2.bf16.msra.mxu0 %v3141
    %3661 = vmatprep.subr.bf16.mxu0 %v3134
    %3662 = vmatpush2.bf16.msra.mxu0 %v3133
    %3663 = vmatprep.subr.bf16.mxu0 %v3126
    %3664 = vmatpush2.bf16.msra.mxu0 %v3125
    %3665 = vmatprep.subr.bf16.mxu0 %v3118
    %3666 = vmatpush2.bf16.msra.mxu0 %v3117
    %3667 = vmatprep.subr.bf16.mxu0 %v3110
    %3668 = vmatpush2.bf16.msra.mxu0 %v3109
    %3669 = vmatprep.mubr.bf16.mxu0 %v2268
    %3670 = vmatmul.mubr.bf16.gmra.mxu0 %v2267
    %v3671 = vpop.f32.mrf.mxu0
    %v3672 = vadd.f32 %v2091, %v3671
    %v3673 = vpop.f32.mrf.mxu0
    %v3674 = vadd.f32 %v2093, %v3673
    %v3675 = vpop.f32.mrf.mxu0
    %v3676 = vpop.f32.mrf.mxu0
    %3677 = vdwg.mxu0
    %3678 = vmatprep.subr.bf16.mxu0 %v3230
    %3679 = vmatpush1.bf16.msra.mxu0 %v3229
    %3680 = vmatprep.subr.bf16.mxu0 %v3222
    %3681 = vmatpush1.bf16.msra.mxu0 %v3221
    %3682 = vmatprep.subr.bf16.mxu0 %v3214
    %3683 = vmatpush1.bf16.msra.mxu0 %v3213
    %3684 = vmatprep.subr.bf16.mxu0 %v3206
    %3685 = vmatpush1.bf16.msra.mxu0 %v3205
    %3686 = vmatprep.subr.bf16.mxu0 %v3198
    %3687 = vmatpush1.bf16.msra.mxu0 %v3197
    %3688 = vmatprep.subr.bf16.mxu0 %v3190
    %3689 = vmatpush1.bf16.msra.mxu0 %v3189
    %3690 = vmatprep.subr.bf16.mxu0 %v3182
    %3691 = vmatpush1.bf16.msra.mxu0 %v3181
    %3692 = vmatprep.subr.bf16.mxu0 %v3174
    %3693 = vmatpush1.bf16.msra.mxu0 %v3173
    %3694 = vmatprep.subr.bf16.mxu0 %v3294
    %3695 = vmatpush2.bf16.msra.mxu0 %v3293
    %3696 = vmatprep.subr.bf16.mxu0 %v3286
    %3697 = vmatpush2.bf16.msra.mxu0 %v3285
    %3698 = vmatprep.subr.bf16.mxu0 %v3278
    %3699 = vmatpush2.bf16.msra.mxu0 %v3277
    %3700 = vmatprep.subr.bf16.mxu0 %v3270
    %3701 = vmatpush2.bf16.msra.mxu0 %v3269
    %3702 = vmatprep.subr.bf16.mxu0 %v3262
    %3703 = vmatpush2.bf16.msra.mxu0 %v3261
    %3704 = vmatprep.subr.bf16.mxu0 %v3254
    %3705 = vmatpush2.bf16.msra.mxu0 %v3253
    %3706 = vmatprep.subr.bf16.mxu0 %v3246
    %3707 = vmatpush2.bf16.msra.mxu0 %v3245
    %3708 = vmatprep.subr.bf16.mxu0 %v3238
    %3709 = vmatpush2.bf16.msra.mxu0 %v3237
    %3710 = vmatprep.mubr.bf16.mxu0 %v2270
    %3711 = vmatmul.mubr.bf16.gmra.mxu0 %v2269
    %v3712 = vpop.f32.mrf.mxu0
    %v3713 = vadd.f32 %v3672, %v3712
    %v3714 = vpop.f32.mrf.mxu0
    %v3715 = vadd.f32 %v3674, %v3714
    %v3716 = vpop.f32.mrf.mxu0
    %v3717 = vpop.f32.mrf.mxu0
    %3718 = vdwg.mxu0
    %3719 = vmatprep.subr.bf16.mxu0 %v3104
    %3720 = vmatpush1.bf16.msra.mxu0 %v3103
    %3721 = vmatprep.subr.bf16.mxu0 %v3096
    %3722 = vmatpush1.bf16.msra.mxu0 %v3095
    %3723 = vmatprep.subr.bf16.mxu0 %v3088
    %3724 = vmatpush1.bf16.msra.mxu0 %v3087
    %3725 = vmatprep.subr.bf16.mxu0 %v3080
    %3726 = vmatpush1.bf16.msra.mxu0 %v3079
    %3727 = vmatprep.subr.bf16.mxu0 %v3072
    %3728 = vmatpush1.bf16.msra.mxu0 %v3071
    %3729 = vmatprep.subr.bf16.mxu0 %v3064
    %3730 = vmatpush1.bf16.msra.mxu0 %v3063
    %3731 = vmatprep.subr.bf16.mxu0 %v3056
    %3732 = vmatpush1.bf16.msra.mxu0 %v3055
    %3733 = vmatprep.subr.bf16.mxu0 %v3048
    %3734 = vmatpush1.bf16.msra.mxu0 %v3047
    %3735 = vmatprep.subr.bf16.mxu0 %v3168
    %3736 = vmatpush2.bf16.msra.mxu0 %v3167
    %3737 = vmatprep.subr.bf16.mxu0 %v3160
    %3738 = vmatpush2.bf16.msra.mxu0 %v3159
    %3739 = vmatprep.subr.bf16.mxu0 %v3152
    %3740 = vmatpush2.bf16.msra.mxu0 %v3151
    %3741 = vmatprep.subr.bf16.mxu0 %v3144
    %3742 = vmatpush2.bf16.msra.mxu0 %v3143
    %3743 = vmatprep.subr.bf16.mxu0 %v3136
    %3744 = vmatpush2.bf16.msra.mxu0 %v3135
    %3745 = vmatprep.subr.bf16.mxu0 %v3128
    %3746 = vmatpush2.bf16.msra.mxu0 %v3127
    %3747 = vmatprep.subr.bf16.mxu0 %v3120
    %3748 = vmatpush2.bf16.msra.mxu0 %v3119
    %3749 = vmatprep.subr.bf16.mxu0 %v3112
    %3750 = vmatpush2.bf16.msra.mxu0 %v3111
    %3751 = vmatprep.mubr.bf16.mxu0 %v2268
    %3752 = vmatmul.mubr.bf16.gmra.mxu0 %v2267
    %v3753 = vpop.f32.mrf.mxu0
    %v3754 = vadd.f32 %v2173, %v3753
    %v3755 = vpop.f32.mrf.mxu0
    %v3756 = vadd.f32 %v2175, %v3755
    %v3757 = vpop.f32.mrf.mxu0
    %v3758 = vpop.f32.mrf.mxu0
    %3759 = vdwg.mxu0
    %3760 = vmatprep.subr.bf16.mxu0 %v3232
    %3761 = vmatpush1.bf16.msra.mxu0 %v3231
    %3762 = vmatprep.subr.bf16.mxu0 %v3224
    %3763 = vmatpush1.bf16.msra.mxu0 %v3223
    %3764 = vmatprep.subr.bf16.mxu0 %v3216
    %3765 = vmatpush1.bf16.msra.mxu0 %v3215
    %3766 = vmatprep.subr.bf16.mxu0 %v3208
    %3767 = vmatpush1.bf16.msra.mxu0 %v3207
    %3768 = vmatprep.subr.bf16.mxu0 %v3200
    %3769 = vmatpush1.bf16.msra.mxu0 %v3199
    %3770 = vmatprep.subr.bf16.mxu0 %v3192
    %3771 = vmatpush1.bf16.msra.mxu0 %v3191
    %3772 = vmatprep.subr.bf16.mxu0 %v3184
    %3773 = vmatpush1.bf16.msra.mxu0 %v3183
    %3774 = vmatprep.subr.bf16.mxu0 %v3176
    %3775 = vmatpush1.bf16.msra.mxu0 %v3175
    %3776 = vmatprep.subr.bf16.mxu0 %v3296
    %3777 = vmatpush2.bf16.msra.mxu0 %v3295
    %3778 = vmatprep.subr.bf16.mxu0 %v3288
    %3779 = vmatpush2.bf16.msra.mxu0 %v3287
    %3780 = vmatprep.subr.bf16.mxu0 %v3280
    %3781 = vmatpush2.bf16.msra.mxu0 %v3279
    %3782 = vmatprep.subr.bf16.mxu0 %v3272
    %3783 = vmatpush2.bf16.msra.mxu0 %v3271
    %3784 = vmatprep.subr.bf16.mxu0 %v3264
    %3785 = vmatpush2.bf16.msra.mxu0 %v3263
    %3786 = vmatprep.subr.bf16.mxu0 %v3256
    %3787 = vmatpush2.bf16.msra.mxu0 %v3255
    %3788 = vmatprep.subr.bf16.mxu0 %v3248
    %3789 = vmatpush2.bf16.msra.mxu0 %v3247
    %3790 = vmatprep.subr.bf16.mxu0 %v3240
    %3791 = vmatpush2.bf16.msra.mxu0 %v3239
    %3792 = vmatprep.mubr.bf16.mxu0 %v2270
    %3793 = vmatmul.mubr.bf16.gmra.mxu0 %v2269
    %v3794 = vpop.f32.mrf.mxu0
    %v3795 = vadd.f32 %v3754, %v3794
    %v3796 = vpop.f32.mrf.mxu0
    %v3797 = vadd.f32 %v3756, %v3796
    %v3798 = vpop.f32.mrf.mxu0
    %v3799 = vpop.f32.mrf.mxu0
    %3800 = vdwg.mxu0
    %3801 = vmatprep.subr.bf16.mxu0 %v3106
    %3802 = vmatpush1.bf16.msra.mxu0 %v3105
    %3803 = vmatprep.subr.bf16.mxu0 %v3098
    %3804 = vmatpush1.bf16.msra.mxu0 %v3097
    %3805 = vmatprep.subr.bf16.mxu0 %v3090
    %3806 = vmatpush1.bf16.msra.mxu0 %v3089
    %3807 = vmatprep.subr.bf16.mxu0 %v3082
    %3808 = vmatpush1.bf16.msra.mxu0 %v3081
    %3809 = vmatprep.subr.bf16.mxu0 %v3074
    %3810 = vmatpush1.bf16.msra.mxu0 %v3073
    %3811 = vmatprep.subr.bf16.mxu0 %v3066
    %3812 = vmatpush1.bf16.msra.mxu0 %v3065
    %3813 = vmatprep.subr.bf16.mxu0 %v3058
    %3814 = vmatpush1.bf16.msra.mxu0 %v3057
    %3815 = vmatprep.subr.bf16.mxu0 %v3050
    %3816 = vmatpush1.bf16.msra.mxu0 %v3049
    %3817 = vmatprep.subr.bf16.mxu0 %v3170
    %3818 = vmatpush2.bf16.msra.mxu0 %v3169
    %3819 = vmatprep.subr.bf16.mxu0 %v3162
    %3820 = vmatpush2.bf16.msra.mxu0 %v3161
    %3821 = vmatprep.subr.bf16.mxu0 %v3154
    %3822 = vmatpush2.bf16.msra.mxu0 %v3153
    %3823 = vmatprep.subr.bf16.mxu0 %v3146
    %3824 = vmatpush2.bf16.msra.mxu0 %v3145
    %3825 = vmatprep.subr.bf16.mxu0 %v3138
    %3826 = vmatpush2.bf16.msra.mxu0 %v3137
    %3827 = vmatprep.subr.bf16.mxu0 %v3130
    %3828 = vmatpush2.bf16.msra.mxu0 %v3129
    %3829 = vmatprep.subr.bf16.mxu0 %v3122
    %3830 = vmatpush2.bf16.msra.mxu0 %v3121
    %3831 = vmatprep.subr.bf16.mxu0 %v3114
    %3832 = vmatpush2.bf16.msra.mxu0 %v3113
    %3833 = vmatprep.mubr.bf16.mxu0 %v2268
    %3834 = vmatmul.mubr.bf16.gmra.mxu0 %v2267
    %v3835 = vpop.f32.mrf.mxu0
    %v3836 = vadd.f32 %v2255, %v3835
    %v3837 = vpop.f32.mrf.mxu0
    %v3838 = vadd.f32 %v2257, %v3837
    %v3839 = vpop.f32.mrf.mxu0
    %v3840 = vpop.f32.mrf.mxu0
    %3841 = vdwg.mxu0
    %3842 = vmatprep.subr.bf16.mxu0 %v3234
    %3843 = vmatpush1.bf16.msra.mxu0 %v3233
    %3844 = vmatprep.subr.bf16.mxu0 %v3226
    %3845 = vmatpush1.bf16.msra.mxu0 %v3225
    %3846 = vmatprep.subr.bf16.mxu0 %v3218
    %3847 = vmatpush1.bf16.msra.mxu0 %v3217
    %3848 = vmatprep.subr.bf16.mxu0 %v3210
    %3849 = vmatpush1.bf16.msra.mxu0 %v3209
    %3850 = vmatprep.subr.bf16.mxu0 %v3202
    %3851 = vmatpush1.bf16.msra.mxu0 %v3201
    %3852 = vmatprep.subr.bf16.mxu0 %v3194
    %3853 = vmatpush1.bf16.msra.mxu0 %v3193
    %3854 = vmatprep.subr.bf16.mxu0 %v3186
    %3855 = vmatpush1.bf16.msra.mxu0 %v3185
    %3856 = vmatprep.subr.bf16.mxu0 %v3178
    %3857 = vmatpush1.bf16.msra.mxu0 %v3177
    %3858 = vmatprep.subr.bf16.mxu0 %v3298
    %3859 = vmatpush2.bf16.msra.mxu0 %v3297
    %3860 = vmatprep.subr.bf16.mxu0 %v3290
    %3861 = vmatpush2.bf16.msra.mxu0 %v3289
    %3862 = vmatprep.subr.bf16.mxu0 %v3282
    %3863 = vmatpush2.bf16.msra.mxu0 %v3281
    %3864 = vmatprep.subr.bf16.mxu0 %v3274
    %3865 = vmatpush2.bf16.msra.mxu0 %v3273
    %3866 = vmatprep.subr.bf16.mxu0 %v3266
    %3867 = vmatpush2.bf16.msra.mxu0 %v3265
    %3868 = vmatprep.subr.bf16.mxu0 %v3258
    %3869 = vmatpush2.bf16.msra.mxu0 %v3257
    %3870 = vmatprep.subr.bf16.mxu0 %v3250
    %3871 = vmatpush2.bf16.msra.mxu0 %v3249
    %3872 = vmatprep.subr.bf16.mxu0 %v3242
    %3873 = vmatpush2.bf16.msra.mxu0 %v3241
    %3874 = vmatprep.mubr.bf16.mxu0 %v2270
    %3875 = vmatmul.mubr.bf16.gmra.mxu0 %v2269
    %v3876 = vpop.f32.mrf.mxu0
    %v3877 = vadd.f32 %v3836, %v3876
    %v3878 = vpop.f32.mrf.mxu0
    %v3879 = vadd.f32 %v3838, %v3878
    %v3880 = vpop.f32.mrf.mxu0
    %v3881 = vpop.f32.mrf.mxu0
    %3882 = vdwg.mxu0
    %v3883 = vld [vmem:[#allocation10] sm:$0xff]
    %v3885 = vlaneseq
    %v3886 = vshrl.u32 %v3885, 7
    %v3887 = vsub.s32 0, %v3886
    %v3888 = vrot.slane %v3883, %v3887
    %v3889 = vlaneseq
    %v3890 = vshrl.u32 %v3889, 7
    %v3891 = vsub.s32 1, %v3890
    %v3892 = vrot.slane %v3883, %v3891
    %v3893 = vlaneseq
    %v3894 = vshrl.u32 %v3893, 7
    %v3895 = vsub.s32 2, %v3894
    %v3896 = vrot.slane %v3883, %v3895
    %v3897 = vlaneseq
    %v3898 = vshrl.u32 %v3897, 7
    %v3899 = vsub.s32 3, %v3898
    %v3900 = vrot.slane %v3883, %v3899
    %v3901 = vlaneseq
    %v3902 = vshrl.u32 %v3901, 7
    %v3903 = vsub.s32 4, %v3902
    %v3904 = vrot.slane %v3883, %v3903
    %v3905 = vlaneseq
    %v3906 = vshrl.u32 %v3905, 7
    %v3907 = vsub.s32 5, %v3906
    %v3908 = vrot.slane %v3883, %v3907
    %v3909 = vlaneseq
    %v3910 = vshrl.u32 %v3909, 7
    %v3911 = vsub.s32 6, %v3910
    %v3912 = vrot.slane %v3883, %v3911
    %v3913 = vlaneseq
    %v3914 = vshrl.u32 %v3913, 7
    %v3915 = vsub.s32 7, %v3914
    %v3916 = vrot.slane %v3883, %v3915
    %v3925 = vadd.f32 %v3631, %v3888
    %v3926 = vadd.f32 %v3633, %v3892
    %v3927 = vadd.f32 %v3713, %v3896
    %v3928 = vadd.f32 %v3715, %v3900
    %v3929 = vadd.f32 %v3795, %v3904
    %v3930 = vadd.f32 %v3797, %v3908
    %v3931 = vadd.f32 %v3877, %v3912
    %v3932 = vadd.f32 %v3879, %v3916
    %v3933 = vmax.f32 %v3925, 0.0
    %v3934 = vmax.f32 %v3926, 0.0
    %v3935 = vmax.f32 %v3927, 0.0
    %v3936 = vmax.f32 %v3928, 0.0
    %v3937 = vmax.f32 %v3929, 0.0
    %v3938 = vmax.f32 %v3930, 0.0
    %v3939 = vmax.f32 %v3931, 0.0
    %v3940 = vmax.f32 %v3932, 0.0
    %v3941 = vpack.c.bf16 %v3933, %v3933
    %v3942 = vpack.c.bf16 %v3934, %v3934
    %v3943 = vpack.c.bf16 %v3935, %v3935
    %v3944 = vpack.c.bf16 %v3936, %v3936
    %v3945 = vpack.c.bf16 %v3937, %v3937
    %v3946 = vpack.c.bf16 %v3938, %v3938
    %v3947 = vpack.c.bf16 %v3939, %v3939
    %v3948 = vpack.c.bf16 %v3940, %v3940
    %v3949 = vld [vmem:[#allocation11] sm:$0xff]
    %v3950 = vld [vmem:[#allocation11 + $0x8] sm:$0xff]
    %v3951 = vld [vmem:[#allocation11 + $0x10] sm:$0xff]
    %v3952 = vld [vmem:[#allocation11 + $0x18] sm:$0xff]
    %v3953 = vld [vmem:[#allocation11 + $0x20] sm:$0xff]
    %v3954 = vld [vmem:[#allocation11 + $0x28] sm:$0xff]
    %v3955 = vld [vmem:[#allocation11 + $0x30] sm:$0xff]
    %v3956 = vld [vmem:[#allocation11 + $0x38] sm:$0xff]
    %v3957 = vld [vmem:[#allocation11 + $0x40] sm:$0xff]
    %v3958 = vld [vmem:[#allocation11 + $0x48] sm:$0xff]
    %v3959 = vld [vmem:[#allocation11 + $0x50] sm:$0xff]
    %v3960 = vld [vmem:[#allocation11 + $0x58] sm:$0xff]
    %v3961 = vld [vmem:[#allocation11 + $0x60] sm:$0xff]
    %v3962 = vld [vmem:[#allocation11 + $0x68] sm:$0xff]
    %v3963 = vld [vmem:[#allocation11 + $0x70] sm:$0xff]
    %v3964 = vld [vmem:[#allocation11 + $0x78] sm:$0xff]
    %v3965 = vld [vmem:[#allocation11 + $0x80] sm:$0xff]
    %v3966 = vld [vmem:[#allocation11 + $0x88] sm:$0xff]
    %v3967 = vld [vmem:[#allocation11 + $0x90] sm:$0xff]
    %v3968 = vld [vmem:[#allocation11 + $0x98] sm:$0xff]
    %v3969 = vld [vmem:[#allocation11 + $0xa0] sm:$0xff]
    %v3970 = vld [vmem:[#allocation11 + $0xa8] sm:$0xff]
    %v3971 = vld [vmem:[#allocation11 + $0xb0] sm:$0xff]
    %v3972 = vld [vmem:[#allocation11 + $0xb8] sm:$0xff]
    %v3973 = vld [vmem:[#allocation11 + $0xc0] sm:$0xff]
    %v3974 = vld [vmem:[#allocation11 + $0xc8] sm:$0xff]
    %v3975 = vld [vmem:[#allocation11 + $0xd0] sm:$0xff]
    %v3976 = vld [vmem:[#allocation11 + $0xd8] sm:$0xff]
    %v3977 = vld [vmem:[#allocation11 + $0xe0] sm:$0xff]
    %v3978 = vld [vmem:[#allocation11 + $0xe8] sm:$0xff]
    %v3979 = vld [vmem:[#allocation11 + $0xf0] sm:$0xff]
    %v3980 = vld [vmem:[#allocation11 + $0xf8] sm:$0xff]
    %v3981 = vld [vmem:[#allocation11 + $0x100] sm:$0xff]
    %v3982 = vld [vmem:[#allocation11 + $0x108] sm:$0xff]
    %v3983 = vld [vmem:[#allocation11 + $0x110] sm:$0xff]
    %v3984 = vld [vmem:[#allocation11 + $0x118] sm:$0xff]
    %v3985 = vld [vmem:[#allocation11 + $0x120] sm:$0xff]
    %v3986 = vld [vmem:[#allocation11 + $0x128] sm:$0xff]
    %v3987 = vld [vmem:[#allocation11 + $0x130] sm:$0xff]
    %v3988 = vld [vmem:[#allocation11 + $0x138] sm:$0xff]
    %v3989 = vld [vmem:[#allocation11 + $0x140] sm:$0xff]
    %v3990 = vld [vmem:[#allocation11 + $0x148] sm:$0xff]
    %v3991 = vld [vmem:[#allocation11 + $0x150] sm:$0xff]
    %v3992 = vld [vmem:[#allocation11 + $0x158] sm:$0xff]
    %v3993 = vld [vmem:[#allocation11 + $0x160] sm:$0xff]
    %v3994 = vld [vmem:[#allocation11 + $0x168] sm:$0xff]
    %v3995 = vld [vmem:[#allocation11 + $0x170] sm:$0xff]
    %v3996 = vld [vmem:[#allocation11 + $0x178] sm:$0xff]
    %v3997 = vld [vmem:[#allocation11 + $0x180] sm:$0xff]
    %v3998 = vld [vmem:[#allocation11 + $0x188] sm:$0xff]
    %v3999 = vld [vmem:[#allocation11 + $0x190] sm:$0xff]
    %v4000 = vld [vmem:[#allocation11 + $0x198] sm:$0xff]
    %v4001 = vld [vmem:[#allocation11 + $0x1a0] sm:$0xff]
    %v4002 = vld [vmem:[#allocation11 + $0x1a8] sm:$0xff]
    %v4003 = vld [vmem:[#allocation11 + $0x1b0] sm:$0xff]
    %v4004 = vld [vmem:[#allocation11 + $0x1b8] sm:$0xff]
    %v4005 = vld [vmem:[#allocation11 + $0x1c0] sm:$0xff]
    %v4006 = vld [vmem:[#allocation11 + $0x1c8] sm:$0xff]
    %v4007 = vld [vmem:[#allocation11 + $0x1d0] sm:$0xff]
    %v4008 = vld [vmem:[#allocation11 + $0x1d8] sm:$0xff]
    %v4009 = vld [vmem:[#allocation11 + $0x1e0] sm:$0xff]
    %v4010 = vld [vmem:[#allocation11 + $0x1e8] sm:$0xff]
    %v4011 = vld [vmem:[#allocation11 + $0x1f0] sm:$0xff]
    %v4012 = vld [vmem:[#allocation11 + $0x1f8] sm:$0xff]
    %v4013 = vld [vmem:[#allocation11 + $0x200] sm:$0xff]
    %v4014 = vld [vmem:[#allocation11 + $0x208] sm:$0xff]
    %v4015 = vld [vmem:[#allocation11 + $0x210] sm:$0xff]
    %v4016 = vld [vmem:[#allocation11 + $0x218] sm:$0xff]
    %v4017 = vld [vmem:[#allocation11 + $0x220] sm:$0xff]
    %v4018 = vld [vmem:[#allocation11 + $0x228] sm:$0xff]
    %v4019 = vld [vmem:[#allocation11 + $0x230] sm:$0xff]
    %v4020 = vld [vmem:[#allocation11 + $0x238] sm:$0xff]
    %v4021 = vld [vmem:[#allocation11 + $0x240] sm:$0xff]
    %v4022 = vld [vmem:[#allocation11 + $0x248] sm:$0xff]
    %v4023 = vld [vmem:[#allocation11 + $0x250] sm:$0xff]
    %v4024 = vld [vmem:[#allocation11 + $0x258] sm:$0xff]
    %v4025 = vld [vmem:[#allocation11 + $0x260] sm:$0xff]
    %v4026 = vld [vmem:[#allocation11 + $0x268] sm:$0xff]
    %v4027 = vld [vmem:[#allocation11 + $0x270] sm:$0xff]
    %v4028 = vld [vmem:[#allocation11 + $0x278] sm:$0xff]
    %v4029 = vld [vmem:[#allocation11 + $0x280] sm:$0xff]
    %v4030 = vld [vmem:[#allocation11 + $0x288] sm:$0xff]
    %v4031 = vld [vmem:[#allocation11 + $0x290] sm:$0xff]
    %v4032 = vld [vmem:[#allocation11 + $0x298] sm:$0xff]
    %v4033 = vld [vmem:[#allocation11 + $0x2a0] sm:$0xff]
    %v4034 = vld [vmem:[#allocation11 + $0x2a8] sm:$0xff]
    %v4035 = vld [vmem:[#allocation11 + $0x2b0] sm:$0xff]
    %v4036 = vld [vmem:[#allocation11 + $0x2b8] sm:$0xff]
    %v4037 = vld [vmem:[#allocation11 + $0x2c0] sm:$0xff]
    %v4038 = vld [vmem:[#allocation11 + $0x2c8] sm:$0xff]
    %v4039 = vld [vmem:[#allocation11 + $0x2d0] sm:$0xff]
    %v4040 = vld [vmem:[#allocation11 + $0x2d8] sm:$0xff]
    %v4041 = vld [vmem:[#allocation11 + $0x2e0] sm:$0xff]
    %v4042 = vld [vmem:[#allocation11 + $0x2e8] sm:$0xff]
    %v4043 = vld [vmem:[#allocation11 + $0x2f0] sm:$0xff]
    %v4044 = vld [vmem:[#allocation11 + $0x2f8] sm:$0xff]
    %v4045 = vld [vmem:[#allocation11 + $0x300] sm:$0xff]
    %v4046 = vld [vmem:[#allocation11 + $0x308] sm:$0xff]
    %v4047 = vld [vmem:[#allocation11 + $0x310] sm:$0xff]
    %v4048 = vld [vmem:[#allocation11 + $0x318] sm:$0xff]
    %v4049 = vld [vmem:[#allocation11 + $0x320] sm:$0xff]
    %v4050 = vld [vmem:[#allocation11 + $0x328] sm:$0xff]
    %v4051 = vld [vmem:[#allocation11 + $0x330] sm:$0xff]
    %v4052 = vld [vmem:[#allocation11 + $0x338] sm:$0xff]
    %v4053 = vld [vmem:[#allocation11 + $0x340] sm:$0xff]
    %v4054 = vld [vmem:[#allocation11 + $0x348] sm:$0xff]
    %v4055 = vld [vmem:[#allocation11 + $0x350] sm:$0xff]
    %v4056 = vld [vmem:[#allocation11 + $0x358] sm:$0xff]
    %v4057 = vld [vmem:[#allocation11 + $0x360] sm:$0xff]
    %v4058 = vld [vmem:[#allocation11 + $0x368] sm:$0xff]
    %v4059 = vld [vmem:[#allocation11 + $0x370] sm:$0xff]
    %v4060 = vld [vmem:[#allocation11 + $0x378] sm:$0xff]
    %v4061 = vld [vmem:[#allocation11 + $0x380] sm:$0xff]
    %v4062 = vld [vmem:[#allocation11 + $0x388] sm:$0xff]
    %v4063 = vld [vmem:[#allocation11 + $0x390] sm:$0xff]
    %v4064 = vld [vmem:[#allocation11 + $0x398] sm:$0xff]
    %v4065 = vld [vmem:[#allocation11 + $0x3a0] sm:$0xff]
    %v4066 = vld [vmem:[#allocation11 + $0x3a8] sm:$0xff]
    %v4067 = vld [vmem:[#allocation11 + $0x3b0] sm:$0xff]
    %v4068 = vld [vmem:[#allocation11 + $0x3b8] sm:$0xff]
    %v4069 = vld [vmem:[#allocation11 + $0x3c0] sm:$0xff]
    %v4070 = vld [vmem:[#allocation11 + $0x3c8] sm:$0xff]
    %v4071 = vld [vmem:[#allocation11 + $0x3d0] sm:$0xff]
    %v4072 = vld [vmem:[#allocation11 + $0x3d8] sm:$0xff]
    %v4073 = vld [vmem:[#allocation11 + $0x3e0] sm:$0xff]
    %v4074 = vld [vmem:[#allocation11 + $0x3e8] sm:$0xff]
    %v4075 = vld [vmem:[#allocation11 + $0x3f0] sm:$0xff]
    %v4076 = vld [vmem:[#allocation11 + $0x3f8] sm:$0xff]
    %v4077 = vld [vmem:[#allocation11 + $0x400] sm:$0xff]
    %v4078 = vld [vmem:[#allocation11 + $0x408] sm:$0xff]
    %v4079 = vld [vmem:[#allocation11 + $0x410] sm:$0xff]
    %v4080 = vld [vmem:[#allocation11 + $0x418] sm:$0xff]
    %v4081 = vld [vmem:[#allocation11 + $0x420] sm:$0xff]
    %v4082 = vld [vmem:[#allocation11 + $0x428] sm:$0xff]
    %v4083 = vld [vmem:[#allocation11 + $0x430] sm:$0xff]
    %v4084 = vld [vmem:[#allocation11 + $0x438] sm:$0xff]
    %v4085 = vld [vmem:[#allocation11 + $0x440] sm:$0xff]
    %v4086 = vld [vmem:[#allocation11 + $0x448] sm:$0xff]
    %v4087 = vld [vmem:[#allocation11 + $0x450] sm:$0xff]
    %v4088 = vld [vmem:[#allocation11 + $0x458] sm:$0xff]
    %v4089 = vld [vmem:[#allocation11 + $0x460] sm:$0xff]
    %v4090 = vld [vmem:[#allocation11 + $0x468] sm:$0xff]
    %v4091 = vld [vmem:[#allocation11 + $0x470] sm:$0xff]
    %v4092 = vld [vmem:[#allocation11 + $0x478] sm:$0xff]
    %v4093 = vld [vmem:[#allocation11 + $0x480] sm:$0xff]
    %v4094 = vld [vmem:[#allocation11 + $0x488] sm:$0xff]
    %v4095 = vld [vmem:[#allocation11 + $0x490] sm:$0xff]
    %v4096 = vld [vmem:[#allocation11 + $0x498] sm:$0xff]
    %v4097 = vld [vmem:[#allocation11 + $0x4a0] sm:$0xff]
    %v4098 = vld [vmem:[#allocation11 + $0x4a8] sm:$0xff]
    %v4099 = vld [vmem:[#allocation11 + $0x4b0] sm:$0xff]
    %v4100 = vld [vmem:[#allocation11 + $0x4b8] sm:$0xff]
    %v4101 = vld [vmem:[#allocation11 + $0x4c0] sm:$0xff]
    %v4102 = vld [vmem:[#allocation11 + $0x4c8] sm:$0xff]
    %v4103 = vld [vmem:[#allocation11 + $0x4d0] sm:$0xff]
    %v4104 = vld [vmem:[#allocation11 + $0x4d8] sm:$0xff]
    %v4105 = vld [vmem:[#allocation11 + $0x4e0] sm:$0xff]
    %v4106 = vld [vmem:[#allocation11 + $0x4e8] sm:$0xff]
    %v4107 = vld [vmem:[#allocation11 + $0x4f0] sm:$0xff]
    %v4108 = vld [vmem:[#allocation11 + $0x4f8] sm:$0xff]
    %v4109 = vld [vmem:[#allocation11 + $0x500] sm:$0xff]
    %v4110 = vld [vmem:[#allocation11 + $0x508] sm:$0xff]
    %v4111 = vld [vmem:[#allocation11 + $0x510] sm:$0xff]
    %v4112 = vld [vmem:[#allocation11 + $0x518] sm:$0xff]
    %v4113 = vld [vmem:[#allocation11 + $0x520] sm:$0xff]
    %v4114 = vld [vmem:[#allocation11 + $0x528] sm:$0xff]
    %v4115 = vld [vmem:[#allocation11 + $0x530] sm:$0xff]
    %v4116 = vld [vmem:[#allocation11 + $0x538] sm:$0xff]
    %v4117 = vld [vmem:[#allocation11 + $0x540] sm:$0xff]
    %v4118 = vld [vmem:[#allocation11 + $0x548] sm:$0xff]
    %v4119 = vld [vmem:[#allocation11 + $0x550] sm:$0xff]
    %v4120 = vld [vmem:[#allocation11 + $0x558] sm:$0xff]
    %v4121 = vld [vmem:[#allocation11 + $0x560] sm:$0xff]
    %v4122 = vld [vmem:[#allocation11 + $0x568] sm:$0xff]
    %v4123 = vld [vmem:[#allocation11 + $0x570] sm:$0xff]
    %v4124 = vld [vmem:[#allocation11 + $0x578] sm:$0xff]
    %v4125 = vld [vmem:[#allocation11 + $0x580] sm:$0xff]
    %v4126 = vld [vmem:[#allocation11 + $0x588] sm:$0xff]
    %v4127 = vld [vmem:[#allocation11 + $0x590] sm:$0xff]
    %v4128 = vld [vmem:[#allocation11 + $0x598] sm:$0xff]
    %v4129 = vld [vmem:[#allocation11 + $0x5a0] sm:$0xff]
    %v4130 = vld [vmem:[#allocation11 + $0x5a8] sm:$0xff]
    %v4131 = vld [vmem:[#allocation11 + $0x5b0] sm:$0xff]
    %v4132 = vld [vmem:[#allocation11 + $0x5b8] sm:$0xff]
    %v4133 = vld [vmem:[#allocation11 + $0x5c0] sm:$0xff]
    %v4134 = vld [vmem:[#allocation11 + $0x5c8] sm:$0xff]
    %v4135 = vld [vmem:[#allocation11 + $0x5d0] sm:$0xff]
    %v4136 = vld [vmem:[#allocation11 + $0x5d8] sm:$0xff]
    %v4137 = vld [vmem:[#allocation11 + $0x5e0] sm:$0xff]
    %v4138 = vld [vmem:[#allocation11 + $0x5e8] sm:$0xff]
    %v4139 = vld [vmem:[#allocation11 + $0x5f0] sm:$0xff]
    %v4140 = vld [vmem:[#allocation11 + $0x5f8] sm:$0xff]
    %v4141 = vld [vmem:[#allocation11 + $0x600] sm:$0xff]
    %v4142 = vld [vmem:[#allocation11 + $0x608] sm:$0xff]
    %v4143 = vld [vmem:[#allocation11 + $0x610] sm:$0xff]
    %v4144 = vld [vmem:[#allocation11 + $0x618] sm:$0xff]
    %v4145 = vld [vmem:[#allocation11 + $0x620] sm:$0xff]
    %v4146 = vld [vmem:[#allocation11 + $0x628] sm:$0xff]
    %v4147 = vld [vmem:[#allocation11 + $0x630] sm:$0xff]
    %v4148 = vld [vmem:[#allocation11 + $0x638] sm:$0xff]
    %v4149 = vld [vmem:[#allocation11 + $0x640] sm:$0xff]
    %v4150 = vld [vmem:[#allocation11 + $0x648] sm:$0xff]
    %v4151 = vld [vmem:[#allocation11 + $0x650] sm:$0xff]
    %v4152 = vld [vmem:[#allocation11 + $0x658] sm:$0xff]
    %v4153 = vld [vmem:[#allocation11 + $0x660] sm:$0xff]
    %v4154 = vld [vmem:[#allocation11 + $0x668] sm:$0xff]
    %v4155 = vld [vmem:[#allocation11 + $0x670] sm:$0xff]
    %v4156 = vld [vmem:[#allocation11 + $0x678] sm:$0xff]
    %v4157 = vld [vmem:[#allocation11 + $0x680] sm:$0xff]
    %v4158 = vld [vmem:[#allocation11 + $0x688] sm:$0xff]
    %v4159 = vld [vmem:[#allocation11 + $0x690] sm:$0xff]
    %v4160 = vld [vmem:[#allocation11 + $0x698] sm:$0xff]
    %v4161 = vld [vmem:[#allocation11 + $0x6a0] sm:$0xff]
    %v4162 = vld [vmem:[#allocation11 + $0x6a8] sm:$0xff]
    %v4163 = vld [vmem:[#allocation11 + $0x6b0] sm:$0xff]
    %v4164 = vld [vmem:[#allocation11 + $0x6b8] sm:$0xff]
    %v4165 = vld [vmem:[#allocation11 + $0x6c0] sm:$0xff]
    %v4166 = vld [vmem:[#allocation11 + $0x6c8] sm:$0xff]
    %v4167 = vld [vmem:[#allocation11 + $0x6d0] sm:$0xff]
    %v4168 = vld [vmem:[#allocation11 + $0x6d8] sm:$0xff]
    %v4169 = vld [vmem:[#allocation11 + $0x6e0] sm:$0xff]
    %v4170 = vld [vmem:[#allocation11 + $0x6e8] sm:$0xff]
    %v4171 = vld [vmem:[#allocation11 + $0x6f0] sm:$0xff]
    %v4172 = vld [vmem:[#allocation11 + $0x6f8] sm:$0xff]
    %v4173 = vld [vmem:[#allocation11 + $0x700] sm:$0xff]
    %v4174 = vld [vmem:[#allocation11 + $0x708] sm:$0xff]
    %v4175 = vld [vmem:[#allocation11 + $0x710] sm:$0xff]
    %v4176 = vld [vmem:[#allocation11 + $0x718] sm:$0xff]
    %v4177 = vld [vmem:[#allocation11 + $0x720] sm:$0xff]
    %v4178 = vld [vmem:[#allocation11 + $0x728] sm:$0xff]
    %v4179 = vld [vmem:[#allocation11 + $0x730] sm:$0xff]
    %v4180 = vld [vmem:[#allocation11 + $0x738] sm:$0xff]
    %v4181 = vld [vmem:[#allocation11 + $0x740] sm:$0xff]
    %v4182 = vld [vmem:[#allocation11 + $0x748] sm:$0xff]
    %v4183 = vld [vmem:[#allocation11 + $0x750] sm:$0xff]
    %v4184 = vld [vmem:[#allocation11 + $0x758] sm:$0xff]
    %v4185 = vld [vmem:[#allocation11 + $0x760] sm:$0xff]
    %v4186 = vld [vmem:[#allocation11 + $0x768] sm:$0xff]
    %v4187 = vld [vmem:[#allocation11 + $0x770] sm:$0xff]
    %v4188 = vld [vmem:[#allocation11 + $0x778] sm:$0xff]
    %v4189 = vld [vmem:[#allocation11 + $0x780] sm:$0xff]
    %v4190 = vld [vmem:[#allocation11 + $0x788] sm:$0xff]
    %v4191 = vld [vmem:[#allocation11 + $0x790] sm:$0xff]
    %v4192 = vld [vmem:[#allocation11 + $0x798] sm:$0xff]
    %v4193 = vld [vmem:[#allocation11 + $0x7a0] sm:$0xff]
    %v4194 = vld [vmem:[#allocation11 + $0x7a8] sm:$0xff]
    %v4195 = vld [vmem:[#allocation11 + $0x7b0] sm:$0xff]
    %v4196 = vld [vmem:[#allocation11 + $0x7b8] sm:$0xff]
    %v4197 = vld [vmem:[#allocation11 + $0x7c0] sm:$0xff]
    %v4198 = vld [vmem:[#allocation11 + $0x7c8] sm:$0xff]
    %v4199 = vld [vmem:[#allocation11 + $0x7d0] sm:$0xff]
    %v4200 = vld [vmem:[#allocation11 + $0x7d8] sm:$0xff]
    %v4201 = vld [vmem:[#allocation11 + $0x7e0] sm:$0xff]
    %v4202 = vld [vmem:[#allocation11 + $0x7e8] sm:$0xff]
    %v4203 = vld [vmem:[#allocation11 + $0x7f0] sm:$0xff]
    %v4204 = vld [vmem:[#allocation11 + $0x7f8] sm:$0xff]
    %v4205 = vld [vmem:[%s6] sm:$0xf]
    %v4207 = vlaneseq
    %v4208 = vshrl.u32 %v4207, 7
    %v4209 = vsub.s32 0, %v4208
    %v4210 = vrot.slane %v4205, %v4209
    %v4211 = vlaneseq
    %v4212 = vshrl.u32 %v4211, 7
    %v4213 = vsub.s32 1, %v4212
    %v4214 = vrot.slane %v4205, %v4213
    %v4215 = vlaneseq
    %v4216 = vshrl.u32 %v4215, 7
    %v4217 = vsub.s32 2, %v4216
    %v4218 = vrot.slane %v4205, %v4217
    %v4219 = vlaneseq
    %v4220 = vshrl.u32 %v4219, 7
    %v4221 = vsub.s32 3, %v4220
    %v4222 = vrot.slane %v4205, %v4221
    %v4483 = vunpack.c.l.b16 %v3949
    %v4484 = vunpack.c.h.b16 %v3949
    %v4485 = vunpack.c.l.b16 %v3950
    %v4486 = vunpack.c.h.b16 %v3950
    %v4487 = vunpack.c.l.b16 %v3951
    %v4488 = vunpack.c.h.b16 %v3951
    %v4489 = vunpack.c.l.b16 %v3952
    %v4490 = vunpack.c.h.b16 %v3952
    %v4491 = vunpack.c.l.b16 %v3953
    %v4492 = vunpack.c.h.b16 %v3953
    %v4493 = vunpack.c.l.b16 %v3954
    %v4494 = vunpack.c.h.b16 %v3954
    %v4495 = vunpack.c.l.b16 %v3955
    %v4496 = vunpack.c.h.b16 %v3955
    %v4497 = vunpack.c.l.b16 %v3956
    %v4498 = vunpack.c.h.b16 %v3956
    %v4499 = vunpack.c.l.b16 %v3957
    %v4500 = vunpack.c.h.b16 %v3957
    %v4501 = vunpack.c.l.b16 %v3958
    %v4502 = vunpack.c.h.b16 %v3958
    %v4503 = vunpack.c.l.b16 %v3959
    %v4504 = vunpack.c.h.b16 %v3959
    %v4505 = vunpack.c.l.b16 %v3960
    %v4506 = vunpack.c.h.b16 %v3960
    %v4507 = vunpack.c.l.b16 %v3961
    %v4508 = vunpack.c.h.b16 %v3961
    %v4509 = vunpack.c.l.b16 %v3962
    %v4510 = vunpack.c.h.b16 %v3962
    %v4511 = vunpack.c.l.b16 %v3963
    %v4512 = vunpack.c.h.b16 %v3963
    %v4513 = vunpack.c.l.b16 %v3964
    %v4514 = vunpack.c.h.b16 %v3964
    %v4515 = vunpack.c.l.b16 %v3965
    %v4516 = vunpack.c.h.b16 %v3965
    %v4517 = vunpack.c.l.b16 %v3966
    %v4518 = vunpack.c.h.b16 %v3966
    %v4519 = vunpack.c.l.b16 %v3967
    %v4520 = vunpack.c.h.b16 %v3967
    %v4521 = vunpack.c.l.b16 %v3968
    %v4522 = vunpack.c.h.b16 %v3968
    %v4523 = vunpack.c.l.b16 %v3969
    %v4524 = vunpack.c.h.b16 %v3969
    %v4525 = vunpack.c.l.b16 %v3970
    %v4526 = vunpack.c.h.b16 %v3970
    %v4527 = vunpack.c.l.b16 %v3971
    %v4528 = vunpack.c.h.b16 %v3971
    %v4529 = vunpack.c.l.b16 %v3972
    %v4530 = vunpack.c.h.b16 %v3972
    %v4531 = vunpack.c.l.b16 %v3973
    %v4532 = vunpack.c.h.b16 %v3973
    %v4533 = vunpack.c.l.b16 %v3974
    %v4534 = vunpack.c.h.b16 %v3974
    %v4535 = vunpack.c.l.b16 %v3975
    %v4536 = vunpack.c.h.b16 %v3975
    %v4537 = vunpack.c.l.b16 %v3976
    %v4538 = vunpack.c.h.b16 %v3976
    %v4539 = vunpack.c.l.b16 %v3977
    %v4540 = vunpack.c.h.b16 %v3977
    %v4541 = vunpack.c.l.b16 %v3978
    %v4542 = vunpack.c.h.b16 %v3978
    %v4543 = vunpack.c.l.b16 %v3979
    %v4544 = vunpack.c.h.b16 %v3979
    %v4545 = vunpack.c.l.b16 %v3980
    %v4546 = vunpack.c.h.b16 %v3980
    %v4547 = vunpack.c.l.b16 %v3981
    %v4548 = vunpack.c.h.b16 %v3981
    %v4549 = vunpack.c.l.b16 %v3982
    %v4550 = vunpack.c.h.b16 %v3982
    %v4551 = vunpack.c.l.b16 %v3983
    %v4552 = vunpack.c.h.b16 %v3983
    %v4553 = vunpack.c.l.b16 %v3984
    %v4554 = vunpack.c.h.b16 %v3984
    %v4555 = vunpack.c.l.b16 %v3985
    %v4556 = vunpack.c.h.b16 %v3985
    %v4557 = vunpack.c.l.b16 %v3986
    %v4558 = vunpack.c.h.b16 %v3986
    %v4559 = vunpack.c.l.b16 %v3987
    %v4560 = vunpack.c.h.b16 %v3987
    %v4561 = vunpack.c.l.b16 %v3988
    %v4562 = vunpack.c.h.b16 %v3988
    %v4563 = vunpack.c.l.b16 %v3989
    %v4564 = vunpack.c.h.b16 %v3989
    %v4565 = vunpack.c.l.b16 %v3990
    %v4566 = vunpack.c.h.b16 %v3990
    %v4567 = vunpack.c.l.b16 %v3991
    %v4568 = vunpack.c.h.b16 %v3991
    %v4569 = vunpack.c.l.b16 %v3992
    %v4570 = vunpack.c.h.b16 %v3992
    %v4571 = vunpack.c.l.b16 %v3993
    %v4572 = vunpack.c.h.b16 %v3993
    %v4573 = vunpack.c.l.b16 %v3994
    %v4574 = vunpack.c.h.b16 %v3994
    %v4575 = vunpack.c.l.b16 %v3995
    %v4576 = vunpack.c.h.b16 %v3995
    %v4577 = vunpack.c.l.b16 %v3996
    %v4578 = vunpack.c.h.b16 %v3996
    %v4579 = vunpack.c.l.b16 %v3997
    %v4580 = vunpack.c.h.b16 %v3997
    %v4581 = vunpack.c.l.b16 %v3998
    %v4582 = vunpack.c.h.b16 %v3998
    %v4583 = vunpack.c.l.b16 %v3999
    %v4584 = vunpack.c.h.b16 %v3999
    %v4585 = vunpack.c.l.b16 %v4000
    %v4586 = vunpack.c.h.b16 %v4000
    %v4587 = vunpack.c.l.b16 %v4001
    %v4588 = vunpack.c.h.b16 %v4001
    %v4589 = vunpack.c.l.b16 %v4002
    %v4590 = vunpack.c.h.b16 %v4002
    %v4591 = vunpack.c.l.b16 %v4003
    %v4592 = vunpack.c.h.b16 %v4003
    %v4593 = vunpack.c.l.b16 %v4004
    %v4594 = vunpack.c.h.b16 %v4004
    %v4595 = vunpack.c.l.b16 %v4005
    %v4596 = vunpack.c.h.b16 %v4005
    %v4597 = vunpack.c.l.b16 %v4006
    %v4598 = vunpack.c.h.b16 %v4006
    %v4599 = vunpack.c.l.b16 %v4007
    %v4600 = vunpack.c.h.b16 %v4007
    %v4601 = vunpack.c.l.b16 %v4008
    %v4602 = vunpack.c.h.b16 %v4008
    %v4603 = vunpack.c.l.b16 %v4009
    %v4604 = vunpack.c.h.b16 %v4009
    %v4605 = vunpack.c.l.b16 %v4010
    %v4606 = vunpack.c.h.b16 %v4010
    %v4607 = vunpack.c.l.b16 %v4011
    %v4608 = vunpack.c.h.b16 %v4011
    %v4609 = vunpack.c.l.b16 %v4012
    %v4610 = vunpack.c.h.b16 %v4012
    %v4611 = vunpack.c.l.b16 %v4013
    %v4612 = vunpack.c.h.b16 %v4013
    %v4613 = vunpack.c.l.b16 %v4014
    %v4614 = vunpack.c.h.b16 %v4014
    %v4615 = vunpack.c.l.b16 %v4015
    %v4616 = vunpack.c.h.b16 %v4015
    %v4617 = vunpack.c.l.b16 %v4016
    %v4618 = vunpack.c.h.b16 %v4016
    %v4619 = vunpack.c.l.b16 %v4017
    %v4620 = vunpack.c.h.b16 %v4017
    %v4621 = vunpack.c.l.b16 %v4018
    %v4622 = vunpack.c.h.b16 %v4018
    %v4623 = vunpack.c.l.b16 %v4019
    %v4624 = vunpack.c.h.b16 %v4019
    %v4625 = vunpack.c.l.b16 %v4020
    %v4626 = vunpack.c.h.b16 %v4020
    %v4627 = vunpack.c.l.b16 %v4021
    %v4628 = vunpack.c.h.b16 %v4021
    %v4629 = vunpack.c.l.b16 %v4022
    %v4630 = vunpack.c.h.b16 %v4022
    %v4631 = vunpack.c.l.b16 %v4023
    %v4632 = vunpack.c.h.b16 %v4023
    %v4633 = vunpack.c.l.b16 %v4024
    %v4634 = vunpack.c.h.b16 %v4024
    %v4635 = vunpack.c.l.b16 %v4025
    %v4636 = vunpack.c.h.b16 %v4025
    %v4637 = vunpack.c.l.b16 %v4026
    %v4638 = vunpack.c.h.b16 %v4026
    %v4639 = vunpack.c.l.b16 %v4027
    %v4640 = vunpack.c.h.b16 %v4027
    %v4641 = vunpack.c.l.b16 %v4028
    %v4642 = vunpack.c.h.b16 %v4028
    %v4643 = vunpack.c.l.b16 %v4029
    %v4644 = vunpack.c.h.b16 %v4029
    %v4645 = vunpack.c.l.b16 %v4030
    %v4646 = vunpack.c.h.b16 %v4030
    %v4647 = vunpack.c.l.b16 %v4031
    %v4648 = vunpack.c.h.b16 %v4031
    %v4649 = vunpack.c.l.b16 %v4032
    %v4650 = vunpack.c.h.b16 %v4032
    %v4651 = vunpack.c.l.b16 %v4033
    %v4652 = vunpack.c.h.b16 %v4033
    %v4653 = vunpack.c.l.b16 %v4034
    %v4654 = vunpack.c.h.b16 %v4034
    %v4655 = vunpack.c.l.b16 %v4035
    %v4656 = vunpack.c.h.b16 %v4035
    %v4657 = vunpack.c.l.b16 %v4036
    %v4658 = vunpack.c.h.b16 %v4036
    %v4659 = vunpack.c.l.b16 %v4037
    %v4660 = vunpack.c.h.b16 %v4037
    %v4661 = vunpack.c.l.b16 %v4038
    %v4662 = vunpack.c.h.b16 %v4038
    %v4663 = vunpack.c.l.b16 %v4039
    %v4664 = vunpack.c.h.b16 %v4039
    %v4665 = vunpack.c.l.b16 %v4040
    %v4666 = vunpack.c.h.b16 %v4040
    %v4667 = vunpack.c.l.b16 %v4041
    %v4668 = vunpack.c.h.b16 %v4041
    %v4669 = vunpack.c.l.b16 %v4042
    %v4670 = vunpack.c.h.b16 %v4042
    %v4671 = vunpack.c.l.b16 %v4043
    %v4672 = vunpack.c.h.b16 %v4043
    %v4673 = vunpack.c.l.b16 %v4044
    %v4674 = vunpack.c.h.b16 %v4044
    %v4675 = vunpack.c.l.b16 %v4045
    %v4676 = vunpack.c.h.b16 %v4045
    %v4677 = vunpack.c.l.b16 %v4046
    %v4678 = vunpack.c.h.b16 %v4046
    %v4679 = vunpack.c.l.b16 %v4047
    %v4680 = vunpack.c.h.b16 %v4047
    %v4681 = vunpack.c.l.b16 %v4048
    %v4682 = vunpack.c.h.b16 %v4048
    %v4683 = vunpack.c.l.b16 %v4049
    %v4684 = vunpack.c.h.b16 %v4049
    %v4685 = vunpack.c.l.b16 %v4050
    %v4686 = vunpack.c.h.b16 %v4050
    %v4687 = vunpack.c.l.b16 %v4051
    %v4688 = vunpack.c.h.b16 %v4051
    %v4689 = vunpack.c.l.b16 %v4052
    %v4690 = vunpack.c.h.b16 %v4052
    %v4691 = vunpack.c.l.b16 %v4053
    %v4692 = vunpack.c.h.b16 %v4053
    %v4693 = vunpack.c.l.b16 %v4054
    %v4694 = vunpack.c.h.b16 %v4054
    %v4695 = vunpack.c.l.b16 %v4055
    %v4696 = vunpack.c.h.b16 %v4055
    %v4697 = vunpack.c.l.b16 %v4056
    %v4698 = vunpack.c.h.b16 %v4056
    %v4699 = vunpack.c.l.b16 %v4057
    %v4700 = vunpack.c.h.b16 %v4057
    %v4701 = vunpack.c.l.b16 %v4058
    %v4702 = vunpack.c.h.b16 %v4058
    %v4703 = vunpack.c.l.b16 %v4059
    %v4704 = vunpack.c.h.b16 %v4059
    %v4705 = vunpack.c.l.b16 %v4060
    %v4706 = vunpack.c.h.b16 %v4060
    %v4707 = vunpack.c.l.b16 %v4061
    %v4708 = vunpack.c.h.b16 %v4061
    %v4709 = vunpack.c.l.b16 %v4062
    %v4710 = vunpack.c.h.b16 %v4062
    %v4711 = vunpack.c.l.b16 %v4063
    %v4712 = vunpack.c.h.b16 %v4063
    %v4713 = vunpack.c.l.b16 %v4064
    %v4714 = vunpack.c.h.b16 %v4064
    %v4715 = vunpack.c.l.b16 %v4065
    %v4716 = vunpack.c.h.b16 %v4065
    %v4717 = vunpack.c.l.b16 %v4066
    %v4718 = vunpack.c.h.b16 %v4066
    %v4719 = vunpack.c.l.b16 %v4067
    %v4720 = vunpack.c.h.b16 %v4067
    %v4721 = vunpack.c.l.b16 %v4068
    %v4722 = vunpack.c.h.b16 %v4068
    %v4723 = vunpack.c.l.b16 %v4069
    %v4724 = vunpack.c.h.b16 %v4069
    %v4725 = vunpack.c.l.b16 %v4070
    %v4726 = vunpack.c.h.b16 %v4070
    %v4727 = vunpack.c.l.b16 %v4071
    %v4728 = vunpack.c.h.b16 %v4071
    %v4729 = vunpack.c.l.b16 %v4072
    %v4730 = vunpack.c.h.b16 %v4072
    %v4731 = vunpack.c.l.b16 %v4073
    %v4732 = vunpack.c.h.b16 %v4073
    %v4733 = vunpack.c.l.b16 %v4074
    %v4734 = vunpack.c.h.b16 %v4074
    %v4735 = vunpack.c.l.b16 %v4075
    %v4736 = vunpack.c.h.b16 %v4075
    %v4737 = vunpack.c.l.b16 %v4076
    %v4738 = vunpack.c.h.b16 %v4076
    %v4739 = vunpack.c.l.b16 %v4077
    %v4740 = vunpack.c.h.b16 %v4077
    %v4741 = vunpack.c.l.b16 %v4078
    %v4742 = vunpack.c.h.b16 %v4078
    %v4743 = vunpack.c.l.b16 %v4079
    %v4744 = vunpack.c.h.b16 %v4079
    %v4745 = vunpack.c.l.b16 %v4080
    %v4746 = vunpack.c.h.b16 %v4080
    %v4747 = vunpack.c.l.b16 %v4081
    %v4748 = vunpack.c.h.b16 %v4081
    %v4749 = vunpack.c.l.b16 %v4082
    %v4750 = vunpack.c.h.b16 %v4082
    %v4751 = vunpack.c.l.b16 %v4083
    %v4752 = vunpack.c.h.b16 %v4083
    %v4753 = vunpack.c.l.b16 %v4084
    %v4754 = vunpack.c.h.b16 %v4084
    %v4755 = vunpack.c.l.b16 %v4085
    %v4756 = vunpack.c.h.b16 %v4085
    %v4757 = vunpack.c.l.b16 %v4086
    %v4758 = vunpack.c.h.b16 %v4086
    %v4759 = vunpack.c.l.b16 %v4087
    %v4760 = vunpack.c.h.b16 %v4087
    %v4761 = vunpack.c.l.b16 %v4088
    %v4762 = vunpack.c.h.b16 %v4088
    %v4763 = vunpack.c.l.b16 %v4089
    %v4764 = vunpack.c.h.b16 %v4089
    %v4765 = vunpack.c.l.b16 %v4090
    %v4766 = vunpack.c.h.b16 %v4090
    %v4767 = vunpack.c.l.b16 %v4091
    %v4768 = vunpack.c.h.b16 %v4091
    %v4769 = vunpack.c.l.b16 %v4092
    %v4770 = vunpack.c.h.b16 %v4092
    %v4771 = vunpack.c.l.b16 %v4093
    %v4772 = vunpack.c.h.b16 %v4093
    %v4773 = vunpack.c.l.b16 %v4094
    %v4774 = vunpack.c.h.b16 %v4094
    %v4775 = vunpack.c.l.b16 %v4095
    %v4776 = vunpack.c.h.b16 %v4095
    %v4777 = vunpack.c.l.b16 %v4096
    %v4778 = vunpack.c.h.b16 %v4096
    %v4779 = vunpack.c.l.b16 %v4097
    %v4780 = vunpack.c.h.b16 %v4097
    %v4781 = vunpack.c.l.b16 %v4098
    %v4782 = vunpack.c.h.b16 %v4098
    %v4783 = vunpack.c.l.b16 %v4099
    %v4784 = vunpack.c.h.b16 %v4099
    %v4785 = vunpack.c.l.b16 %v4100
    %v4786 = vunpack.c.h.b16 %v4100
    %v4787 = vunpack.c.l.b16 %v4101
    %v4788 = vunpack.c.h.b16 %v4101
    %v4789 = vunpack.c.l.b16 %v4102
    %v4790 = vunpack.c.h.b16 %v4102
    %v4791 = vunpack.c.l.b16 %v4103
    %v4792 = vunpack.c.h.b16 %v4103
    %v4793 = vunpack.c.l.b16 %v4104
    %v4794 = vunpack.c.h.b16 %v4104
    %v4795 = vunpack.c.l.b16 %v4105
    %v4796 = vunpack.c.h.b16 %v4105
    %v4797 = vunpack.c.l.b16 %v4106
    %v4798 = vunpack.c.h.b16 %v4106
    %v4799 = vunpack.c.l.b16 %v4107
    %v4800 = vunpack.c.h.b16 %v4107
    %v4801 = vunpack.c.l.b16 %v4108
    %v4802 = vunpack.c.h.b16 %v4108
    %v4803 = vunpack.c.l.b16 %v4109
    %v4804 = vunpack.c.h.b16 %v4109
    %v4805 = vunpack.c.l.b16 %v4110
    %v4806 = vunpack.c.h.b16 %v4110
    %v4807 = vunpack.c.l.b16 %v4111
    %v4808 = vunpack.c.h.b16 %v4111
    %v4809 = vunpack.c.l.b16 %v4112
    %v4810 = vunpack.c.h.b16 %v4112
    %v4811 = vunpack.c.l.b16 %v4113
    %v4812 = vunpack.c.h.b16 %v4113
    %v4813 = vunpack.c.l.b16 %v4114
    %v4814 = vunpack.c.h.b16 %v4114
    %v4815 = vunpack.c.l.b16 %v4115
    %v4816 = vunpack.c.h.b16 %v4115
    %v4817 = vunpack.c.l.b16 %v4116
    %v4818 = vunpack.c.h.b16 %v4116
    %v4819 = vunpack.c.l.b16 %v4117
    %v4820 = vunpack.c.h.b16 %v4117
    %v4821 = vunpack.c.l.b16 %v4118
    %v4822 = vunpack.c.h.b16 %v4118
    %v4823 = vunpack.c.l.b16 %v4119
    %v4824 = vunpack.c.h.b16 %v4119
    %v4825 = vunpack.c.l.b16 %v4120
    %v4826 = vunpack.c.h.b16 %v4120
    %v4827 = vunpack.c.l.b16 %v4121
    %v4828 = vunpack.c.h.b16 %v4121
    %v4829 = vunpack.c.l.b16 %v4122
    %v4830 = vunpack.c.h.b16 %v4122
    %v4831 = vunpack.c.l.b16 %v4123
    %v4832 = vunpack.c.h.b16 %v4123
    %v4833 = vunpack.c.l.b16 %v4124
    %v4834 = vunpack.c.h.b16 %v4124
    %v4835 = vunpack.c.l.b16 %v4125
    %v4836 = vunpack.c.h.b16 %v4125
    %v4837 = vunpack.c.l.b16 %v4126
    %v4838 = vunpack.c.h.b16 %v4126
    %v4839 = vunpack.c.l.b16 %v4127
    %v4840 = vunpack.c.h.b16 %v4127
    %v4841 = vunpack.c.l.b16 %v4128
    %v4842 = vunpack.c.h.b16 %v4128
    %v4843 = vunpack.c.l.b16 %v4129
    %v4844 = vunpack.c.h.b16 %v4129
    %v4845 = vunpack.c.l.b16 %v4130
    %v4846 = vunpack.c.h.b16 %v4130
    %v4847 = vunpack.c.l.b16 %v4131
    %v4848 = vunpack.c.h.b16 %v4131
    %v4849 = vunpack.c.l.b16 %v4132
    %v4850 = vunpack.c.h.b16 %v4132
    %v4851 = vunpack.c.l.b16 %v4133
    %v4852 = vunpack.c.h.b16 %v4133
    %v4853 = vunpack.c.l.b16 %v4134
    %v4854 = vunpack.c.h.b16 %v4134
    %v4855 = vunpack.c.l.b16 %v4135
    %v4856 = vunpack.c.h.b16 %v4135
    %v4857 = vunpack.c.l.b16 %v4136
    %v4858 = vunpack.c.h.b16 %v4136
    %v4859 = vunpack.c.l.b16 %v4137
    %v4860 = vunpack.c.h.b16 %v4137
    %v4861 = vunpack.c.l.b16 %v4138
    %v4862 = vunpack.c.h.b16 %v4138
    %v4863 = vunpack.c.l.b16 %v4139
    %v4864 = vunpack.c.h.b16 %v4139
    %v4865 = vunpack.c.l.b16 %v4140
    %v4866 = vunpack.c.h.b16 %v4140
    %v4867 = vunpack.c.l.b16 %v4141
    %v4868 = vunpack.c.h.b16 %v4141
    %v4869 = vunpack.c.l.b16 %v4142
    %v4870 = vunpack.c.h.b16 %v4142
    %v4871 = vunpack.c.l.b16 %v4143
    %v4872 = vunpack.c.h.b16 %v4143
    %v4873 = vunpack.c.l.b16 %v4144
    %v4874 = vunpack.c.h.b16 %v4144
    %v4875 = vunpack.c.l.b16 %v4145
    %v4876 = vunpack.c.h.b16 %v4145
    %v4877 = vunpack.c.l.b16 %v4146
    %v4878 = vunpack.c.h.b16 %v4146
    %v4879 = vunpack.c.l.b16 %v4147
    %v4880 = vunpack.c.h.b16 %v4147
    %v4881 = vunpack.c.l.b16 %v4148
    %v4882 = vunpack.c.h.b16 %v4148
    %v4883 = vunpack.c.l.b16 %v4149
    %v4884 = vunpack.c.h.b16 %v4149
    %v4885 = vunpack.c.l.b16 %v4150
    %v4886 = vunpack.c.h.b16 %v4150
    %v4887 = vunpack.c.l.b16 %v4151
    %v4888 = vunpack.c.h.b16 %v4151
    %v4889 = vunpack.c.l.b16 %v4152
    %v4890 = vunpack.c.h.b16 %v4152
    %v4891 = vunpack.c.l.b16 %v4153
    %v4892 = vunpack.c.h.b16 %v4153
    %v4893 = vunpack.c.l.b16 %v4154
    %v4894 = vunpack.c.h.b16 %v4154
    %v4895 = vunpack.c.l.b16 %v4155
    %v4896 = vunpack.c.h.b16 %v4155
    %v4897 = vunpack.c.l.b16 %v4156
    %v4898 = vunpack.c.h.b16 %v4156
    %v4899 = vunpack.c.l.b16 %v4157
    %v4900 = vunpack.c.h.b16 %v4157
    %v4901 = vunpack.c.l.b16 %v4158
    %v4902 = vunpack.c.h.b16 %v4158
    %v4903 = vunpack.c.l.b16 %v4159
    %v4904 = vunpack.c.h.b16 %v4159
    %v4905 = vunpack.c.l.b16 %v4160
    %v4906 = vunpack.c.h.b16 %v4160
    %v4907 = vunpack.c.l.b16 %v4161
    %v4908 = vunpack.c.h.b16 %v4161
    %v4909 = vunpack.c.l.b16 %v4162
    %v4910 = vunpack.c.h.b16 %v4162
    %v4911 = vunpack.c.l.b16 %v4163
    %v4912 = vunpack.c.h.b16 %v4163
    %v4913 = vunpack.c.l.b16 %v4164
    %v4914 = vunpack.c.h.b16 %v4164
    %v4915 = vunpack.c.l.b16 %v4165
    %v4916 = vunpack.c.h.b16 %v4165
    %v4917 = vunpack.c.l.b16 %v4166
    %v4918 = vunpack.c.h.b16 %v4166
    %v4919 = vunpack.c.l.b16 %v4167
    %v4920 = vunpack.c.h.b16 %v4167
    %v4921 = vunpack.c.l.b16 %v4168
    %v4922 = vunpack.c.h.b16 %v4168
    %v4923 = vunpack.c.l.b16 %v4169
    %v4924 = vunpack.c.h.b16 %v4169
    %v4925 = vunpack.c.l.b16 %v4170
    %v4926 = vunpack.c.h.b16 %v4170
    %v4927 = vunpack.c.l.b16 %v4171
    %v4928 = vunpack.c.h.b16 %v4171
    %v4929 = vunpack.c.l.b16 %v4172
    %v4930 = vunpack.c.h.b16 %v4172
    %v4931 = vunpack.c.l.b16 %v4173
    %v4932 = vunpack.c.h.b16 %v4173
    %v4933 = vunpack.c.l.b16 %v4174
    %v4934 = vunpack.c.h.b16 %v4174
    %v4935 = vunpack.c.l.b16 %v4175
    %v4936 = vunpack.c.h.b16 %v4175
    %v4937 = vunpack.c.l.b16 %v4176
    %v4938 = vunpack.c.h.b16 %v4176
    %v4939 = vunpack.c.l.b16 %v4177
    %v4940 = vunpack.c.h.b16 %v4177
    %v4941 = vunpack.c.l.b16 %v4178
    %v4942 = vunpack.c.h.b16 %v4178
    %v4943 = vunpack.c.l.b16 %v4179
    %v4944 = vunpack.c.h.b16 %v4179
    %v4945 = vunpack.c.l.b16 %v4180
    %v4946 = vunpack.c.h.b16 %v4180
    %v4947 = vunpack.c.l.b16 %v4181
    %v4948 = vunpack.c.h.b16 %v4181
    %v4949 = vunpack.c.l.b16 %v4182
    %v4950 = vunpack.c.h.b16 %v4182
    %v4951 = vunpack.c.l.b16 %v4183
    %v4952 = vunpack.c.h.b16 %v4183
    %v4953 = vunpack.c.l.b16 %v4184
    %v4954 = vunpack.c.h.b16 %v4184
    %v4955 = vunpack.c.l.b16 %v4185
    %v4956 = vunpack.c.h.b16 %v4185
    %v4957 = vunpack.c.l.b16 %v4186
    %v4958 = vunpack.c.h.b16 %v4186
    %v4959 = vunpack.c.l.b16 %v4187
    %v4960 = vunpack.c.h.b16 %v4187
    %v4961 = vunpack.c.l.b16 %v4188
    %v4962 = vunpack.c.h.b16 %v4188
    %v4963 = vunpack.c.l.b16 %v4189
    %v4964 = vunpack.c.h.b16 %v4189
    %v4965 = vunpack.c.l.b16 %v4190
    %v4966 = vunpack.c.h.b16 %v4190
    %v4967 = vunpack.c.l.b16 %v4191
    %v4968 = vunpack.c.h.b16 %v4191
    %v4969 = vunpack.c.l.b16 %v4192
    %v4970 = vunpack.c.h.b16 %v4192
    %v4971 = vunpack.c.l.b16 %v4193
    %v4972 = vunpack.c.h.b16 %v4193
    %v4973 = vunpack.c.l.b16 %v4194
    %v4974 = vunpack.c.h.b16 %v4194
    %v4975 = vunpack.c.l.b16 %v4195
    %v4976 = vunpack.c.h.b16 %v4195
    %v4977 = vunpack.c.l.b16 %v4196
    %v4978 = vunpack.c.h.b16 %v4196
    %v4979 = vunpack.c.l.b16 %v4197
    %v4980 = vunpack.c.h.b16 %v4197
    %v4981 = vunpack.c.l.b16 %v4198
    %v4982 = vunpack.c.h.b16 %v4198
    %v4983 = vunpack.c.l.b16 %v4199
    %v4984 = vunpack.c.h.b16 %v4199
    %v4985 = vunpack.c.l.b16 %v4200
    %v4986 = vunpack.c.h.b16 %v4200
    %v4987 = vunpack.c.l.b16 %v4201
    %v4988 = vunpack.c.h.b16 %v4201
    %v4989 = vunpack.c.l.b16 %v4202
    %v4990 = vunpack.c.h.b16 %v4202
    %v4991 = vunpack.c.l.b16 %v4203
    %v4992 = vunpack.c.h.b16 %v4203
    %v4993 = vunpack.c.l.b16 %v4204
    %v4994 = vunpack.c.h.b16 %v4204
    %v4995 = vpack.c.b16 %v4487, %v4483
    %v4996 = vpack.c.b16 %v4488, %v4484
    %v4997 = vpack.c.b16 %v4489, %v4485
    %v4998 = vpack.c.b16 %v4490, %v4486
    %v4999 = vpack.c.b16 %v4495, %v4491
    %v5000 = vpack.c.b16 %v4496, %v4492
    %v5001 = vpack.c.b16 %v4497, %v4493
    %v5002 = vpack.c.b16 %v4498, %v4494
    %v5003 = vpack.c.b16 %v4503, %v4499
    %v5004 = vpack.c.b16 %v4504, %v4500
    %v5005 = vpack.c.b16 %v4505, %v4501
    %v5006 = vpack.c.b16 %v4506, %v4502
    %v5007 = vpack.c.b16 %v4511, %v4507
    %v5008 = vpack.c.b16 %v4512, %v4508
    %v5009 = vpack.c.b16 %v4513, %v4509
    %v5010 = vpack.c.b16 %v4514, %v4510
    %v5011 = vpack.c.b16 %v4519, %v4515
    %v5012 = vpack.c.b16 %v4520, %v4516
    %v5013 = vpack.c.b16 %v4521, %v4517
    %v5014 = vpack.c.b16 %v4522, %v4518
    %v5015 = vpack.c.b16 %v4527, %v4523
    %v5016 = vpack.c.b16 %v4528, %v4524
    %v5017 = vpack.c.b16 %v4529, %v4525
    %v5018 = vpack.c.b16 %v4530, %v4526
    %v5019 = vpack.c.b16 %v4535, %v4531
    %v5020 = vpack.c.b16 %v4536, %v4532
    %v5021 = vpack.c.b16 %v4537, %v4533
    %v5022 = vpack.c.b16 %v4538, %v4534
    %v5023 = vpack.c.b16 %v4543, %v4539
    %v5024 = vpack.c.b16 %v4544, %v4540
    %v5025 = vpack.c.b16 %v4545, %v4541
    %v5026 = vpack.c.b16 %v4546, %v4542
    %v5027 = vpack.c.b16 %v4551, %v4547
    %v5028 = vpack.c.b16 %v4552, %v4548
    %v5029 = vpack.c.b16 %v4553, %v4549
    %v5030 = vpack.c.b16 %v4554, %v4550
    %v5031 = vpack.c.b16 %v4559, %v4555
    %v5032 = vpack.c.b16 %v4560, %v4556
    %v5033 = vpack.c.b16 %v4561, %v4557
    %v5034 = vpack.c.b16 %v4562, %v4558
    %v5035 = vpack.c.b16 %v4567, %v4563
    %v5036 = vpack.c.b16 %v4568, %v4564
    %v5037 = vpack.c.b16 %v4569, %v4565
    %v5038 = vpack.c.b16 %v4570, %v4566
    %v5039 = vpack.c.b16 %v4575, %v4571
    %v5040 = vpack.c.b16 %v4576, %v4572
    %v5041 = vpack.c.b16 %v4577, %v4573
    %v5042 = vpack.c.b16 %v4578, %v4574
    %v5043 = vpack.c.b16 %v4583, %v4579
    %v5044 = vpack.c.b16 %v4584, %v4580
    %v5045 = vpack.c.b16 %v4585, %v4581
    %v5046 = vpack.c.b16 %v4586, %v4582
    %v5047 = vpack.c.b16 %v4591, %v4587
    %v5048 = vpack.c.b16 %v4592, %v4588
    %v5049 = vpack.c.b16 %v4593, %v4589
    %v5050 = vpack.c.b16 %v4594, %v4590
    %v5051 = vpack.c.b16 %v4599, %v4595
    %v5052 = vpack.c.b16 %v4600, %v4596
    %v5053 = vpack.c.b16 %v4601, %v4597
    %v5054 = vpack.c.b16 %v4602, %v4598
    %v5055 = vpack.c.b16 %v4607, %v4603
    %v5056 = vpack.c.b16 %v4608, %v4604
    %v5057 = vpack.c.b16 %v4609, %v4605
    %v5058 = vpack.c.b16 %v4610, %v4606
    %v5059 = vpack.c.b16 %v4615, %v4611
    %v5060 = vpack.c.b16 %v4616, %v4612
    %v5061 = vpack.c.b16 %v4617, %v4613
    %v5062 = vpack.c.b16 %v4618, %v4614
    %v5063 = vpack.c.b16 %v4623, %v4619
    %v5064 = vpack.c.b16 %v4624, %v4620
    %v5065 = vpack.c.b16 %v4625, %v4621
    %v5066 = vpack.c.b16 %v4626, %v4622
    %v5067 = vpack.c.b16 %v4631, %v4627
    %v5068 = vpack.c.b16 %v4632, %v4628
    %v5069 = vpack.c.b16 %v4633, %v4629
    %v5070 = vpack.c.b16 %v4634, %v4630
    %v5071 = vpack.c.b16 %v4639, %v4635
    %v5072 = vpack.c.b16 %v4640, %v4636
    %v5073 = vpack.c.b16 %v4641, %v4637
    %v5074 = vpack.c.b16 %v4642, %v4638
    %v5075 = vpack.c.b16 %v4647, %v4643
    %v5076 = vpack.c.b16 %v4648, %v4644
    %v5077 = vpack.c.b16 %v4649, %v4645
    %v5078 = vpack.c.b16 %v4650, %v4646
    %v5079 = vpack.c.b16 %v4655, %v4651
    %v5080 = vpack.c.b16 %v4656, %v4652
    %v5081 = vpack.c.b16 %v4657, %v4653
    %v5082 = vpack.c.b16 %v4658, %v4654
    %v5083 = vpack.c.b16 %v4663, %v4659
    %v5084 = vpack.c.b16 %v4664, %v4660
    %v5085 = vpack.c.b16 %v4665, %v4661
    %v5086 = vpack.c.b16 %v4666, %v4662
    %v5087 = vpack.c.b16 %v4671, %v4667
    %v5088 = vpack.c.b16 %v4672, %v4668
    %v5089 = vpack.c.b16 %v4673, %v4669
    %v5090 = vpack.c.b16 %v4674, %v4670
    %v5091 = vpack.c.b16 %v4679, %v4675
    %v5092 = vpack.c.b16 %v4680, %v4676
    %v5093 = vpack.c.b16 %v4681, %v4677
    %v5094 = vpack.c.b16 %v4682, %v4678
    %v5095 = vpack.c.b16 %v4687, %v4683
    %v5096 = vpack.c.b16 %v4688, %v4684
    %v5097 = vpack.c.b16 %v4689, %v4685
    %v5098 = vpack.c.b16 %v4690, %v4686
    %v5099 = vpack.c.b16 %v4695, %v4691
    %v5100 = vpack.c.b16 %v4696, %v4692
    %v5101 = vpack.c.b16 %v4697, %v4693
    %v5102 = vpack.c.b16 %v4698, %v4694
    %v5103 = vpack.c.b16 %v4703, %v4699
    %v5104 = vpack.c.b16 %v4704, %v4700
    %v5105 = vpack.c.b16 %v4705, %v4701
    %v5106 = vpack.c.b16 %v4706, %v4702
    %v5107 = vpack.c.b16 %v4711, %v4707
    %v5108 = vpack.c.b16 %v4712, %v4708
    %v5109 = vpack.c.b16 %v4713, %v4709
    %v5110 = vpack.c.b16 %v4714, %v4710
    %v5111 = vpack.c.b16 %v4719, %v4715
    %v5112 = vpack.c.b16 %v4720, %v4716
    %v5113 = vpack.c.b16 %v4721, %v4717
    %v5114 = vpack.c.b16 %v4722, %v4718
    %v5115 = vpack.c.b16 %v4727, %v4723
    %v5116 = vpack.c.b16 %v4728, %v4724
    %v5117 = vpack.c.b16 %v4729, %v4725
    %v5118 = vpack.c.b16 %v4730, %v4726
    %v5119 = vpack.c.b16 %v4735, %v4731
    %v5120 = vpack.c.b16 %v4736, %v4732
    %v5121 = vpack.c.b16 %v4737, %v4733
    %v5122 = vpack.c.b16 %v4738, %v4734
    %v5123 = vpack.c.b16 %v4743, %v4739
    %v5124 = vpack.c.b16 %v4744, %v4740
    %v5125 = vpack.c.b16 %v4745, %v4741
    %v5126 = vpack.c.b16 %v4746, %v4742
    %v5127 = vpack.c.b16 %v4751, %v4747
    %v5128 = vpack.c.b16 %v4752, %v4748
    %v5129 = vpack.c.b16 %v4753, %v4749
    %v5130 = vpack.c.b16 %v4754, %v4750
    %v5131 = vpack.c.b16 %v4759, %v4755
    %v5132 = vpack.c.b16 %v4760, %v4756
    %v5133 = vpack.c.b16 %v4761, %v4757
    %v5134 = vpack.c.b16 %v4762, %v4758
    %v5135 = vpack.c.b16 %v4767, %v4763
    %v5136 = vpack.c.b16 %v4768, %v4764
    %v5137 = vpack.c.b16 %v4769, %v4765
    %v5138 = vpack.c.b16 %v4770, %v4766
    %v5139 = vpack.c.b16 %v4775, %v4771
    %v5140 = vpack.c.b16 %v4776, %v4772
    %v5141 = vpack.c.b16 %v4777, %v4773
    %v5142 = vpack.c.b16 %v4778, %v4774
    %v5143 = vpack.c.b16 %v4783, %v4779
    %v5144 = vpack.c.b16 %v4784, %v4780
    %v5145 = vpack.c.b16 %v4785, %v4781
    %v5146 = vpack.c.b16 %v4786, %v4782
    %v5147 = vpack.c.b16 %v4791, %v4787
    %v5148 = vpack.c.b16 %v4792, %v4788
    %v5149 = vpack.c.b16 %v4793, %v4789
    %v5150 = vpack.c.b16 %v4794, %v4790
    %v5151 = vpack.c.b16 %v4799, %v4795
    %v5152 = vpack.c.b16 %v4800, %v4796
    %v5153 = vpack.c.b16 %v4801, %v4797
    %v5154 = vpack.c.b16 %v4802, %v4798
    %v5155 = vpack.c.b16 %v4807, %v4803
    %v5156 = vpack.c.b16 %v4808, %v4804
    %v5157 = vpack.c.b16 %v4809, %v4805
    %v5158 = vpack.c.b16 %v4810, %v4806
    %v5159 = vpack.c.b16 %v4815, %v4811
    %v5160 = vpack.c.b16 %v4816, %v4812
    %v5161 = vpack.c.b16 %v4817, %v4813
    %v5162 = vpack.c.b16 %v4818, %v4814
    %v5163 = vpack.c.b16 %v4823, %v4819
    %v5164 = vpack.c.b16 %v4824, %v4820
    %v5165 = vpack.c.b16 %v4825, %v4821
    %v5166 = vpack.c.b16 %v4826, %v4822
    %v5167 = vpack.c.b16 %v4831, %v4827
    %v5168 = vpack.c.b16 %v4832, %v4828
    %v5169 = vpack.c.b16 %v4833, %v4829
    %v5170 = vpack.c.b16 %v4834, %v4830
    %v5171 = vpack.c.b16 %v4839, %v4835
    %v5172 = vpack.c.b16 %v4840, %v4836
    %v5173 = vpack.c.b16 %v4841, %v4837
    %v5174 = vpack.c.b16 %v4842, %v4838
    %v5175 = vpack.c.b16 %v4847, %v4843
    %v5176 = vpack.c.b16 %v4848, %v4844
    %v5177 = vpack.c.b16 %v4849, %v4845
    %v5178 = vpack.c.b16 %v4850, %v4846
    %v5179 = vpack.c.b16 %v4855, %v4851
    %v5180 = vpack.c.b16 %v4856, %v4852
    %v5181 = vpack.c.b16 %v4857, %v4853
    %v5182 = vpack.c.b16 %v4858, %v4854
    %v5183 = vpack.c.b16 %v4863, %v4859
    %v5184 = vpack.c.b16 %v4864, %v4860
    %v5185 = vpack.c.b16 %v4865, %v4861
    %v5186 = vpack.c.b16 %v4866, %v4862
    %v5187 = vpack.c.b16 %v4871, %v4867
    %v5188 = vpack.c.b16 %v4872, %v4868
    %v5189 = vpack.c.b16 %v4873, %v4869
    %v5190 = vpack.c.b16 %v4874, %v4870
    %v5191 = vpack.c.b16 %v4879, %v4875
    %v5192 = vpack.c.b16 %v4880, %v4876
    %v5193 = vpack.c.b16 %v4881, %v4877
    %v5194 = vpack.c.b16 %v4882, %v4878
    %v5195 = vpack.c.b16 %v4887, %v4883
    %v5196 = vpack.c.b16 %v4888, %v4884
    %v5197 = vpack.c.b16 %v4889, %v4885
    %v5198 = vpack.c.b16 %v4890, %v4886
    %v5199 = vpack.c.b16 %v4895, %v4891
    %v5200 = vpack.c.b16 %v4896, %v4892
    %v5201 = vpack.c.b16 %v4897, %v4893
    %v5202 = vpack.c.b16 %v4898, %v4894
    %v5203 = vpack.c.b16 %v4903, %v4899
    %v5204 = vpack.c.b16 %v4904, %v4900
    %v5205 = vpack.c.b16 %v4905, %v4901
    %v5206 = vpack.c.b16 %v4906, %v4902
    %v5207 = vpack.c.b16 %v4911, %v4907
    %v5208 = vpack.c.b16 %v4912, %v4908
    %v5209 = vpack.c.b16 %v4913, %v4909
    %v5210 = vpack.c.b16 %v4914, %v4910
    %v5211 = vpack.c.b16 %v4919, %v4915
    %v5212 = vpack.c.b16 %v4920, %v4916
    %v5213 = vpack.c.b16 %v4921, %v4917
    %v5214 = vpack.c.b16 %v4922, %v4918
    %v5215 = vpack.c.b16 %v4927, %v4923
    %v5216 = vpack.c.b16 %v4928, %v4924
    %v5217 = vpack.c.b16 %v4929, %v4925
    %v5218 = vpack.c.b16 %v4930, %v4926
    %v5219 = vpack.c.b16 %v4935, %v4931
    %v5220 = vpack.c.b16 %v4936, %v4932
    %v5221 = vpack.c.b16 %v4937, %v4933
    %v5222 = vpack.c.b16 %v4938, %v4934
    %v5223 = vpack.c.b16 %v4943, %v4939
    %v5224 = vpack.c.b16 %v4944, %v4940
    %v5225 = vpack.c.b16 %v4945, %v4941
    %v5226 = vpack.c.b16 %v4946, %v4942
    %v5227 = vpack.c.b16 %v4951, %v4947
    %v5228 = vpack.c.b16 %v4952, %v4948
    %v5229 = vpack.c.b16 %v4953, %v4949
    %v5230 = vpack.c.b16 %v4954, %v4950
    %v5231 = vpack.c.b16 %v4959, %v4955
    %v5232 = vpack.c.b16 %v4960, %v4956
    %v5233 = vpack.c.b16 %v4961, %v4957
    %v5234 = vpack.c.b16 %v4962, %v4958
    %v5235 = vpack.c.b16 %v4967, %v4963
    %v5236 = vpack.c.b16 %v4968, %v4964
    %v5237 = vpack.c.b16 %v4969, %v4965
    %v5238 = vpack.c.b16 %v4970, %v4966
    %v5239 = vpack.c.b16 %v4975, %v4971
    %v5240 = vpack.c.b16 %v4976, %v4972
    %v5241 = vpack.c.b16 %v4977, %v4973
    %v5242 = vpack.c.b16 %v4978, %v4974
    %v5243 = vpack.c.b16 %v4983, %v4979
    %v5244 = vpack.c.b16 %v4984, %v4980
    %v5245 = vpack.c.b16 %v4985, %v4981
    %v5246 = vpack.c.b16 %v4986, %v4982
    %v5247 = vpack.c.b16 %v4991, %v4987
    %v5248 = vpack.c.b16 %v4992, %v4988
    %v5249 = vpack.c.b16 %v4993, %v4989
    %v5250 = vpack.c.b16 %v4994, %v4990
    %5507 = vmatprep.subr.bf16.mxu0 %v5024
    %5508 = vmatpush1.bf16.msra.mxu0 %v5023
    %5509 = vmatprep.subr.bf16.mxu0 %v5020
    %5510 = vmatpush1.bf16.msra.mxu0 %v5019
    %5511 = vmatprep.subr.bf16.mxu0 %v5016
    %5512 = vmatpush1.bf16.msra.mxu0 %v5015
    %5513 = vmatprep.subr.bf16.mxu0 %v5012
    %5514 = vmatpush1.bf16.msra.mxu0 %v5011
    %5515 = vmatprep.subr.bf16.mxu0 %v5008
    %5516 = vmatpush1.bf16.msra.mxu0 %v5007
    %5517 = vmatprep.subr.bf16.mxu0 %v5004
    %5518 = vmatpush1.bf16.msra.mxu0 %v5003
    %5519 = vmatprep.subr.bf16.mxu0 %v5000
    %5520 = vmatpush1.bf16.msra.mxu0 %v4999
    %5521 = vmatprep.subr.bf16.mxu0 %v4996
    %5522 = vmatpush1.bf16.msra.mxu0 %v4995
    %5523 = vmatprep.subr.bf16.mxu0 %v5056
    %5524 = vmatpush2.bf16.msra.mxu0 %v5055
    %5525 = vmatprep.subr.bf16.mxu0 %v5052
    %5526 = vmatpush2.bf16.msra.mxu0 %v5051
    %5527 = vmatprep.subr.bf16.mxu0 %v5048
    %5528 = vmatpush2.bf16.msra.mxu0 %v5047
    %5529 = vmatprep.subr.bf16.mxu0 %v5044
    %5530 = vmatpush2.bf16.msra.mxu0 %v5043
    %5531 = vmatprep.subr.bf16.mxu0 %v5040
    %5532 = vmatpush2.bf16.msra.mxu0 %v5039
    %5533 = vmatprep.subr.bf16.mxu0 %v5036
    %5534 = vmatpush2.bf16.msra.mxu0 %v5035
    %5535 = vmatprep.subr.bf16.mxu0 %v5032
    %5536 = vmatpush2.bf16.msra.mxu0 %v5031
    %5537 = vmatprep.subr.bf16.mxu0 %v5028
    %5538 = vmatpush2.bf16.msra.mxu0 %v5027
    %5539 = vmatprep.mubr.bf16.mxu0 %v3942
    %5540 = vmatmul.mubr.bf16.gmra.mxu0 %v3941
    %v5541 = vpop.f32.mrf.mxu0
    %v5542 = vadd.f32 %v4210, %v5541
    %v5543 = vpop.f32.mrf.mxu0
    %v5544 = vadd.f32 %v4214, %v5543
    %v5545 = vpop.f32.mrf.mxu0
    %v5546 = vpop.f32.mrf.mxu0
    %5547 = vdwg.mxu0
    %5548 = vmatprep.subr.bf16.mxu0 %v5088
    %5549 = vmatpush1.bf16.msra.mxu0 %v5087
    %5550 = vmatprep.subr.bf16.mxu0 %v5084
    %5551 = vmatpush1.bf16.msra.mxu0 %v5083
    %5552 = vmatprep.subr.bf16.mxu0 %v5080
    %5553 = vmatpush1.bf16.msra.mxu0 %v5079
    %5554 = vmatprep.subr.bf16.mxu0 %v5076
    %5555 = vmatpush1.bf16.msra.mxu0 %v5075
    %5556 = vmatprep.subr.bf16.mxu0 %v5072
    %5557 = vmatpush1.bf16.msra.mxu0 %v5071
    %5558 = vmatprep.subr.bf16.mxu0 %v5068
    %5559 = vmatpush1.bf16.msra.mxu0 %v5067
    %5560 = vmatprep.subr.bf16.mxu0 %v5064
    %5561 = vmatpush1.bf16.msra.mxu0 %v5063
    %5562 = vmatprep.subr.bf16.mxu0 %v5060
    %5563 = vmatpush1.bf16.msra.mxu0 %v5059
    %5564 = vmatprep.subr.bf16.mxu0 %v5120
    %5565 = vmatpush2.bf16.msra.mxu0 %v5119
    %5566 = vmatprep.subr.bf16.mxu0 %v5116
    %5567 = vmatpush2.bf16.msra.mxu0 %v5115
    %5568 = vmatprep.subr.bf16.mxu0 %v5112
    %5569 = vmatpush2.bf16.msra.mxu0 %v5111
    %5570 = vmatprep.subr.bf16.mxu0 %v5108
    %5571 = vmatpush2.bf16.msra.mxu0 %v5107
    %5572 = vmatprep.subr.bf16.mxu0 %v5104
    %5573 = vmatpush2.bf16.msra.mxu0 %v5103
    %5574 = vmatprep.subr.bf16.mxu0 %v5100
    %5575 = vmatpush2.bf16.msra.mxu0 %v5099
    %5576 = vmatprep.subr.bf16.mxu0 %v5096
    %5577 = vmatpush2.bf16.msra.mxu0 %v5095
    %5578 = vmatprep.subr.bf16.mxu0 %v5092
    %5579 = vmatpush2.bf16.msra.mxu0 %v5091
    %5580 = vmatprep.mubr.bf16.mxu0 %v3944
    %5581 = vmatmul.mubr.bf16.gmra.mxu0 %v3943
    %v5582 = vpop.f32.mrf.mxu0
    %v5583 = vadd.f32 %v5542, %v5582
    %v5584 = vpop.f32.mrf.mxu0
    %v5585 = vadd.f32 %v5544, %v5584
    %v5586 = vpop.f32.mrf.mxu0
    %v5587 = vpop.f32.mrf.mxu0
    %5588 = vdwg.mxu0
    %5589 = vmatprep.subr.bf16.mxu0 %v5152
    %5590 = vmatpush1.bf16.msra.mxu0 %v5151
    %5591 = vmatprep.subr.bf16.mxu0 %v5148
    %5592 = vmatpush1.bf16.msra.mxu0 %v5147
    %5593 = vmatprep.subr.bf16.mxu0 %v5144
    %5594 = vmatpush1.bf16.msra.mxu0 %v5143
    %5595 = vmatprep.subr.bf16.mxu0 %v5140
    %5596 = vmatpush1.bf16.msra.mxu0 %v5139
    %5597 = vmatprep.subr.bf16.mxu0 %v5136
    %5598 = vmatpush1.bf16.msra.mxu0 %v5135
    %5599 = vmatprep.subr.bf16.mxu0 %v5132
    %5600 = vmatpush1.bf16.msra.mxu0 %v5131
    %5601 = vmatprep.subr.bf16.mxu0 %v5128
    %5602 = vmatpush1.bf16.msra.mxu0 %v5127
    %5603 = vmatprep.subr.bf16.mxu0 %v5124
    %5604 = vmatpush1.bf16.msra.mxu0 %v5123
    %5605 = vmatprep.subr.bf16.mxu0 %v5184
    %5606 = vmatpush2.bf16.msra.mxu0 %v5183
    %5607 = vmatprep.subr.bf16.mxu0 %v5180
    %5608 = vmatpush2.bf16.msra.mxu0 %v5179
    %5609 = vmatprep.subr.bf16.mxu0 %v5176
    %5610 = vmatpush2.bf16.msra.mxu0 %v5175
    %5611 = vmatprep.subr.bf16.mxu0 %v5172
    %5612 = vmatpush2.bf16.msra.mxu0 %v5171
    %5613 = vmatprep.subr.bf16.mxu0 %v5168
    %5614 = vmatpush2.bf16.msra.mxu0 %v5167
    %5615 = vmatprep.subr.bf16.mxu0 %v5164
    %5616 = vmatpush2.bf16.msra.mxu0 %v5163
    %5617 = vmatprep.subr.bf16.mxu0 %v5160
    %5618 = vmatpush2.bf16.msra.mxu0 %v5159
    %5619 = vmatprep.subr.bf16.mxu0 %v5156
    %5620 = vmatpush2.bf16.msra.mxu0 %v5155
    %5621 = vmatprep.mubr.bf16.mxu0 %v3946
    %5622 = vmatmul.mubr.bf16.gmra.mxu0 %v3945
    %v5623 = vpop.f32.mrf.mxu0
    %v5624 = vadd.f32 %v5583, %v5623
    %v5625 = vpop.f32.mrf.mxu0
    %v5626 = vadd.f32 %v5585, %v5625
    %v5627 = vpop.f32.mrf.mxu0
    %v5628 = vpop.f32.mrf.mxu0
    %5629 = vdwg.mxu0
    %5630 = vmatprep.subr.bf16.mxu0 %v5216
    %5631 = vmatpush1.bf16.msra.mxu0 %v5215
    %5632 = vmatprep.subr.bf16.mxu0 %v5212
    %5633 = vmatpush1.bf16.msra.mxu0 %v5211
    %5634 = vmatprep.subr.bf16.mxu0 %v5208
    %5635 = vmatpush1.bf16.msra.mxu0 %v5207
    %5636 = vmatprep.subr.bf16.mxu0 %v5204
    %5637 = vmatpush1.bf16.msra.mxu0 %v5203
    %5638 = vmatprep.subr.bf16.mxu0 %v5200
    %5639 = vmatpush1.bf16.msra.mxu0 %v5199
    %5640 = vmatprep.subr.bf16.mxu0 %v5196
    %5641 = vmatpush1.bf16.msra.mxu0 %v5195
    %5642 = vmatprep.subr.bf16.mxu0 %v5192
    %5643 = vmatpush1.bf16.msra.mxu0 %v5191
    %5644 = vmatprep.subr.bf16.mxu0 %v5188
    %5645 = vmatpush1.bf16.msra.mxu0 %v5187
    %5646 = vmatprep.subr.bf16.mxu0 %v5248
    %5647 = vmatpush2.bf16.msra.mxu0 %v5247
    %5648 = vmatprep.subr.bf16.mxu0 %v5244
    %5649 = vmatpush2.bf16.msra.mxu0 %v5243
    %5650 = vmatprep.subr.bf16.mxu0 %v5240
    %5651 = vmatpush2.bf16.msra.mxu0 %v5239
    %5652 = vmatprep.subr.bf16.mxu0 %v5236
    %5653 = vmatpush2.bf16.msra.mxu0 %v5235
    %5654 = vmatprep.subr.bf16.mxu0 %v5232
    %5655 = vmatpush2.bf16.msra.mxu0 %v5231
    %5656 = vmatprep.subr.bf16.mxu0 %v5228
    %5657 = vmatpush2.bf16.msra.mxu0 %v5227
    %5658 = vmatprep.subr.bf16.mxu0 %v5224
    %5659 = vmatpush2.bf16.msra.mxu0 %v5223
    %5660 = vmatprep.subr.bf16.mxu0 %v5220
    %5661 = vmatpush2.bf16.msra.mxu0 %v5219
    %5662 = vmatprep.mubr.bf16.mxu0 %v3948
    %5663 = vmatmul.mubr.bf16.gmra.mxu0 %v3947
    %v5664 = vpop.f32.mrf.mxu0
    %v5665 = vadd.f32 %v5624, %v5664
    %v5666 = vpop.f32.mrf.mxu0
    %v5667 = vadd.f32 %v5626, %v5666
    %v5668 = vpop.f32.mrf.mxu0
    %v5669 = vpop.f32.mrf.mxu0
    %5670 = vdwg.mxu0
    %5671 = vmatprep.subr.bf16.mxu0 %v5026
    %5672 = vmatpush1.bf16.msra.mxu0 %v5025
    %5673 = vmatprep.subr.bf16.mxu0 %v5022
    %5674 = vmatpush1.bf16.msra.mxu0 %v5021
    %5675 = vmatprep.subr.bf16.mxu0 %v5018
    %5676 = vmatpush1.bf16.msra.mxu0 %v5017
    %5677 = vmatprep.subr.bf16.mxu0 %v5014
    %5678 = vmatpush1.bf16.msra.mxu0 %v5013
    %5679 = vmatprep.subr.bf16.mxu0 %v5010
    %5680 = vmatpush1.bf16.msra.mxu0 %v5009
    %5681 = vmatprep.subr.bf16.mxu0 %v5006
    %5682 = vmatpush1.bf16.msra.mxu0 %v5005
    %5683 = vmatprep.subr.bf16.mxu0 %v5002
    %5684 = vmatpush1.bf16.msra.mxu0 %v5001
    %5685 = vmatprep.subr.bf16.mxu0 %v4998
    %5686 = vmatpush1.bf16.msra.mxu0 %v4997
    %5687 = vmatprep.subr.bf16.mxu0 %v5058
    %5688 = vmatpush2.bf16.msra.mxu0 %v5057
    %5689 = vmatprep.subr.bf16.mxu0 %v5054
    %5690 = vmatpush2.bf16.msra.mxu0 %v5053
    %5691 = vmatprep.subr.bf16.mxu0 %v5050
    %5692 = vmatpush2.bf16.msra.mxu0 %v5049
    %5693 = vmatprep.subr.bf16.mxu0 %v5046
    %5694 = vmatpush2.bf16.msra.mxu0 %v5045
    %5695 = vmatprep.subr.bf16.mxu0 %v5042
    %5696 = vmatpush2.bf16.msra.mxu0 %v5041
    %5697 = vmatprep.subr.bf16.mxu0 %v5038
    %5698 = vmatpush2.bf16.msra.mxu0 %v5037
    %5699 = vmatprep.subr.bf16.mxu0 %v5034
    %5700 = vmatpush2.bf16.msra.mxu0 %v5033
    %5701 = vmatprep.subr.bf16.mxu0 %v5030
    %5702 = vmatpush2.bf16.msra.mxu0 %v5029
    %5703 = vmatprep.mubr.bf16.mxu0 %v3942
    %5704 = vmatmul.mubr.bf16.gmra.mxu0 %v3941
    %v5705 = vpop.f32.mrf.mxu0
    %v5706 = vadd.f32 %v4218, %v5705
    %v5707 = vpop.f32.mrf.mxu0
    %v5708 = vadd.f32 %v4222, %v5707
    %v5709 = vpop.f32.mrf.mxu0
    %v5710 = vpop.f32.mrf.mxu0
    %5711 = vdwg.mxu0
    %5712 = vmatprep.subr.bf16.mxu0 %v5090
    %5713 = vmatpush1.bf16.msra.mxu0 %v5089
    %5714 = vmatprep.subr.bf16.mxu0 %v5086
    %5715 = vmatpush1.bf16.msra.mxu0 %v5085
    %5716 = vmatprep.subr.bf16.mxu0 %v5082
    %5717 = vmatpush1.bf16.msra.mxu0 %v5081
    %5718 = vmatprep.subr.bf16.mxu0 %v5078
    %5719 = vmatpush1.bf16.msra.mxu0 %v5077
    %5720 = vmatprep.subr.bf16.mxu0 %v5074
    %5721 = vmatpush1.bf16.msra.mxu0 %v5073
    %5722 = vmatprep.subr.bf16.mxu0 %v5070
    %5723 = vmatpush1.bf16.msra.mxu0 %v5069
    %5724 = vmatprep.subr.bf16.mxu0 %v5066
    %5725 = vmatpush1.bf16.msra.mxu0 %v5065
    %5726 = vmatprep.subr.bf16.mxu0 %v5062
    %5727 = vmatpush1.bf16.msra.mxu0 %v5061
    %5728 = vmatprep.subr.bf16.mxu0 %v5122
    %5729 = vmatpush2.bf16.msra.mxu0 %v5121
    %5730 = vmatprep.subr.bf16.mxu0 %v5118
    %5731 = vmatpush2.bf16.msra.mxu0 %v5117
    %5732 = vmatprep.subr.bf16.mxu0 %v5114
    %5733 = vmatpush2.bf16.msra.mxu0 %v5113
    %5734 = vmatprep.subr.bf16.mxu0 %v5110
    %5735 = vmatpush2.bf16.msra.mxu0 %v5109
    %5736 = vmatprep.subr.bf16.mxu0 %v5106
    %5737 = vmatpush2.bf16.msra.mxu0 %v5105
    %5738 = vmatprep.subr.bf16.mxu0 %v5102
    %5739 = vmatpush2.bf16.msra.mxu0 %v5101
    %5740 = vmatprep.subr.bf16.mxu0 %v5098
    %5741 = vmatpush2.bf16.msra.mxu0 %v5097
    %5742 = vmatprep.subr.bf16.mxu0 %v5094
    %5743 = vmatpush2.bf16.msra.mxu0 %v5093
    %5744 = vmatprep.mubr.bf16.mxu0 %v3944
    %5745 = vmatmul.mubr.bf16.gmra.mxu0 %v3943
    %v5746 = vpop.f32.mrf.mxu0
    %v5747 = vadd.f32 %v5706, %v5746
    %v5748 = vpop.f32.mrf.mxu0
    %v5749 = vadd.f32 %v5708, %v5748
    %v5750 = vpop.f32.mrf.mxu0
    %v5751 = vpop.f32.mrf.mxu0
    %5752 = vdwg.mxu0
    %5753 = vmatprep.subr.bf16.mxu0 %v5154
    %5754 = vmatpush1.bf16.msra.mxu0 %v5153
    %5755 = vmatprep.subr.bf16.mxu0 %v5150
    %5756 = vmatpush1.bf16.msra.mxu0 %v5149
    %5757 = vmatprep.subr.bf16.mxu0 %v5146
    %5758 = vmatpush1.bf16.msra.mxu0 %v5145
    %5759 = vmatprep.subr.bf16.mxu0 %v5142
    %5760 = vmatpush1.bf16.msra.mxu0 %v5141
    %5761 = vmatprep.subr.bf16.mxu0 %v5138
    %5762 = vmatpush1.bf16.msra.mxu0 %v5137
    %5763 = vmatprep.subr.bf16.mxu0 %v5134
    %5764 = vmatpush1.bf16.msra.mxu0 %v5133
    %5765 = vmatprep.subr.bf16.mxu0 %v5130
    %5766 = vmatpush1.bf16.msra.mxu0 %v5129
    %5767 = vmatprep.subr.bf16.mxu0 %v5126
    %5768 = vmatpush1.bf16.msra.mxu0 %v5125
    %5769 = vmatprep.subr.bf16.mxu0 %v5186
    %5770 = vmatpush2.bf16.msra.mxu0 %v5185
    %5771 = vmatprep.subr.bf16.mxu0 %v5182
    %5772 = vmatpush2.bf16.msra.mxu0 %v5181
    %5773 = vmatprep.subr.bf16.mxu0 %v5178
    %5774 = vmatpush2.bf16.msra.mxu0 %v5177
    %5775 = vmatprep.subr.bf16.mxu0 %v5174
    %5776 = vmatpush2.bf16.msra.mxu0 %v5173
    %5777 = vmatprep.subr.bf16.mxu0 %v5170
    %5778 = vmatpush2.bf16.msra.mxu0 %v5169
    %5779 = vmatprep.subr.bf16.mxu0 %v5166
    %5780 = vmatpush2.bf16.msra.mxu0 %v5165
    %5781 = vmatprep.subr.bf16.mxu0 %v5162
    %5782 = vmatpush2.bf16.msra.mxu0 %v5161
    %5783 = vmatprep.subr.bf16.mxu0 %v5158
    %5784 = vmatpush2.bf16.msra.mxu0 %v5157
    %5785 = vmatprep.mubr.bf16.mxu0 %v3946
    %5786 = vmatmul.mubr.bf16.gmra.mxu0 %v3945
    %v5787 = vpop.f32.mrf.mxu0
    %v5788 = vadd.f32 %v5747, %v5787
    %v5789 = vpop.f32.mrf.mxu0
    %v5790 = vadd.f32 %v5749, %v5789
    %v5791 = vpop.f32.mrf.mxu0
    %v5792 = vpop.f32.mrf.mxu0
    %5793 = vdwg.mxu0
    %5794 = vmatprep.subr.bf16.mxu0 %v5218
    %5795 = vmatpush1.bf16.msra.mxu0 %v5217
    %5796 = vmatprep.subr.bf16.mxu0 %v5214
    %5797 = vmatpush1.bf16.msra.mxu0 %v5213
    %5798 = vmatprep.subr.bf16.mxu0 %v5210
    %5799 = vmatpush1.bf16.msra.mxu0 %v5209
    %5800 = vmatprep.subr.bf16.mxu0 %v5206
    %5801 = vmatpush1.bf16.msra.mxu0 %v5205
    %5802 = vmatprep.subr.bf16.mxu0 %v5202
    %5803 = vmatpush1.bf16.msra.mxu0 %v5201
    %5804 = vmatprep.subr.bf16.mxu0 %v5198
    %5805 = vmatpush1.bf16.msra.mxu0 %v5197
    %5806 = vmatprep.subr.bf16.mxu0 %v5194
    %5807 = vmatpush1.bf16.msra.mxu0 %v5193
    %5808 = vmatprep.subr.bf16.mxu0 %v5190
    %5809 = vmatpush1.bf16.msra.mxu0 %v5189
    %5810 = vmatprep.subr.bf16.mxu0 %v5250
    %5811 = vmatpush2.bf16.msra.mxu0 %v5249
    %5812 = vmatprep.subr.bf16.mxu0 %v5246
    %5813 = vmatpush2.bf16.msra.mxu0 %v5245
    %5814 = vmatprep.subr.bf16.mxu0 %v5242
    %5815 = vmatpush2.bf16.msra.mxu0 %v5241
    %5816 = vmatprep.subr.bf16.mxu0 %v5238
    %5817 = vmatpush2.bf16.msra.mxu0 %v5237
    %5818 = vmatprep.subr.bf16.mxu0 %v5234
    %5819 = vmatpush2.bf16.msra.mxu0 %v5233
    %5820 = vmatprep.subr.bf16.mxu0 %v5230
    %5821 = vmatpush2.bf16.msra.mxu0 %v5229
    %5822 = vmatprep.subr.bf16.mxu0 %v5226
    %5823 = vmatpush2.bf16.msra.mxu0 %v5225
    %5824 = vmatprep.subr.bf16.mxu0 %v5222
    %5825 = vmatpush2.bf16.msra.mxu0 %v5221
    %5826 = vmatprep.mubr.bf16.mxu0 %v3948
    %5827 = vmatmul.mubr.bf16.gmra.mxu0 %v3947
    %v5828 = vpop.f32.mrf.mxu0
    %v5829 = vadd.f32 %v5788, %v5828
    %v5830 = vpop.f32.mrf.mxu0
    %v5831 = vadd.f32 %v5790, %v5830
    %v5832 = vpop.f32.mrf.mxu0
    %v5833 = vpop.f32.mrf.mxu0
    %5834 = vdwg.mxu0
    %v5835 = vmax.f32 %v5665, 0.0
    %v5836 = vmax.f32 %v5667, 0.0
    %v5837 = vmax.f32 %v5829, 0.0
    %v5838 = vmax.f32 %v5831, 0.0
    %v5839 = vpack.c.bf16 %v5835, %v5835
    %v5840 = vpack.c.bf16 %v5836, %v5836
    %v5841 = vpack.c.bf16 %v5837, %v5837
    %v5842 = vpack.c.bf16 %v5838, %v5838
    %v5843 = vld [vmem:[#allocation13] sm:$0xf]
    %v5844 = vld [vmem:[#allocation13 + $0x4] sm:$0xf]
    %v5845 = vld [vmem:[#allocation13 + $0x8] sm:$0xf]
    %v5846 = vld [vmem:[#allocation13 + $0xc] sm:$0xf]
    %v5847 = vld [vmem:[#allocation13 + $0x10] sm:$0xf]
    %v5848 = vld [vmem:[#allocation13 + $0x14] sm:$0xf]
    %v5849 = vld [vmem:[#allocation13 + $0x18] sm:$0xf]
    %v5850 = vld [vmem:[#allocation13 + $0x1c] sm:$0xf]
    %v5851 = vld [vmem:[#allocation13 + $0x20] sm:$0xf]
    %v5852 = vld [vmem:[#allocation13 + $0x24] sm:$0xf]
    %v5853 = vld [vmem:[#allocation13 + $0x28] sm:$0xf]
    %v5854 = vld [vmem:[#allocation13 + $0x2c] sm:$0xf]
    %v5855 = vld [vmem:[#allocation13 + $0x30] sm:$0xf]
    %v5856 = vld [vmem:[#allocation13 + $0x34] sm:$0xf]
    %v5857 = vld [vmem:[#allocation13 + $0x38] sm:$0xf]
    %v5858 = vld [vmem:[#allocation13 + $0x3c] sm:$0xf]
    %v5859 = vld [vmem:[#allocation13 + $0x40] sm:$0xf]
    %v5860 = vld [vmem:[#allocation13 + $0x44] sm:$0xf]
    %v5861 = vld [vmem:[#allocation13 + $0x48] sm:$0xf]
    %v5862 = vld [vmem:[#allocation13 + $0x4c] sm:$0xf]
    %v5863 = vld [vmem:[#allocation13 + $0x50] sm:$0xf]
    %v5864 = vld [vmem:[#allocation13 + $0x54] sm:$0xf]
    %v5865 = vld [vmem:[#allocation13 + $0x58] sm:$0xf]
    %v5866 = vld [vmem:[#allocation13 + $0x5c] sm:$0xf]
    %v5867 = vld [vmem:[#allocation13 + $0x60] sm:$0xf]
    %v5868 = vld [vmem:[#allocation13 + $0x64] sm:$0xf]
    %v5869 = vld [vmem:[#allocation13 + $0x68] sm:$0xf]
    %v5870 = vld [vmem:[#allocation13 + $0x6c] sm:$0xf]
    %v5871 = vld [vmem:[#allocation13 + $0x70] sm:$0xf]
    %v5872 = vld [vmem:[#allocation13 + $0x74] sm:$0xf]
    %v5873 = vld [vmem:[#allocation13 + $0x78] sm:$0xf]
    %v5874 = vld [vmem:[#allocation13 + $0x7c] sm:$0xf]
    %v5875 = vld [vmem:[#allocation13 + $0x80] sm:$0xf]
    %v5876 = vld [vmem:[#allocation13 + $0x84] sm:$0xf]
    %v5877 = vld [vmem:[#allocation13 + $0x88] sm:$0xf]
    %v5878 = vld [vmem:[#allocation13 + $0x8c] sm:$0xf]
    %v5879 = vld [vmem:[#allocation13 + $0x90] sm:$0xf]
    %v5880 = vld [vmem:[#allocation13 + $0x94] sm:$0xf]
    %v5881 = vld [vmem:[#allocation13 + $0x98] sm:$0xf]
    %v5882 = vld [vmem:[#allocation13 + $0x9c] sm:$0xf]
    %v5883 = vld [vmem:[#allocation13 + $0xa0] sm:$0xf]
    %v5884 = vld [vmem:[#allocation13 + $0xa4] sm:$0xf]
    %v5885 = vld [vmem:[#allocation13 + $0xa8] sm:$0xf]
    %v5886 = vld [vmem:[#allocation13 + $0xac] sm:$0xf]
    %v5887 = vld [vmem:[#allocation13 + $0xb0] sm:$0xf]
    %v5888 = vld [vmem:[#allocation13 + $0xb4] sm:$0xf]
    %v5889 = vld [vmem:[#allocation13 + $0xb8] sm:$0xf]
    %v5890 = vld [vmem:[#allocation13 + $0xbc] sm:$0xf]
    %v5891 = vld [vmem:[#allocation13 + $0xc0] sm:$0xf]
    %v5892 = vld [vmem:[#allocation13 + $0xc4] sm:$0xf]
    %v5893 = vld [vmem:[#allocation13 + $0xc8] sm:$0xf]
    %v5894 = vld [vmem:[#allocation13 + $0xcc] sm:$0xf]
    %v5895 = vld [vmem:[#allocation13 + $0xd0] sm:$0xf]
    %v5896 = vld [vmem:[#allocation13 + $0xd4] sm:$0xf]
    %v5897 = vld [vmem:[#allocation13 + $0xd8] sm:$0xf]
    %v5898 = vld [vmem:[#allocation13 + $0xdc] sm:$0xf]
    %v5899 = vld [vmem:[#allocation13 + $0xe0] sm:$0xf]
    %v5900 = vld [vmem:[#allocation13 + $0xe4] sm:$0xf]
    %v5901 = vld [vmem:[#allocation13 + $0xe8] sm:$0xf]
    %v5902 = vld [vmem:[#allocation13 + $0xec] sm:$0xf]
    %v5903 = vld [vmem:[#allocation13 + $0xf0] sm:$0xf]
    %v5904 = vld [vmem:[#allocation13 + $0xf4] sm:$0xf]
    %v5905 = vld [vmem:[#allocation13 + $0xf8] sm:$0xf]
    %v5906 = vld [vmem:[#allocation13 + $0xfc] sm:$0xf]
    %v5907 = vld [vmem:[%s8] sm:$0x1]
    %v5909 = vlaneseq
    %v5910 = vshrl.u32 %v5909, 7
    %v5911 = vsub.s32 0, %v5910
    %v5912 = vrot.slane %v5907, %v5911
    %v5978 = vunpack.c.l.b16 %v5843
    %v5979 = vunpack.c.l.b16 %v5844
    %v5980 = vunpack.c.l.b16 %v5845
    %v5981 = vunpack.c.l.b16 %v5846
    %v5982 = vunpack.c.l.b16 %v5847
    %v5983 = vunpack.c.l.b16 %v5848
    %v5984 = vunpack.c.l.b16 %v5849
    %v5985 = vunpack.c.l.b16 %v5850
    %v5986 = vunpack.c.l.b16 %v5851
    %v5987 = vunpack.c.l.b16 %v5852
    %v5988 = vunpack.c.l.b16 %v5853
    %v5989 = vunpack.c.l.b16 %v5854
    %v5990 = vunpack.c.l.b16 %v5855
    %v5991 = vunpack.c.l.b16 %v5856
    %v5992 = vunpack.c.l.b16 %v5857
    %v5993 = vunpack.c.l.b16 %v5858
    %v5994 = vunpack.c.l.b16 %v5859
    %v5995 = vunpack.c.l.b16 %v5860
    %v5996 = vunpack.c.l.b16 %v5861
    %v5997 = vunpack.c.l.b16 %v5862
    %v5998 = vunpack.c.l.b16 %v5863
    %v5999 = vunpack.c.l.b16 %v5864
    %v6000 = vunpack.c.l.b16 %v5865
    %v6001 = vunpack.c.l.b16 %v5866
    %v6002 = vunpack.c.l.b16 %v5867
    %v6003 = vunpack.c.l.b16 %v5868
    %v6004 = vunpack.c.l.b16 %v5869
    %v6005 = vunpack.c.l.b16 %v5870
    %v6006 = vunpack.c.l.b16 %v5871
    %v6007 = vunpack.c.l.b16 %v5872
    %v6008 = vunpack.c.l.b16 %v5873
    %v6009 = vunpack.c.l.b16 %v5874
    %v6010 = vunpack.c.l.b16 %v5875
    %v6011 = vunpack.c.l.b16 %v5876
    %v6012 = vunpack.c.l.b16 %v5877
    %v6013 = vunpack.c.l.b16 %v5878
    %v6014 = vunpack.c.l.b16 %v5879
    %v6015 = vunpack.c.l.b16 %v5880
    %v6016 = vunpack.c.l.b16 %v5881
    %v6017 = vunpack.c.l.b16 %v5882
    %v6018 = vunpack.c.l.b16 %v5883
    %v6019 = vunpack.c.l.b16 %v5884
    %v6020 = vunpack.c.l.b16 %v5885
    %v6021 = vunpack.c.l.b16 %v5886
    %v6022 = vunpack.c.l.b16 %v5887
    %v6023 = vunpack.c.l.b16 %v5888
    %v6024 = vunpack.c.l.b16 %v5889
    %v6025 = vunpack.c.l.b16 %v5890
    %v6026 = vunpack.c.l.b16 %v5891
    %v6027 = vunpack.c.l.b16 %v5892
    %v6028 = vunpack.c.l.b16 %v5893
    %v6029 = vunpack.c.l.b16 %v5894
    %v6030 = vunpack.c.l.b16 %v5895
    %v6031 = vunpack.c.l.b16 %v5896
    %v6032 = vunpack.c.l.b16 %v5897
    %v6033 = vunpack.c.l.b16 %v5898
    %v6034 = vunpack.c.l.b16 %v5899
    %v6035 = vunpack.c.l.b16 %v5900
    %v6036 = vunpack.c.l.b16 %v5901
    %v6037 = vunpack.c.l.b16 %v5902
    %v6038 = vunpack.c.l.b16 %v5903
    %v6039 = vunpack.c.l.b16 %v5904
    %v6040 = vunpack.c.l.b16 %v5905
    %v6041 = vunpack.c.l.b16 %v5906
    %v6042 = vpack.c.b16 %v5979, %v5978
    %v6043 = vpack.c.b16 %v5981, %v5980
    %v6044 = vpack.c.b16 %v5983, %v5982
    %v6045 = vpack.c.b16 %v5985, %v5984
    %v6046 = vpack.c.b16 %v5987, %v5986
    %v6047 = vpack.c.b16 %v5989, %v5988
    %v6048 = vpack.c.b16 %v5991, %v5990
    %v6049 = vpack.c.b16 %v5993, %v5992
    %v6050 = vpack.c.b16 %v5995, %v5994
    %v6051 = vpack.c.b16 %v5997, %v5996
    %v6052 = vpack.c.b16 %v5999, %v5998
    %v6053 = vpack.c.b16 %v6001, %v6000
    %v6054 = vpack.c.b16 %v6003, %v6002
    %v6055 = vpack.c.b16 %v6005, %v6004
    %v6056 = vpack.c.b16 %v6007, %v6006
    %v6057 = vpack.c.b16 %v6009, %v6008
    %v6058 = vpack.c.b16 %v6011, %v6010
    %v6059 = vpack.c.b16 %v6013, %v6012
    %v6060 = vpack.c.b16 %v6015, %v6014
    %v6061 = vpack.c.b16 %v6017, %v6016
    %v6062 = vpack.c.b16 %v6019, %v6018
    %v6063 = vpack.c.b16 %v6021, %v6020
    %v6064 = vpack.c.b16 %v6023, %v6022
    %v6065 = vpack.c.b16 %v6025, %v6024
    %v6066 = vpack.c.b16 %v6027, %v6026
    %v6067 = vpack.c.b16 %v6029, %v6028
    %v6068 = vpack.c.b16 %v6031, %v6030
    %v6069 = vpack.c.b16 %v6033, %v6032
    %v6070 = vpack.c.b16 %v6035, %v6034
    %v6071 = vpack.c.b16 %v6037, %v6036
    %v6072 = vpack.c.b16 %v6039, %v6038
    %v6073 = vpack.c.b16 %v6041, %v6040
    %6106 = vmatprep.subr.bf16.mxu0 0
    %6107 = vmatpush1.bf16.msra.mxu0 %v6049
    %6108 = vmatprep.subr.bf16.mxu0 0
    %6109 = vmatpush1.bf16.msra.mxu0 %v6048
    %6110 = vmatprep.subr.bf16.mxu0 0
    %6111 = vmatpush1.bf16.msra.mxu0 %v6047
    %6112 = vmatprep.subr.bf16.mxu0 0
    %6113 = vmatpush1.bf16.msra.mxu0 %v6046
    %6114 = vmatprep.subr.bf16.mxu0 0
    %6115 = vmatpush1.bf16.msra.mxu0 %v6045
    %6116 = vmatprep.subr.bf16.mxu0 0
    %6117 = vmatpush1.bf16.msra.mxu0 %v6044
    %6118 = vmatprep.subr.bf16.mxu0 0
    %6119 = vmatpush1.bf16.msra.mxu0 %v6043
    %6120 = vmatprep.subr.bf16.mxu0 0
    %6121 = vmatpush1.bf16.msra.mxu0 %v6042
    %6122 = vmatprep.subr.bf16.mxu0 0
    %6123 = vmatpush2.bf16.msra.mxu0 %v6057
    %6124 = vmatprep.subr.bf16.mxu0 0
    %6125 = vmatpush2.bf16.msra.mxu0 %v6056
    %6126 = vmatprep.subr.bf16.mxu0 0
    %6127 = vmatpush2.bf16.msra.mxu0 %v6055
    %6128 = vmatprep.subr.bf16.mxu0 0
    %6129 = vmatpush2.bf16.msra.mxu0 %v6054
    %6130 = vmatprep.subr.bf16.mxu0 0
    %6131 = vmatpush2.bf16.msra.mxu0 %v6053
    %6132 = vmatprep.subr.bf16.mxu0 0
    %6133 = vmatpush2.bf16.msra.mxu0 %v6052
    %6134 = vmatprep.subr.bf16.mxu0 0
    %6135 = vmatpush2.bf16.msra.mxu0 %v6051
    %6136 = vmatprep.subr.bf16.mxu0 0
    %6137 = vmatpush2.bf16.msra.mxu0 %v6050
    %6138 = vmatprep.mubr.bf16.mxu0 %v5840
    %6139 = vmatmul.mubr.bf16.gmra.mxu0 %v5839
    %v6140 = vpop.f32.mrf.mxu0
    %v6141 = vadd.f32 %v5912, %v6140
    %v6142 = vpop.f32.mrf.mxu0
    %v6143 = vpop.f32.mrf.mxu0
    %v6144 = vpop.f32.mrf.mxu0
    %6145 = vdwg.mxu0
    %6146 = vmatprep.subr.bf16.mxu0 0
    %6147 = vmatpush1.bf16.msra.mxu0 %v6065
    %6148 = vmatprep.subr.bf16.mxu0 0
    %6149 = vmatpush1.bf16.msra.mxu0 %v6064
    %6150 = vmatprep.subr.bf16.mxu0 0
    %6151 = vmatpush1.bf16.msra.mxu0 %v6063
    %6152 = vmatprep.subr.bf16.mxu0 0
    %6153 = vmatpush1.bf16.msra.mxu0 %v6062
    %6154 = vmatprep.subr.bf16.mxu0 0
    %6155 = vmatpush1.bf16.msra.mxu0 %v6061
    %6156 = vmatprep.subr.bf16.mxu0 0
    %6157 = vmatpush1.bf16.msra.mxu0 %v6060
    %6158 = vmatprep.subr.bf16.mxu0 0
    %6159 = vmatpush1.bf16.msra.mxu0 %v6059
    %6160 = vmatprep.subr.bf16.mxu0 0
    %6161 = vmatpush1.bf16.msra.mxu0 %v6058
    %6162 = vmatprep.subr.bf16.mxu0 0
    %6163 = vmatpush2.bf16.msra.mxu0 %v6073
    %6164 = vmatprep.subr.bf16.mxu0 0
    %6165 = vmatpush2.bf16.msra.mxu0 %v6072
    %6166 = vmatprep.subr.bf16.mxu0 0
    %6167 = vmatpush2.bf16.msra.mxu0 %v6071
    %6168 = vmatprep.subr.bf16.mxu0 0
    %6169 = vmatpush2.bf16.msra.mxu0 %v6070
    %6170 = vmatprep.subr.bf16.mxu0 0
    %6171 = vmatpush2.bf16.msra.mxu0 %v6069
    %6172 = vmatprep.subr.bf16.mxu0 0
    %6173 = vmatpush2.bf16.msra.mxu0 %v6068
    %6174 = vmatprep.subr.bf16.mxu0 0
    %6175 = vmatpush2.bf16.msra.mxu0 %v6067
    %6176 = vmatprep.subr.bf16.mxu0 0
    %6177 = vmatpush2.bf16.msra.mxu0 %v6066
    %6178 = vmatprep.mubr.bf16.mxu0 %v5842
    %6179 = vmatmul.mubr.bf16.gmra.mxu0 %v5841
    %v6180 = vpop.f32.mrf.mxu0
    %v6181 = vadd.f32 %v6141, %v6180
    %v6182 = vpop.f32.mrf.mxu0
    %v6183 = vpop.f32.mrf.mxu0
    %v6184 = vpop.f32.mrf.mxu0
    %6185 = vdwg.mxu0
    %6186 = vst [vmem:[#allocation14] sm:$0xff] %v6181
    // Predicated region
    $region66: #{tpu_custom_call.1} parent=1 // pred_check
      _
    $region67: #{tpu_custom_call.1} parent=1 // pred_check_branch
      %6188 = sbr.rel (0) target = $region69
    $region68: #{tpu_custom_call.1} parent=1 // pred_region
      %s6190 = ssub.s32 128, 128
      %6191 = vsyncadd [#allocation4], %s6190
      %s6193 = sshll.u32 [#allocation14], 4
      %s6194 = int_to_ptr.vmem [resolvable:$true] %s6193
      %6196 = dma.vmem_to_hbm [thread:$0]  %s6194, 128, %s9, [#allocation4]
    $region69: #{tpu_custom_call.1} parent=1 // pred_fallthru
      _
    // Predicated region
    $region70: #{tpu_custom_call.1} parent=1 // pred_check
      _
    $region71: #{tpu_custom_call.1} parent=1 // pred_check_branch
      %6198 = sbr.rel (0) target = $region73
    $region72: #{tpu_custom_call.1} parent=1 // pred_region
      %6199 = dma.done [#allocation4], 128
    $region73: #{tpu_custom_call.1} parent=1 // pred_fallthru
      _
    %6200 = vsyncpa [#allocation3], 1
    %6201 = vsyncpa [#allocation6], 1
    %6202 = vsyncpa [#allocation9], 1
    %6203 = vsyncpa [#allocation12], 1
    %6204 = vsyncpa [#allocation4], 1

</llo_original>
